<compile_context>
chip_gen: v5e
topology: v5e:2x2
jax: 0.10.0
libtpu: 0.0.40
codegen_flags: <defaults>
</compile_context>

<pallas_src>
import math
from functools import partial

import jax
import jax.numpy as jnp
from jax.experimental import pallas as pl
from jax.experimental.pallas import tpu as pltpu


def _round_up(x, m):
    return ((x + m - 1) // m) * m


def _layer_norm(v, w, b, eps=1e-5):
    mu = jnp.mean(v, axis=-1, keepdims=True)
    var = jnp.mean((v - mu) ** 2, axis=-1, keepdims=True)
    return (v - mu) * jax.lax.rsqrt(var + eps) * w + b


def _entity_encoder_kernel(
    x_ref, mask_ref, mask_col_ref,
    wqkv_ref, bqkv_ref,
    ln1_w_ref, ln1_b_ref,
    fc1_w_ref, fc1_b_ref, fc2_w_ref, fc2_b_ref,
    ln2_w_ref, ln2_b_ref,
    out_ref,
    *, head_num, head_dim):
    TB, L, D = x_ref.shape
    HD = head_num * head_dim

    x = x_ref[...].reshape(TB * L, D)          # (TB*L, D), features on lanes
    mask = mask_ref[...]                       # (TB, L)   key mask, lane layout
    mask_col = mask_col_ref[...]               # (TB*L, 1) pooling mask, column layout

    # ---- Fused Q/K/V projection: one big MXU matmul (Dropout before it is identity) ----
    qkv = jnp.dot(x, wqkv_ref[...], preferred_element_type=jnp.float32) + bqkv_ref[...]
    q3 = qkv[:, 0 * HD:1 * HD].reshape(TB, L, HD)
    k3 = qkv[:, 1 * HD:2 * HD].reshape(TB, L, HD)
    v3 = qkv[:, 2 * HD:3 * HD].reshape(TB, L, HD)

    scale = 1.0 / math.sqrt(head_dim)
    mk = mask[:, None, :]                      # (TB, 1, L) broadcast over query rows

    # ---- MultiHeadAttention: static head loop, TB-batched contractions ----
    ctx_heads = []
    for h in range(head_num):
        sl = slice(h * head_dim, (h + 1) * head_dim)
        qh, kh, vh = q3[:, :, sl], k3[:, :, sl], v3[:, :, sl]
        s = jnp.einsum('bld,bmd->blm', qh, kh,
                       preferred_element_type=jnp.float32) * scale      # (TB, L, L)
        # NRMS-style masked softmax (no max-subtraction, to match the PyTorch module).
        p = jnp.exp(s) * mk
        inv = pl.reciprocal(jnp.sum(p, axis=-1, keepdims=True) + 1e-8, approx=True)
        ctx_h = jnp.einsum('blm,bmd->bld', p * inv, vh,
                           preferred_element_type=jnp.float32)          # (TB, L, Dh)
        ctx_heads.append(ctx_h.reshape(TB * L, head_dim))
    ctx = jnp.concatenate(ctx_heads, axis=-1)                           # (TB*L, HD)

    # ---- LayerNorm 1 (following Dropout is identity) ----
    ctx = _layer_norm(ctx, ln1_w_ref[...], ln1_b_ref[...])

    # ---- AttentionPooling (logit = VPU mul + lane reduce, fc2 bias from SMEM) ----
    e = jnp.tanh(jnp.dot(ctx, fc1_w_ref[...], preferred_element_type=jnp.float32)
                 + fc1_b_ref[...])                                      # (TB*L, hidden)
    logit = jnp.sum(e * fc2_w_ref[...], axis=-1, keepdims=True) + fc2_b_ref[0, 0]
    alpha = jnp.exp(logit) * mask_col                                   # (TB*L, 1)
    num = jnp.sum((alpha * ctx).reshape(TB, L, HD), axis=1)             # (TB, HD)
    den = jnp.sum(alpha.reshape(TB, L, 1), axis=1) + 1e-8               # (TB, 1)
    pooled = num * pl.reciprocal(den, approx=True)                      # (TB, HD)

    # ---- LayerNorm 2 ----
    out_ref[...] = _layer_norm(pooled, ln2_w_ref[...], ln2_b_ref[...])


def global_entity_encoder(entity_input, entity_mask, params, *, head_num, head_dim,
                          block_seqs=128):
    B, N, L, D = entity_input.shape
    HD = head_num * head_dim
    BN = B * N
    hidden = params["fc1_w"].shape[1]

    # TB sequences per grid step (pad BN up so the grid tiles evenly). Per-block VMEM is
    # ~2*(TB*L*D + TB*HD)*4B + activations — well under 32 MiB even for TB=512 on v7x.
    TB = min(block_seqs, _round_up(BN, 8))
    BN_pad = _round_up(BN, TB)

    x = entity_input.reshape(BN, L, D).astype(jnp.float32)
    mask = entity_mask.reshape(BN, L).astype(jnp.float32)
    if BN_pad != BN:
        pad = BN_pad - BN
        x = jnp.pad(x, ((0, pad), (0, 0), (0, 0)))
        mask = jnp.pad(mask, ((0, pad), (0, 0)))
    mask_col = mask.reshape(BN_pad * L, 1)     # column-layout mask for pooling (no in-kernel relayout)

    # Fuse Q/K/V weights/biases once in the wrapper.
    wqkv = jnp.concatenate([params["wq"], params["wk"], params["wv"]], axis=1)   # (D, 3*HD)
    bqkv = jnp.concatenate([params["bq"], params["bk"], params["bv"]], axis=1)   # (1, 3*HD)
    fc2_w_row = params["fc2_w"].T                                                # (1, hidden)

    def rep(shape):
        nd = len(shape)
        return pl.BlockSpec(shape, lambda i, _nd=nd: (0,) * _nd)

    in_specs = [
        pl.BlockSpec((TB, L, D), lambda i: (i, 0, 0)),        # x
        pl.BlockSpec((TB, L), lambda i: (i, 0)),              # key mask
        pl.BlockSpec((TB * L, 1), lambda i: (i, 0)),          # pooling mask (column layout)
        rep((D, 3 * HD)), rep((1, 3 * HD)),                   # fused QKV weight / bias
        rep((1, HD)), rep((1, HD)),                           # ln1 w, b
        rep((HD, hidden)), rep((1, hidden)),                  # att_fc1 w, b
        rep((1, hidden)),                                     # att_fc2 weight (as row)
        pl.BlockSpec(memory_space=pltpu.MemorySpace.SMEM),    # att_fc2 bias (scalar)
        rep((1, HD)), rep((1, HD)),                           # ln2 w, b
    ]

    kernel = partial(_entity_encoder_kernel, head_num=head_num, head_dim=head_dim)
    out = pl.pallas_call(
        kernel,
        out_shape=jax.ShapeDtypeStruct((BN_pad, HD), jnp.float32),
        grid=(BN_pad // TB,),
        in_specs=in_specs,
        out_specs=pl.BlockSpec((TB, HD), lambda i: (i, 0)),
        compiler_params=pltpu.CompilerParams(dimension_semantics=("parallel",)),
    )(x, mask, mask_col, wqkv, bqkv,
      params["ln1_w"], params["ln1_b"],
      params["fc1_w"], params["fc1_b"], fc2_w_row, params["fc2_b"],
      params["ln2_w"], params["ln2_b"])
    return out[:BN].reshape(B, N, HD)


def reference(entity_input, entity_mask, params, *, head_num, head_dim):
    """Pure-JAX reference mirroring the PyTorch forward."""
    B, N, L, D = entity_input.shape
    HD = head_num * head_dim
    x = entity_input.reshape(-1, L, D).astype(jnp.float32)
    m = entity_mask.reshape(-1, L).astype(jnp.float32)

    q = x @ params["wq"] + params["bq"]
    k = x @ params["wk"] + params["bk"]
    v = x @ params["wv"] + params["bv"]
    qh = q.reshape(-1, L, head_num, head_dim)
    kh = k.reshape(-1, L, head_num, head_dim)
    vh = v.reshape(-1, L, head_num, head_dim)
    s = jnp.einsum("blhd,bmhd->bhlm", qh, kh) / math.sqrt(head_dim)
    s = jnp.exp(s) * m[:, None, None, :]
    attn = s / (s.sum(-1, keepdims=True) + 1e-8)
    ctx = jnp.einsum("bhlm,bmhd->blhd", attn, vh).reshape(-1, L, HD)

    ctx = _layer_norm(ctx, params["ln1_w"], params["ln1_b"])
    e = jnp.tanh(ctx @ params["fc1_w"] + params["fc1_b"])
    logit = e @ params["fc2_w"] + params["fc2_b"]
    alpha = jnp.exp(logit) * m[:, :, None]
    alpha = alpha / (alpha.sum(1, keepdims=True) + 1e-8)
    pooled = (alpha * ctx).sum(1)
    out = _layer_norm(pooled, params["ln2_w"], params["ln2_b"])
    return out.reshape(B, N, HD)


def init_params(key, entity_dim, head_num, head_dim, hidden_dim):
    HD = head_num * head_dim
    ks = jax.random.split(key, 12)
    n = lambda k, s, sc=0.1: sc * jax.random.normal(k, s, dtype=jnp.float32)
    return {
        "wq": n(ks[0], (entity_dim, HD)), "bq": n(ks[1], (1, HD), 0.01),
        "wk": n(ks[2], (entity_dim, HD)), "bk": n(ks[3], (1, HD), 0.01),
        "wv": n(ks[4], (entity_dim, HD)), "bv": n(ks[5], (1, HD), 0.01),
        "ln1_w": 1.0 + n(ks[6], (1, HD)), "ln1_b": n(ks[7], (1, HD), 0.01),
        "fc1_w": n(ks[8], (HD, hidden_dim)), "fc1_b": n(ks[9], (1, hidden_dim), 0.01),
        "fc2_w": n(ks[10], (hidden_dim, 1)), "fc2_b": jnp.zeros((1, 1), jnp.float32),
        "ln2_w": 1.0 + n(ks[11], (1, HD)), "ln2_b": jnp.zeros((1, HD), jnp.float32),
    }


if __name__ == "__main__":
    # cfg: entity_emb_dim=32, head_num=4, head_dim=8 (news_dim=32), attention_hidden_dim=32
    batch, num_news, num_entity, entity_dim = 2, 4, 8, 32
    head_num, head_dim, hidden_dim = 4, 8, 32

    key = jax.random.PRNGKey(0)
    k_x, k_m, k_p = jax.random.split(key, 3)
    entity_input = jax.random.normal(
        k_x, (batch, num_news, num_entity, entity_dim), dtype=jnp.float32)
    entity_mask = jax.random.bernoulli(
        k_m, 0.7, (batch, num_news, num_entity)).astype(jnp.float32)
    entity_mask = entity_mask.at[:, :, 0].set(1.0)  # at least one valid entity per news

    params = init_params(k_p, entity_dim, head_num, head_dim, hidden_dim)

    # NOTE: Dropout layers are identity at inference and therefore omitted from the kernel.
    out = global_entity_encoder(entity_input, entity_mask, params,
                                head_num=head_num, head_dim=head_dim)
    out = jax.block_until_ready(out)

    ref = reference(entity_input, entity_mask, params,
                    head_num=head_num, head_dim=head_dim)
    assert out.shape == (batch, num_news, head_num * head_dim)
    # Tolerance accounts for pl.reciprocal(approx=True) in the softmax/pooling denominators.
    assert jnp.allclose(out, ref, rtol=2e-3, atol=2e-3), "mismatch vs reference"
    print("KERNEL_OK")
</pallas_src>

<mosaic_0001>
module attributes {stable_mosaic.version = 11 : i64} {
  func.func @_entity_encoder_kernel(%arg0: i32, %arg1: memref<8x8x32xf32, #tpu.memory_space<vmem>>, %arg2: memref<8x8xf32, #tpu.memory_space<vmem>>, %arg3: memref<64x1xf32, #tpu.memory_space<vmem>>, %arg4: memref<32x96xf32, #tpu.memory_space<vmem>>, %arg5: memref<1x96xf32, #tpu.memory_space<vmem>>, %arg6: memref<1x32xf32, #tpu.memory_space<vmem>>, %arg7: memref<1x32xf32, #tpu.memory_space<vmem>>, %arg8: memref<32x32xf32, #tpu.memory_space<vmem>>, %arg9: memref<1x32xf32, #tpu.memory_space<vmem>>, %arg10: memref<1x32xf32, #tpu.memory_space<vmem>>, %arg11: memref<1x1xf32, #tpu.memory_space<smem>>, %arg12: memref<1x32xf32, #tpu.memory_space<vmem>>, %arg13: memref<1x32xf32, #tpu.memory_space<vmem>>, %arg14: memref<8x32xf32, #tpu.memory_space<vmem>>) attributes {dimension_semantics = [#tpu.dimension_semantics<parallel>], iteration_bounds = array<i64: 1>, scalar_prefetch = 0 : i64, scratch_operands = 0 : i64, tpu.core_type = #tpu.core_type<tc>, window_params = [{transform_indices = @transform_0, window_bounds = array<i64: 8, 8, 32>}, {transform_indices = @transform_1, window_bounds = array<i64: 8, 8>}, {transform_indices = @transform_2, window_bounds = array<i64: 64, 1>}, {pipeline_mode = #tpu.pipeline_mode<synchronous>, transform_indices = @transform_3, window_bounds = array<i64: 32, 96>}, {pipeline_mode = #tpu.pipeline_mode<synchronous>, transform_indices = @transform_4, window_bounds = array<i64: 1, 96>}, {pipeline_mode = #tpu.pipeline_mode<synchronous>, transform_indices = @transform_5, window_bounds = array<i64: 1, 32>}, {pipeline_mode = #tpu.pipeline_mode<synchronous>, transform_indices = @transform_6, window_bounds = array<i64: 1, 32>}, {pipeline_mode = #tpu.pipeline_mode<synchronous>, transform_indices = @transform_7, window_bounds = array<i64: 32, 32>}, {pipeline_mode = #tpu.pipeline_mode<synchronous>, transform_indices = @transform_8, window_bounds = array<i64: 1, 32>}, {pipeline_mode = #tpu.pipeline_mode<synchronous>, transform_indices = @transform_9, window_bounds = array<i64: 1, 32>}, {transform_indices = @transform_10, window_bounds = array<i64: 1, 1>}, {pipeline_mode = #tpu.pipeline_mode<synchronous>, transform_indices = @transform_11, window_bounds = array<i64: 1, 32>}, {pipeline_mode = #tpu.pipeline_mode<synchronous>, transform_indices = @transform_12, window_bounds = array<i64: 1, 32>}, {transform_indices = @transform_13, window_bounds = array<i64: 8, 32>}]} {
    %c0 = arith.constant 0 : index
    %c0_0 = arith.constant 0 : index
    %c0_1 = arith.constant 0 : index
    %0 = vector.load %arg1[%c0, %c0_0, %c0_1] : memref<8x8x32xf32, #tpu.memory_space<vmem>>, vector<8x8x32xf32>
    %1 = vector.shape_cast %0 : vector<8x8x32xf32> to vector<64x32xf32>
    %c0_2 = arith.constant 0 : index
    %c0_3 = arith.constant 0 : index
    %2 = vector.load %arg2[%c0_2, %c0_3] : memref<8x8xf32, #tpu.memory_space<vmem>>, vector<8x8xf32>
    %c0_4 = arith.constant 0 : index
    %c0_5 = arith.constant 0 : index
    %3 = vector.load %arg3[%c0_4, %c0_5] : memref<64x1xf32, #tpu.memory_space<vmem>>, vector<64x1xf32>
    %c0_6 = arith.constant 0 : index
    %c0_7 = arith.constant 0 : index
    %4 = vector.load %arg4[%c0_6, %c0_7] : memref<32x96xf32, #tpu.memory_space<vmem>>, vector<32x96xf32>
    %cst = arith.constant dense<0.000000e+00> : vector<64x96xf32>
    %5 = tpu.matmul %1, %4, %cst {dimension_numbers = #tpu.dot_dimension_numbers<[1], [0], [0], [1], [0, 0, 1, 1], [], []>} : vector<64x32xf32>, vector<32x96xf32>, vector<64x96xf32> -> vector<64x96xf32>
    %c0_8 = arith.constant 0 : index
    %c0_9 = arith.constant 0 : index
    %6 = vector.load %arg5[%c0_8, %c0_9] : memref<1x96xf32, #tpu.memory_space<vmem>>, vector<1x96xf32>
    %7 = vector.broadcast %6 : vector<1x96xf32> to vector<64x96xf32>
    %8 = arith.addf %5, %7 : vector<64x96xf32>
    %9 = vector.extract_strided_slice %8 {offsets = [0, 0], sizes = [64, 32], strides = [1, 1]} : vector<64x96xf32> to vector<64x32xf32>
    %10 = vector.shape_cast %9 : vector<64x32xf32> to vector<8x8x32xf32>
    %11 = vector.extract_strided_slice %8 {offsets = [0, 32], sizes = [64, 32], strides = [1, 1]} : vector<64x96xf32> to vector<64x32xf32>
    %12 = vector.shape_cast %11 : vector<64x32xf32> to vector<8x8x32xf32>
    %13 = vector.extract_strided_slice %8 {offsets = [0, 64], sizes = [64, 32], strides = [1, 1]} : vector<64x96xf32> to vector<64x32xf32>
    %14 = vector.shape_cast %13 : vector<64x32xf32> to vector<8x8x32xf32>
    %15 = vector.shape_cast %2 : vector<8x8xf32> to vector<8x1x8xf32>
    %16 = vector.extract_strided_slice %10 {offsets = [0, 0, 0], sizes = [8, 8, 8], strides = [1, 1, 1]} : vector<8x8x32xf32> to vector<8x8x8xf32>
    %17 = vector.extract_strided_slice %12 {offsets = [0, 0, 0], sizes = [8, 8, 8], strides = [1, 1, 1]} : vector<8x8x32xf32> to vector<8x8x8xf32>
    %18 = vector.extract_strided_slice %14 {offsets = [0, 0, 0], sizes = [8, 8, 8], strides = [1, 1, 1]} : vector<8x8x32xf32> to vector<8x8x8xf32>
    "tpu.trace_start"() <{level = 10 : i32, message = "bld,bmd->blm"}> : () -> ()
    %cst_10 = arith.constant dense<0.000000e+00> : vector<8x8x8xf32>
    %19 = tpu.matmul %16, %17, %cst_10 {dimension_numbers = #tpu.dot_dimension_numbers<[2], [2], [1], [1], [0, 0, 0, 1, 1, 1], [0], [0]>} : vector<8x8x8xf32>, vector<8x8x8xf32>, vector<8x8x8xf32> -> vector<8x8x8xf32>
    "tpu.trace_stop"() : () -> ()
    %cst_11 = arith.constant 0.353553385 : f32
    %20 = vector.broadcast %cst_11 : f32 to vector<8x8x8xf32>
    %21 = arith.mulf %19, %20 : vector<8x8x8xf32>
    %22 = math.exp %21 : vector<8x8x8xf32>
    %23 = vector.broadcast %15 : vector<8x1x8xf32> to vector<8x8x8xf32>
    %24 = arith.mulf %22, %23 : vector<8x8x8xf32>
    %cst_12 = arith.constant dense<0.000000e+00> : vector<8x8xf32>
    %25 = vector.multi_reduction <add>, %24, %cst_12 [2] : vector<8x8x8xf32> to vector<8x8xf32>
    %26 = vector.shape_cast %25 : vector<8x8xf32> to vector<8x8x1xf32>
    %cst_13 = arith.constant 9.99999993E-9 : f32
    %27 = vector.broadcast %cst_13 : f32 to vector<8x8x1xf32>
    %28 = arith.addf %26, %27 : vector<8x8x1xf32>
    %29 = tpu.reciprocal %28 {approx = true} : vector<8x8x1xf32> -> vector<8x8x1xf32>
    %30 = vector.broadcast %29 : vector<8x8x1xf32> to vector<8x8x8xf32>
    %31 = arith.mulf %24, %30 : vector<8x8x8xf32>
    "tpu.trace_start"() <{level = 10 : i32, message = "blm,bmd->bld"}> : () -> ()
    %cst_14 = arith.constant dense<0.000000e+00> : vector<8x8x8xf32>
    %32 = tpu.matmul %31, %18, %cst_14 {dimension_numbers = #tpu.dot_dimension_numbers<[2], [1], [1], [2], [0, 0, 0, 1, 1, 2], [0], [0]>} : vector<8x8x8xf32>, vector<8x8x8xf32>, vector<8x8x8xf32> -> vector<8x8x8xf32>
    "tpu.trace_stop"() : () -> ()
    %33 = vector.shape_cast %32 : vector<8x8x8xf32> to vector<64x8xf32>
    %34 = vector.extract_strided_slice %10 {offsets = [0, 0, 8], sizes = [8, 8, 8], strides = [1, 1, 1]} : vector<8x8x32xf32> to vector<8x8x8xf32>
    %35 = vector.extract_strided_slice %12 {offsets = [0, 0, 8], sizes = [8, 8, 8], strides = [1, 1, 1]} : vector<8x8x32xf32> to vector<8x8x8xf32>
    %36 = vector.extract_strided_slice %14 {offsets = [0, 0, 8], sizes = [8, 8, 8], strides = [1, 1, 1]} : vector<8x8x32xf32> to vector<8x8x8xf32>
    "tpu.trace_start"() <{level = 10 : i32, message = "bld,bmd->blm"}> : () -> ()
    %cst_15 = arith.constant dense<0.000000e+00> : vector<8x8x8xf32>
    %37 = tpu.matmul %34, %35, %cst_15 {dimension_numbers = #tpu.dot_dimension_numbers<[2], [2], [1], [1], [0, 0, 0, 1, 1, 1], [0], [0]>} : vector<8x8x8xf32>, vector<8x8x8xf32>, vector<8x8x8xf32> -> vector<8x8x8xf32>
    "tpu.trace_stop"() : () -> ()
    %cst_16 = arith.constant 0.353553385 : f32
    %38 = vector.broadcast %cst_16 : f32 to vector<8x8x8xf32>
    %39 = arith.mulf %37, %38 : vector<8x8x8xf32>
    %40 = math.exp %39 : vector<8x8x8xf32>
    %41 = vector.broadcast %15 : vector<8x1x8xf32> to vector<8x8x8xf32>
    %42 = arith.mulf %40, %41 : vector<8x8x8xf32>
    %cst_17 = arith.constant dense<0.000000e+00> : vector<8x8xf32>
    %43 = vector.multi_reduction <add>, %42, %cst_17 [2] : vector<8x8x8xf32> to vector<8x8xf32>
    %44 = vector.shape_cast %43 : vector<8x8xf32> to vector<8x8x1xf32>
    %cst_18 = arith.constant 9.99999993E-9 : f32
    %45 = vector.broadcast %cst_18 : f32 to vector<8x8x1xf32>
    %46 = arith.addf %44, %45 : vector<8x8x1xf32>
    %47 = tpu.reciprocal %46 {approx = true} : vector<8x8x1xf32> -> vector<8x8x1xf32>
    %48 = vector.broadcast %47 : vector<8x8x1xf32> to vector<8x8x8xf32>
    %49 = arith.mulf %42, %48 : vector<8x8x8xf32>
    "tpu.trace_start"() <{level = 10 : i32, message = "blm,bmd->bld"}> : () -> ()
    %cst_19 = arith.constant dense<0.000000e+00> : vector<8x8x8xf32>
    %50 = tpu.matmul %49, %36, %cst_19 {dimension_numbers = #tpu.dot_dimension_numbers<[2], [1], [1], [2], [0, 0, 0, 1, 1, 2], [0], [0]>} : vector<8x8x8xf32>, vector<8x8x8xf32>, vector<8x8x8xf32> -> vector<8x8x8xf32>
    "tpu.trace_stop"() : () -> ()
    %51 = vector.shape_cast %50 : vector<8x8x8xf32> to vector<64x8xf32>
    %52 = vector.extract_strided_slice %10 {offsets = [0, 0, 16], sizes = [8, 8, 8], strides = [1, 1, 1]} : vector<8x8x32xf32> to vector<8x8x8xf32>
    %53 = vector.extract_strided_slice %12 {offsets = [0, 0, 16], sizes = [8, 8, 8], strides = [1, 1, 1]} : vector<8x8x32xf32> to vector<8x8x8xf32>
    %54 = vector.extract_strided_slice %14 {offsets = [0, 0, 16], sizes = [8, 8, 8], strides = [1, 1, 1]} : vector<8x8x32xf32> to vector<8x8x8xf32>
    "tpu.trace_start"() <{level = 10 : i32, message = "bld,bmd->blm"}> : () -> ()
    %cst_20 = arith.constant dense<0.000000e+00> : vector<8x8x8xf32>
    %55 = tpu.matmul %52, %53, %cst_20 {dimension_numbers = #tpu.dot_dimension_numbers<[2], [2], [1], [1], [0, 0, 0, 1, 1, 1], [0], [0]>} : vector<8x8x8xf32>, vector<8x8x8xf32>, vector<8x8x8xf32> -> vector<8x8x8xf32>
    "tpu.trace_stop"() : () -> ()
    %cst_21 = arith.constant 0.353553385 : f32
    %56 = vector.broadcast %cst_21 : f32 to vector<8x8x8xf32>
    %57 = arith.mulf %55, %56 : vector<8x8x8xf32>
    %58 = math.exp %57 : vector<8x8x8xf32>
    %59 = vector.broadcast %15 : vector<8x1x8xf32> to vector<8x8x8xf32>
    %60 = arith.mulf %58, %59 : vector<8x8x8xf32>
    %cst_22 = arith.constant dense<0.000000e+00> : vector<8x8xf32>
    %61 = vector.multi_reduction <add>, %60, %cst_22 [2] : vector<8x8x8xf32> to vector<8x8xf32>
    %62 = vector.shape_cast %61 : vector<8x8xf32> to vector<8x8x1xf32>
    %cst_23 = arith.constant 9.99999993E-9 : f32
    %63 = vector.broadcast %cst_23 : f32 to vector<8x8x1xf32>
    %64 = arith.addf %62, %63 : vector<8x8x1xf32>
    %65 = tpu.reciprocal %64 {approx = true} : vector<8x8x1xf32> -> vector<8x8x1xf32>
    %66 = vector.broadcast %65 : vector<8x8x1xf32> to vector<8x8x8xf32>
    %67 = arith.mulf %60, %66 : vector<8x8x8xf32>
    "tpu.trace_start"() <{level = 10 : i32, message = "blm,bmd->bld"}> : () -> ()
    %cst_24 = arith.constant dense<0.000000e+00> : vector<8x8x8xf32>
    %68 = tpu.matmul %67, %54, %cst_24 {dimension_numbers = #tpu.dot_dimension_numbers<[2], [1], [1], [2], [0, 0, 0, 1, 1, 2], [0], [0]>} : vector<8x8x8xf32>, vector<8x8x8xf32>, vector<8x8x8xf32> -> vector<8x8x8xf32>
    "tpu.trace_stop"() : () -> ()
    %69 = vector.shape_cast %68 : vector<8x8x8xf32> to vector<64x8xf32>
    %70 = vector.extract_strided_slice %10 {offsets = [0, 0, 24], sizes = [8, 8, 8], strides = [1, 1, 1]} : vector<8x8x32xf32> to vector<8x8x8xf32>
    %71 = vector.extract_strided_slice %12 {offsets = [0, 0, 24], sizes = [8, 8, 8], strides = [1, 1, 1]} : vector<8x8x32xf32> to vector<8x8x8xf32>
    %72 = vector.extract_strided_slice %14 {offsets = [0, 0, 24], sizes = [8, 8, 8], strides = [1, 1, 1]} : vector<8x8x32xf32> to vector<8x8x8xf32>
    "tpu.trace_start"() <{level = 10 : i32, message = "bld,bmd->blm"}> : () -> ()
    %cst_25 = arith.constant dense<0.000000e+00> : vector<8x8x8xf32>
    %73 = tpu.matmul %70, %71, %cst_25 {dimension_numbers = #tpu.dot_dimension_numbers<[2], [2], [1], [1], [0, 0, 0, 1, 1, 1], [0], [0]>} : vector<8x8x8xf32>, vector<8x8x8xf32>, vector<8x8x8xf32> -> vector<8x8x8xf32>
    "tpu.trace_stop"() : () -> ()
    %cst_26 = arith.constant 0.353553385 : f32
    %74 = vector.broadcast %cst_26 : f32 to vector<8x8x8xf32>
    %75 = arith.mulf %73, %74 : vector<8x8x8xf32>
    %76 = math.exp %75 : vector<8x8x8xf32>
    %77 = vector.broadcast %15 : vector<8x1x8xf32> to vector<8x8x8xf32>
    %78 = arith.mulf %76, %77 : vector<8x8x8xf32>
    %cst_27 = arith.constant dense<0.000000e+00> : vector<8x8xf32>
    %79 = vector.multi_reduction <add>, %78, %cst_27 [2] : vector<8x8x8xf32> to vector<8x8xf32>
    %80 = vector.shape_cast %79 : vector<8x8xf32> to vector<8x8x1xf32>
    %cst_28 = arith.constant 9.99999993E-9 : f32
    %81 = vector.broadcast %cst_28 : f32 to vector<8x8x1xf32>
    %82 = arith.addf %80, %81 : vector<8x8x1xf32>
    %83 = tpu.reciprocal %82 {approx = true} : vector<8x8x1xf32> -> vector<8x8x1xf32>
    %84 = vector.broadcast %83 : vector<8x8x1xf32> to vector<8x8x8xf32>
    %85 = arith.mulf %78, %84 : vector<8x8x8xf32>
    "tpu.trace_start"() <{level = 10 : i32, message = "blm,bmd->bld"}> : () -> ()
    %cst_29 = arith.constant dense<0.000000e+00> : vector<8x8x8xf32>
    %86 = tpu.matmul %85, %72, %cst_29 {dimension_numbers = #tpu.dot_dimension_numbers<[2], [1], [1], [2], [0, 0, 0, 1, 1, 2], [0], [0]>} : vector<8x8x8xf32>, vector<8x8x8xf32>, vector<8x8x8xf32> -> vector<8x8x8xf32>
    "tpu.trace_stop"() : () -> ()
    %87 = vector.shape_cast %86 : vector<8x8x8xf32> to vector<64x8xf32>
    %88 = tpu.concatenate %33, %51, %69, %87 in 1 : vector<64x8xf32>, vector<64x8xf32>, vector<64x8xf32>, vector<64x8xf32> -> vector<64x32xf32>
    %c0_30 = arith.constant 0 : index
    %c0_31 = arith.constant 0 : index
    %89 = vector.load %arg6[%c0_30, %c0_31] : memref<1x32xf32, #tpu.memory_space<vmem>>, vector<1x32xf32>
    %c0_32 = arith.constant 0 : index
    %c0_33 = arith.constant 0 : index
    %90 = vector.load %arg7[%c0_32, %c0_33] : memref<1x32xf32, #tpu.memory_space<vmem>>, vector<1x32xf32>
    %cst_34 = arith.constant dense<0.000000e+00> : vector<64xf32>
    %91 = vector.multi_reduction <add>, %88, %cst_34 [1] : vector<64x32xf32> to vector<64xf32>
    %92 = vector.shape_cast %91 : vector<64xf32> to vector<64x1xf32>
    %cst_35 = arith.constant 3.200000e+01 : f32
    %93 = vector.broadcast %cst_35 : f32 to vector<64x1xf32>
    %94 = arith.divf %92, %93 : vector<64x1xf32>
    %95 = vector.broadcast %94 : vector<64x1xf32> to vector<64x32xf32>
    %96 = arith.subf %88, %95 : vector<64x32xf32>
    %97 = arith.mulf %96, %96 : vector<64x32xf32>
    %cst_36 = arith.constant dense<0.000000e+00> : vector<64xf32>
    %98 = vector.multi_reduction <add>, %97, %cst_36 [1] : vector<64x32xf32> to vector<64xf32>
    %99 = vector.shape_cast %98 : vector<64xf32> to vector<64x1xf32>
    %cst_37 = arith.constant 3.200000e+01 : f32
    %100 = vector.broadcast %cst_37 : f32 to vector<64x1xf32>
    %101 = arith.divf %99, %100 : vector<64x1xf32>
    %102 = vector.broadcast %94 : vector<64x1xf32> to vector<64x32xf32>
    %103 = arith.subf %88, %102 : vector<64x32xf32>
    %cst_38 = arith.constant 9.99999974E-6 : f32
    %104 = vector.broadcast %cst_38 : f32 to vector<64x1xf32>
    %105 = arith.addf %101, %104 : vector<64x1xf32>
    %106 = math.rsqrt %105 : vector<64x1xf32>
    %107 = vector.broadcast %106 : vector<64x1xf32> to vector<64x32xf32>
    %108 = arith.mulf %103, %107 : vector<64x32xf32>
    %109 = vector.broadcast %89 : vector<1x32xf32> to vector<64x32xf32>
    %110 = arith.mulf %108, %109 : vector<64x32xf32>
    %111 = vector.broadcast %90 : vector<1x32xf32> to vector<64x32xf32>
    %112 = arith.addf %110, %111 : vector<64x32xf32>
    %c0_39 = arith.constant 0 : index
    %c0_40 = arith.constant 0 : index
    %113 = vector.load %arg8[%c0_39, %c0_40] : memref<32x32xf32, #tpu.memory_space<vmem>>, vector<32x32xf32>
    %cst_41 = arith.constant dense<0.000000e+00> : vector<64x32xf32>
    %114 = tpu.matmul %112, %113, %cst_41 {dimension_numbers = #tpu.dot_dimension_numbers<[1], [0], [0], [1], [0, 0, 1, 1], [], []>} : vector<64x32xf32>, vector<32x32xf32>, vector<64x32xf32> -> vector<64x32xf32>
    %c0_42 = arith.constant 0 : index
    %c0_43 = arith.constant 0 : index
    %115 = vector.load %arg9[%c0_42, %c0_43] : memref<1x32xf32, #tpu.memory_space<vmem>>, vector<1x32xf32>
    %116 = vector.broadcast %115 : vector<1x32xf32> to vector<64x32xf32>
    %117 = arith.addf %114, %116 : vector<64x32xf32>
    %118 = math.tanh %117 : vector<64x32xf32>
    %c0_44 = arith.constant 0 : index
    %c0_45 = arith.constant 0 : index
    %119 = vector.load %arg10[%c0_44, %c0_45] : memref<1x32xf32, #tpu.memory_space<vmem>>, vector<1x32xf32>
    %120 = vector.broadcast %119 : vector<1x32xf32> to vector<64x32xf32>
    %121 = arith.mulf %118, %120 : vector<64x32xf32>
    %cst_46 = arith.constant dense<0.000000e+00> : vector<64xf32>
    %122 = vector.multi_reduction <add>, %121, %cst_46 [1] : vector<64x32xf32> to vector<64xf32>
    %123 = vector.shape_cast %122 : vector<64xf32> to vector<64x1xf32>
    %c0_47 = arith.constant 0 : index
    %c0_48 = arith.constant 0 : index
    %124 = memref.load %arg11[%c0_47, %c0_48] : memref<1x1xf32, #tpu.memory_space<smem>>
    %125 = vector.broadcast %124 : f32 to vector<64x1xf32>
    %126 = arith.addf %123, %125 : vector<64x1xf32>
    %127 = math.exp %126 : vector<64x1xf32>
    %128 = arith.mulf %127, %3 : vector<64x1xf32>
    %129 = vector.broadcast %128 : vector<64x1xf32> to vector<64x32xf32>
    %130 = arith.mulf %129, %112 : vector<64x32xf32>
    %131 = vector.shape_cast %130 : vector<64x32xf32> to vector<8x8x32xf32>
    %cst_49 = arith.constant dense<0.000000e+00> : vector<8x32xf32>
    %132 = vector.multi_reduction <add>, %131, %cst_49 [1] : vector<8x8x32xf32> to vector<8x32xf32>
    %133 = vector.shape_cast %128 : vector<64x1xf32> to vector<8x8x1xf32>
    %cst_50 = arith.constant dense<0.000000e+00> : vector<8x1xf32>
    %134 = vector.multi_reduction <add>, %133, %cst_50 [1] : vector<8x8x1xf32> to vector<8x1xf32>
    %cst_51 = arith.constant 9.99999993E-9 : f32
    %135 = vector.broadcast %cst_51 : f32 to vector<8x1xf32>
    %136 = arith.addf %134, %135 : vector<8x1xf32>
    %137 = tpu.reciprocal %136 {approx = true} : vector<8x1xf32> -> vector<8x1xf32>
    %138 = vector.broadcast %137 : vector<8x1xf32> to vector<8x32xf32>
    %139 = arith.mulf %132, %138 : vector<8x32xf32>
    %c0_52 = arith.constant 0 : index
    %c0_53 = arith.constant 0 : index
    %140 = vector.load %arg12[%c0_52, %c0_53] : memref<1x32xf32, #tpu.memory_space<vmem>>, vector<1x32xf32>
    %c0_54 = arith.constant 0 : index
    %c0_55 = arith.constant 0 : index
    %141 = vector.load %arg13[%c0_54, %c0_55] : memref<1x32xf32, #tpu.memory_space<vmem>>, vector<1x32xf32>
    %cst_56 = arith.constant dense<0.000000e+00> : vector<8xf32>
    %142 = vector.multi_reduction <add>, %139, %cst_56 [1] : vector<8x32xf32> to vector<8xf32>
    %143 = vector.shape_cast %142 : vector<8xf32> to vector<8x1xf32>
    %cst_57 = arith.constant 3.200000e+01 : f32
    %144 = vector.broadcast %cst_57 : f32 to vector<8x1xf32>
    %145 = arith.divf %143, %144 : vector<8x1xf32>
    %146 = vector.broadcast %145 : vector<8x1xf32> to vector<8x32xf32>
    %147 = arith.subf %139, %146 : vector<8x32xf32>
    %148 = arith.mulf %147, %147 : vector<8x32xf32>
    %cst_58 = arith.constant dense<0.000000e+00> : vector<8xf32>
    %149 = vector.multi_reduction <add>, %148, %cst_58 [1] : vector<8x32xf32> to vector<8xf32>
    %150 = vector.shape_cast %149 : vector<8xf32> to vector<8x1xf32>
    %cst_59 = arith.constant 3.200000e+01 : f32
    %151 = vector.broadcast %cst_59 : f32 to vector<8x1xf32>
    %152 = arith.divf %150, %151 : vector<8x1xf32>
    %153 = vector.broadcast %145 : vector<8x1xf32> to vector<8x32xf32>
    %154 = arith.subf %139, %153 : vector<8x32xf32>
    %cst_60 = arith.constant 9.99999974E-6 : f32
    %155 = vector.broadcast %cst_60 : f32 to vector<8x1xf32>
    %156 = arith.addf %152, %155 : vector<8x1xf32>
    %157 = math.rsqrt %156 : vector<8x1xf32>
    %158 = vector.broadcast %157 : vector<8x1xf32> to vector<8x32xf32>
    %159 = arith.mulf %154, %158 : vector<8x32xf32>
    %160 = vector.broadcast %140 : vector<1x32xf32> to vector<8x32xf32>
    %161 = arith.mulf %159, %160 : vector<8x32xf32>
    %162 = vector.broadcast %141 : vector<1x32xf32> to vector<8x32xf32>
    %163 = arith.addf %161, %162 : vector<8x32xf32>
    %c0_61 = arith.constant 0 : index
    %c0_62 = arith.constant 0 : index
    %164 = vector.load %arg14[%c0_61, %c0_62] : memref<8x32xf32, #tpu.memory_space<vmem>>, vector<8x32xf32>
    tpu.vector_store %arg14[%c0_61, %c0_62], %163 {strides = array<i32>} : memref<8x32xf32, #tpu.memory_space<vmem>>, vector<8x32xf32>,
    return
  }
  func.func @transform_0(%arg0: i32) -> (i32, i32, i32) {
    %c0_i32 = arith.constant 0 : i32
    %c0_i32_0 = arith.constant 0 : i32
    %c0_i32_1 = arith.constant 0 : i32
    return %arg0, %c0_i32, %c0_i32_0 : i32, i32, i32
  }
  func.func @transform_1(%arg0: i32) -> (i32, i32) {
    %c0_i32 = arith.constant 0 : i32
    %c0_i32_0 = arith.constant 0 : i32
    return %arg0, %c0_i32 : i32, i32
  }
  func.func @transform_2(%arg0: i32) -> (i32, i32) {
    %c0_i32 = arith.constant 0 : i32
    %c0_i32_0 = arith.constant 0 : i32
    return %arg0, %c0_i32 : i32, i32
  }
  func.func @transform_3(%arg0: i32) -> (i32, i32) {
    %c0_i32 = arith.constant 0 : i32
    %c0_i32_0 = arith.constant 0 : i32
    %c0_i32_1 = arith.constant 0 : i32
    return %c0_i32, %c0_i32_0 : i32, i32
  }
  func.func @transform_4(%arg0: i32) -> (i32, i32) {
    %c0_i32 = arith.constant 0 : i32
    %c0_i32_0 = arith.constant 0 : i32
    %c0_i32_1 = arith.constant 0 : i32
    return %c0_i32, %c0_i32_0 : i32, i32
  }
  func.func @transform_5(%arg0: i32) -> (i32, i32) {
    %c0_i32 = arith.constant 0 : i32
    %c0_i32_0 = arith.constant 0 : i32
    %c0_i32_1 = arith.constant 0 : i32
    return %c0_i32, %c0_i32_0 : i32, i32
  }
  func.func @transform_6(%arg0: i32) -> (i32, i32) {
    %c0_i32 = arith.constant 0 : i32
    %c0_i32_0 = arith.constant 0 : i32
    %c0_i32_1 = arith.constant 0 : i32
    return %c0_i32, %c0_i32_0 : i32, i32
  }
  func.func @transform_7(%arg0: i32) -> (i32, i32) {
    %c0_i32 = arith.constant 0 : i32
    %c0_i32_0 = arith.constant 0 : i32
    %c0_i32_1 = arith.constant 0 : i32
    return %c0_i32, %c0_i32_0 : i32, i32
  }
  func.func @transform_8(%arg0: i32) -> (i32, i32) {
    %c0_i32 = arith.constant 0 : i32
    %c0_i32_0 = arith.constant 0 : i32
    %c0_i32_1 = arith.constant 0 : i32
    return %c0_i32, %c0_i32_0 : i32, i32
  }
  func.func @transform_9(%arg0: i32) -> (i32, i32) {
    %c0_i32 = arith.constant 0 : i32
    %c0_i32_0 = arith.constant 0 : i32
    %c0_i32_1 = arith.constant 0 : i32
    return %c0_i32, %c0_i32_0 : i32, i32
  }
  func.func @transform_10(%arg0: i32) -> (i32, i32) {
    %c0_i32 = arith.constant 0 : i32
    %c0_i32_0 = arith.constant 0 : i32
    %c0_i32_1 = arith.constant 0 : i32
    return %c0_i32, %c0_i32_0 : i32, i32
  }
  func.func @transform_11(%arg0: i32) -> (i32, i32) {
    %c0_i32 = arith.constant 0 : i32
    %c0_i32_0 = arith.constant 0 : i32
    %c0_i32_1 = arith.constant 0 : i32
    return %c0_i32, %c0_i32_0 : i32, i32
  }
  func.func @transform_12(%arg0: i32) -> (i32, i32) {
    %c0_i32 = arith.constant 0 : i32
    %c0_i32_0 = arith.constant 0 : i32
    %c0_i32_1 = arith.constant 0 : i32
    return %c0_i32, %c0_i32_0 : i32, i32
  }
  func.func @transform_13(%arg0: i32) -> (i32, i32) {
    %c0_i32 = arith.constant 0 : i32
    %c0_i32_0 = arith.constant 0 : i32
    return %arg0, %c0_i32 : i32, i32
  }
}

</mosaic_0001>

<llo_original>
// kernel: tpu_custom_call.1
$region0: #{tpu_custom_call.1}
  #allocation0 [shape = 'u32[]', space=smem, size = 0x4, offset = 0x4, fixed_abs, tag = 'smem constant byte address 0x4 - core index']
  #allocation1 [shape = 'u32[72,128]{1,0:T(1,128)}', space=vmem, size = 0x9000, scoped, tag = 'internal scratch']
  #allocation2 [shape = 'f32[1,1]{1,0:T(1,128)S(6)}', space=smem, size = 0x200, scoped, tag = 'scoped memory for tpu_custom_call.1']
  %s0 = inlined_call_operand.vmem [shape: f32[8,8,32], index: 0, kind: input, shape index: {}]
  %s1 = inlined_call_operand.hbm [shape: f32[8,8], index: 1, kind: input, shape index: {}]
  %s2 = inlined_call_operand.vmem [shape: f32[64,1], index: 2, kind: input, shape index: {}]
  %s3 = inlined_call_operand.hbm [shape: f32[32,96], index: 3, kind: input, shape index: {}]
  %s4 = inlined_call_operand.vmem [shape: f32[1,96], index: 4, kind: input, shape index: {}]
  %s5 = inlined_call_operand.vmem [shape: f32[1,32], index: 5, kind: input, shape index: {}]
  %s6 = inlined_call_operand.vmem [shape: f32[1,32], index: 6, kind: input, shape index: {}]
  %s7 = inlined_call_operand.hbm [shape: f32[32,32], index: 7, kind: input, shape index: {}]
  %s8 = inlined_call_operand.vmem [shape: f32[1,32], index: 8, kind: input, shape index: {}]
  %s9 = inlined_call_operand.vmem [shape: f32[1,32], index: 9, kind: input, shape index: {}]
  %s10 = inlined_call_operand.<no memory space> [shape: f32[1,1], index: 10, kind: input, shape index: {}]
  %s11 = inlined_call_operand.vmem [shape: f32[1,32], index: 11, kind: input, shape index: {}]
  %s12 = inlined_call_operand.vmem [shape: f32[1,32], index: 12, kind: input, shape index: {}]
  %s13 = inlined_call_operand.hbm [shape: f32[8,32], index: 13, kind: output, shape index: {}]
  %s14 = sld [smem:[#allocation0]]
  $region74: #{tpu_custom_call.1} parent=0
    _
  %s16 = ssub.s32 1, %s14
  %s17 = scalar_select 0, %s16, %s14
  %18 = sst [smem:[#allocation2]] %s10
  $region1: #{tpu_custom_call.1} parent=0
    #allocation3 [shape = 'u8[4096]{0}', space=vmem, size = 0x1000, scoped, tag = 'input window, operand 1, single buffered']
    #allocation4 [shape = 's32[1]{0}', space=sflag, size = 0x4, scoped, tag = 'scoped memory for tpu_custom_call.1']
    #allocation5 [shape = 's32[1]{0}', space=sflag, size = 0x4, scoped, tag = 'scoped memory for tpu_custom_call.1']
    #allocation6 [shape = 'u8[16384]{0}', space=vmem, size = 0x4000, scoped, tag = 'input window, operand 3, single buffered']
    #allocation7 [shape = 's32[1]{0}', space=sflag, size = 0x4, scoped, tag = 'scoped memory for tpu_custom_call.1']
    #allocation8 [shape = 'u8[16384]{0}', space=vmem, size = 0x4000, scoped, tag = 'input window, operand 7, single buffered']
    #allocation9 [shape = 'u8[4096]{0}', space=vmem, size = 0x1000, scoped, tag = 'output window, operand 0, single buffered']
    %19 = vsyncpa [#allocation4], 0
    %20 = vsyncpa [#allocation7], 0
    %21 = vsyncpa [#allocation5], 0
    // Predicated region
    $region2: #{tpu_custom_call.1} parent=1 // pred_check
      _
    $region3: #{tpu_custom_call.1} parent=1 // pred_check_branch
      %23 = sbr.rel (0) target = $region5
    $region4: #{tpu_custom_call.1} parent=1 // pred_region
      _
    $region5: #{tpu_custom_call.1} parent=1 // pred_fallthru
      _
    // Predicated region
    $region6: #{tpu_custom_call.1} parent=1 // pred_check
      _
    $region7: #{tpu_custom_call.1} parent=1 // pred_check_branch
      %25 = sbr.rel (0) target = $region9
    $region8: #{tpu_custom_call.1} parent=1 // pred_region
      %27 = vsyncadd [#allocation4], 0
      %s29 = sshll.u32 %s1, 4
      %s30 = int_to_ptr.hbm [resolvable:$true] %s29
      %s31 = sshll.u32 [#allocation3], 4
      %s32 = int_to_ptr.vmem [resolvable:$true] %s31
      %34 = dma.hbm_to_vmem [thread:$0]  %s30, 128, %s32, [#allocation4]
    $region9: #{tpu_custom_call.1} parent=1 // pred_fallthru
      _
    // Predicated region
    $region10: #{tpu_custom_call.1} parent=1 // pred_check
      _
    $region11: #{tpu_custom_call.1} parent=1 // pred_check_branch
      %36 = sbr.rel (0) target = $region13
    $region12: #{tpu_custom_call.1} parent=1 // pred_region
      _
    $region13: #{tpu_custom_call.1} parent=1 // pred_fallthru
      _
    // Predicated region
    $region14: #{tpu_custom_call.1} parent=1 // pred_check
      _
    $region15: #{tpu_custom_call.1} parent=1 // pred_check_branch
      %38 = sbr.rel (0) target = $region17
    $region16: #{tpu_custom_call.1} parent=1 // pred_region
      %40 = vsyncadd [#allocation7], 0
      %s41 = sshll.u32 %s3, 4
      %s42 = int_to_ptr.hbm [resolvable:$true] %s41
      %s43 = sshll.u32 [#allocation6], 4
      %s44 = int_to_ptr.vmem [resolvable:$true] %s43
      %49 = dma.hbm_to_vmem [thread:$0]  %s42, 512, %s44, [#allocation7], 128, 128, 8
    $region17: #{tpu_custom_call.1} parent=1 // pred_fallthru
      _
    // Predicated region
    $region18: #{tpu_custom_call.1} parent=1 // pred_check
      _
    $region19: #{tpu_custom_call.1} parent=1 // pred_check_branch
      %51 = sbr.rel (0) target = $region21
    $region20: #{tpu_custom_call.1} parent=1 // pred_region
      _
    $region21: #{tpu_custom_call.1} parent=1 // pred_fallthru
      _
    // Predicated region
    $region22: #{tpu_custom_call.1} parent=1 // pred_check
      _
    $region23: #{tpu_custom_call.1} parent=1 // pred_check_branch
      %53 = sbr.rel (0) target = $region25
    $region24: #{tpu_custom_call.1} parent=1 // pred_region
      _
    $region25: #{tpu_custom_call.1} parent=1 // pred_fallthru
      _
    // Predicated region
    $region26: #{tpu_custom_call.1} parent=1 // pred_check
      _
    $region27: #{tpu_custom_call.1} parent=1 // pred_check_branch
      %55 = sbr.rel (0) target = $region29
    $region28: #{tpu_custom_call.1} parent=1 // pred_region
      _
    $region29: #{tpu_custom_call.1} parent=1 // pred_fallthru
      _
    // Predicated region
    $region30: #{tpu_custom_call.1} parent=1 // pred_check
      _
    $region31: #{tpu_custom_call.1} parent=1 // pred_check_branch
      %57 = sbr.rel (0) target = $region33
    $region32: #{tpu_custom_call.1} parent=1 // pred_region
      %59 = vsyncadd [#allocation7], 0
      %s60 = sshll.u32 %s7, 4
      %s61 = int_to_ptr.hbm [resolvable:$true] %s60
      %s62 = sshll.u32 [#allocation8], 4
      %s63 = int_to_ptr.vmem [resolvable:$true] %s62
      %68 = dma.hbm_to_vmem [thread:$0]  %s61, 512, %s63, [#allocation7], 128, 128, 8
    $region33: #{tpu_custom_call.1} parent=1 // pred_fallthru
      _
    // Predicated region
    $region34: #{tpu_custom_call.1} parent=1 // pred_check
      _
    $region35: #{tpu_custom_call.1} parent=1 // pred_check_branch
      %70 = sbr.rel (0) target = $region37
    $region36: #{tpu_custom_call.1} parent=1 // pred_region
      _
    $region37: #{tpu_custom_call.1} parent=1 // pred_fallthru
      _
    // Predicated region
    $region38: #{tpu_custom_call.1} parent=1 // pred_check
      _
    $region39: #{tpu_custom_call.1} parent=1 // pred_check_branch
      %72 = sbr.rel (0) target = $region41
    $region40: #{tpu_custom_call.1} parent=1 // pred_region
      _
    $region41: #{tpu_custom_call.1} parent=1 // pred_fallthru
      _
    // Predicated region
    $region42: #{tpu_custom_call.1} parent=1 // pred_check
      _
    $region43: #{tpu_custom_call.1} parent=1 // pred_check_branch
      %74 = sbr.rel (0) target = $region45
    $region44: #{tpu_custom_call.1} parent=1 // pred_region
      _
    $region45: #{tpu_custom_call.1} parent=1 // pred_fallthru
      _
    // Predicated region
    $region46: #{tpu_custom_call.1} parent=1 // pred_check
      _
    $region47: #{tpu_custom_call.1} parent=1 // pred_check_branch
      %76 = sbr.rel (0) target = $region49
    $region48: #{tpu_custom_call.1} parent=1 // pred_region
      _
    $region49: #{tpu_custom_call.1} parent=1 // pred_fallthru
      _
    // Predicated region
    $region50: #{tpu_custom_call.1} parent=1 // pred_check
      _
    $region51: #{tpu_custom_call.1} parent=1 // pred_check_branch
      %78 = sbr.rel (0) target = $region53
    $region52: #{tpu_custom_call.1} parent=1 // pred_region
      _
    $region53: #{tpu_custom_call.1} parent=1 // pred_fallthru
      _
    // Predicated region
    $region54: #{tpu_custom_call.1} parent=1 // pred_check
      _
    $region55: #{tpu_custom_call.1} parent=1 // pred_check_branch
      %80 = sbr.rel (0) target = $region57
    $region56: #{tpu_custom_call.1} parent=1 // pred_region
      %82 = dma.done [#allocation4], 128
    $region57: #{tpu_custom_call.1} parent=1 // pred_fallthru
      _
    // Predicated region
    $region58: #{tpu_custom_call.1} parent=1 // pred_check
      _
    $region59: #{tpu_custom_call.1} parent=1 // pred_check_branch
      %84 = sbr.rel (0) target = $region61
    $region60: #{tpu_custom_call.1} parent=1 // pred_region
      %86 = dma.done [#allocation7], 512
    $region61: #{tpu_custom_call.1} parent=1 // pred_fallthru
      _
    // Predicated region
    $region62: #{tpu_custom_call.1} parent=1 // pred_check
      _
    $region63: #{tpu_custom_call.1} parent=1 // pred_check_branch
      %88 = sbr.rel (0) target = $region65
    $region64: #{tpu_custom_call.1} parent=1 // pred_region
      %90 = dma.done [#allocation7], 512
    $region65: #{tpu_custom_call.1} parent=1 // pred_fallthru
      _
    %v91 = vld [vmem:[%s0] sm:$0xff]
    %v92 = vld [vmem:[%s0 + $0x8] sm:$0xff]
    %v93 = vld [vmem:[%s0 + $0x10] sm:$0xff]
    %v94 = vld [vmem:[%s0 + $0x18] sm:$0xff]
    %v95 = vld [vmem:[%s0 + $0x20] sm:$0xff]
    %v96 = vld [vmem:[%s0 + $0x28] sm:$0xff]
    %v97 = vld [vmem:[%s0 + $0x30] sm:$0xff]
    %v98 = vld [vmem:[%s0 + $0x38] sm:$0xff]
    %v99 = vld [vmem:[#allocation3] sm:$0xff]
    %v100 = vld [vmem:[%s2] sm:$0xff]
    %v101 = vld [vmem:[%s2 + $0x8] sm:$0xff]
    %v102 = vld [vmem:[%s2 + $0x10] sm:$0xff]
    %v103 = vld [vmem:[%s2 + $0x18] sm:$0xff]
    %v104 = vld [vmem:[%s2 + $0x20] sm:$0xff]
    %v105 = vld [vmem:[%s2 + $0x28] sm:$0xff]
    %v106 = vld [vmem:[%s2 + $0x30] sm:$0xff]
    %v107 = vld [vmem:[%s2 + $0x38] sm:$0xff]
    %v108 = vld [vmem:[#allocation6] sm:$0xff]
    %v109 = vld [vmem:[#allocation6 + $0x8] sm:$0xff]
    %v110 = vld [vmem:[#allocation6 + $0x10] sm:$0xff]
    %v111 = vld [vmem:[#allocation6 + $0x18] sm:$0xff]
    %v112 = vld [vmem:[%s4] sm:$0x1]
    %v114 = vperm.slane %v112, 0
    %vm116 = vcmask 261120
    %v118 = vsel %vm116, %v91, 0
    %v121 = vsel %vm116, %v92, 0
    %v124 = vsel %vm116, %v93, 0
    %v127 = vsel %vm116, %v94, 0
    %v130 = vsel %vm116, %v95, 0
    %v133 = vsel %vm116, %v96, 0
    %v136 = vsel %vm116, %v97, 0
    %v139 = vsel %vm116, %v98, 0
    %141 = vmatpush.msra.mxu0 0.0
    %142 = vmatpush.msra.mxu0 0.0
    %143 = vmatpush.msra.mxu0 0.0
    %144 = vmatpush.msra.mxu0 0.0
    %145 = vmatpush.msra.mxu0 0.0
    %146 = vmatpush.msra.mxu0 0.0
    %147 = vmatpush.msra.mxu0 0.0
    %148 = vmatpush.msra.mxu0 0.0
    %149 = vmatpush.msra.mxu0 0.0
    %150 = vmatpush.msra.mxu0 0.0
    %151 = vmatpush.msra.mxu0 0.0
    %152 = vmatpush.msra.mxu0 0.0
    %153 = vmatpush.msra.mxu0 %v111
    %154 = vmatpush.msra.mxu0 %v110
    %155 = vmatpush.msra.mxu0 %v109
    %156 = vmatpush.msra.mxu0 %v108
    %157 = vmatmul.f32.gmra.mxu0 %v118
    %v158 = vpop.f32.mrf.mxu0
    %v159 = vadd.f32 %v114, %v158
    %160 = vmatmul.f32.gmra.mxu0 %v121
    %v161 = vpop.f32.mrf.mxu0
    %v162 = vadd.f32 %v114, %v161
    %163 = vmatmul.f32.gmra.mxu0 %v124
    %v164 = vpop.f32.mrf.mxu0
    %v165 = vadd.f32 %v114, %v164
    %166 = vmatmul.f32.gmra.mxu0 %v127
    %v167 = vpop.f32.mrf.mxu0
    %v168 = vadd.f32 %v114, %v167
    %169 = vmatmul.f32.gmra.mxu0 %v130
    %v170 = vpop.f32.mrf.mxu0
    %v171 = vadd.f32 %v114, %v170
    %172 = vmatmul.f32.gmra.mxu0 %v133
    %v173 = vpop.f32.mrf.mxu0
    %v174 = vadd.f32 %v114, %v173
    %175 = vmatmul.f32.gmra.mxu0 %v136
    %v176 = vpop.f32.mrf.mxu0
    %v177 = vadd.f32 %v114, %v176
    %178 = vmatmul.f32.gmra.mxu0 %v139
    %v179 = vpop.f32.mrf.mxu0
    %v180 = vadd.f32 %v114, %v179
    %181 = vdwg.mxu0
    %v183 = vrot.slane %v99, 1
    %v184 = vrot.slane %v99, 2
    %v185 = vrot.slane %v99, 3
    %v186 = vrot.slane %v99, 4
    %v187 = vrot.slane %v99, 5
    %v188 = vrot.slane %v99, 6
    %v189 = vrot.slane %v99, 7
    %191 = vrot.lane.b32.xlu0 %v159, 96
    %v192 = vpop.permute.xlu0 %191
    %vm193 = vcmask 64512
    %v194 = vsel %vm193, %v159, 0
    %v196 = vsel %vm193, %v192, 0
    %198 = vmatpush.xpose.msra.mxu0 0.0
    %199 = vmatpush.xpose.msra.mxu0 0.0
    %200 = vmatpush.xpose.msra.mxu0 0.0
    %201 = vmatpush.xpose.msra.mxu0 0.0
    %202 = vmatpush.xpose.msra.mxu0 0.0
    %203 = vmatpush.xpose.msra.mxu0 0.0
    %204 = vmatpush.xpose.msra.mxu0 0.0
    %205 = vmatpush.xpose.msra.mxu0 0.0
    %206 = vmatpush.xpose.msra.mxu0 0.0
    %207 = vmatpush.xpose.msra.mxu0 0.0
    %208 = vmatpush.xpose.msra.mxu0 0.0
    %209 = vmatpush.xpose.msra.mxu0 0.0
    %210 = vmatpush.xpose.msra.mxu0 0.0
    %211 = vmatpush.xpose.msra.mxu0 0.0
    %212 = vmatpush.xpose.msra.mxu0 0.0
    %213 = vmatpush.xpose.msra.mxu0 %v196
    %214 = vmatmul.f32.gmra.mxu0 %v194
    %v215 = vpop.f32.mrf.mxu0
    %v216 = vadd.f32 0.0, %v215
    %217 = vdwg.mxu0
    %219 = vrot.lane.b32.xlu0 %v162, 96
    %v220 = vpop.permute.xlu0 %219
    %v221 = vsel %vm193, %v162, 0
    %v223 = vsel %vm193, %v220, 0
    %225 = vmatpush.xpose.msra.mxu0 0.0
    %226 = vmatpush.xpose.msra.mxu0 0.0
    %227 = vmatpush.xpose.msra.mxu0 0.0
    %228 = vmatpush.xpose.msra.mxu0 0.0
    %229 = vmatpush.xpose.msra.mxu0 0.0
    %230 = vmatpush.xpose.msra.mxu0 0.0
    %231 = vmatpush.xpose.msra.mxu0 0.0
    %232 = vmatpush.xpose.msra.mxu0 0.0
    %233 = vmatpush.xpose.msra.mxu0 0.0
    %234 = vmatpush.xpose.msra.mxu0 0.0
    %235 = vmatpush.xpose.msra.mxu0 0.0
    %236 = vmatpush.xpose.msra.mxu0 0.0
    %237 = vmatpush.xpose.msra.mxu0 0.0
    %238 = vmatpush.xpose.msra.mxu0 0.0
    %239 = vmatpush.xpose.msra.mxu0 0.0
    %240 = vmatpush.xpose.msra.mxu0 %v223
    %241 = vmatmul.f32.gmra.mxu0 %v221
    %v242 = vpop.f32.mrf.mxu0
    %v243 = vadd.f32 0.0, %v242
    %244 = vdwg.mxu0
    %246 = vrot.lane.b32.xlu0 %v165, 96
    %v247 = vpop.permute.xlu0 %246
    %v248 = vsel %vm193, %v165, 0
    %v250 = vsel %vm193, %v247, 0
    %252 = vmatpush.xpose.msra.mxu0 0.0
    %253 = vmatpush.xpose.msra.mxu0 0.0
    %254 = vmatpush.xpose.msra.mxu0 0.0
    %255 = vmatpush.xpose.msra.mxu0 0.0
    %256 = vmatpush.xpose.msra.mxu0 0.0
    %257 = vmatpush.xpose.msra.mxu0 0.0
    %258 = vmatpush.xpose.msra.mxu0 0.0
    %259 = vmatpush.xpose.msra.mxu0 0.0
    %260 = vmatpush.xpose.msra.mxu0 0.0
    %261 = vmatpush.xpose.msra.mxu0 0.0
    %262 = vmatpush.xpose.msra.mxu0 0.0
    %263 = vmatpush.xpose.msra.mxu0 0.0
    %264 = vmatpush.xpose.msra.mxu0 0.0
    %265 = vmatpush.xpose.msra.mxu0 0.0
    %266 = vmatpush.xpose.msra.mxu0 0.0
    %267 = vmatpush.xpose.msra.mxu0 %v250
    %268 = vmatmul.f32.gmra.mxu0 %v248
    %v269 = vpop.f32.mrf.mxu0
    %v270 = vadd.f32 0.0, %v269
    %271 = vdwg.mxu0
    %273 = vrot.lane.b32.xlu0 %v168, 96
    %v274 = vpop.permute.xlu0 %273
    %v275 = vsel %vm193, %v168, 0
    %v277 = vsel %vm193, %v274, 0
    %279 = vmatpush.xpose.msra.mxu0 0.0
    %280 = vmatpush.xpose.msra.mxu0 0.0
    %281 = vmatpush.xpose.msra.mxu0 0.0
    %282 = vmatpush.xpose.msra.mxu0 0.0
    %283 = vmatpush.xpose.msra.mxu0 0.0
    %284 = vmatpush.xpose.msra.mxu0 0.0
    %285 = vmatpush.xpose.msra.mxu0 0.0
    %286 = vmatpush.xpose.msra.mxu0 0.0
    %287 = vmatpush.xpose.msra.mxu0 0.0
    %288 = vmatpush.xpose.msra.mxu0 0.0
    %289 = vmatpush.xpose.msra.mxu0 0.0
    %290 = vmatpush.xpose.msra.mxu0 0.0
    %291 = vmatpush.xpose.msra.mxu0 0.0
    %292 = vmatpush.xpose.msra.mxu0 0.0
    %293 = vmatpush.xpose.msra.mxu0 0.0
    %294 = vmatpush.xpose.msra.mxu0 %v277
    %295 = vmatmul.f32.gmra.mxu0 %v275
    %v296 = vpop.f32.mrf.mxu0
    %v297 = vadd.f32 0.0, %v296
    %298 = vdwg.mxu0
    %300 = vrot.lane.b32.xlu0 %v171, 96
    %v301 = vpop.permute.xlu0 %300
    %v302 = vsel %vm193, %v171, 0
    %v304 = vsel %vm193, %v301, 0
    %306 = vmatpush.xpose.msra.mxu0 0.0
    %307 = vmatpush.xpose.msra.mxu0 0.0
    %308 = vmatpush.xpose.msra.mxu0 0.0
    %309 = vmatpush.xpose.msra.mxu0 0.0
    %310 = vmatpush.xpose.msra.mxu0 0.0
    %311 = vmatpush.xpose.msra.mxu0 0.0
    %312 = vmatpush.xpose.msra.mxu0 0.0
    %313 = vmatpush.xpose.msra.mxu0 0.0
    %314 = vmatpush.xpose.msra.mxu0 0.0
    %315 = vmatpush.xpose.msra.mxu0 0.0
    %316 = vmatpush.xpose.msra.mxu0 0.0
    %317 = vmatpush.xpose.msra.mxu0 0.0
    %318 = vmatpush.xpose.msra.mxu0 0.0
    %319 = vmatpush.xpose.msra.mxu0 0.0
    %320 = vmatpush.xpose.msra.mxu0 0.0
    %321 = vmatpush.xpose.msra.mxu0 %v304
    %322 = vmatmul.f32.gmra.mxu0 %v302
    %v323 = vpop.f32.mrf.mxu0
    %v324 = vadd.f32 0.0, %v323
    %325 = vdwg.mxu0
    %327 = vrot.lane.b32.xlu0 %v174, 96
    %v328 = vpop.permute.xlu0 %327
    %v329 = vsel %vm193, %v174, 0
    %v331 = vsel %vm193, %v328, 0
    %333 = vmatpush.xpose.msra.mxu0 0.0
    %334 = vmatpush.xpose.msra.mxu0 0.0
    %335 = vmatpush.xpose.msra.mxu0 0.0
    %336 = vmatpush.xpose.msra.mxu0 0.0
    %337 = vmatpush.xpose.msra.mxu0 0.0
    %338 = vmatpush.xpose.msra.mxu0 0.0
    %339 = vmatpush.xpose.msra.mxu0 0.0
    %340 = vmatpush.xpose.msra.mxu0 0.0
    %341 = vmatpush.xpose.msra.mxu0 0.0
    %342 = vmatpush.xpose.msra.mxu0 0.0
    %343 = vmatpush.xpose.msra.mxu0 0.0
    %344 = vmatpush.xpose.msra.mxu0 0.0
    %345 = vmatpush.xpose.msra.mxu0 0.0
    %346 = vmatpush.xpose.msra.mxu0 0.0
    %347 = vmatpush.xpose.msra.mxu0 0.0
    %348 = vmatpush.xpose.msra.mxu0 %v331
    %349 = vmatmul.f32.gmra.mxu0 %v329
    %v350 = vpop.f32.mrf.mxu0
    %v351 = vadd.f32 0.0, %v350
    %352 = vdwg.mxu0
    %354 = vrot.lane.b32.xlu0 %v177, 96
    %v355 = vpop.permute.xlu0 %354
    %v356 = vsel %vm193, %v177, 0
    %v358 = vsel %vm193, %v355, 0
    %360 = vmatpush.xpose.msra.mxu0 0.0
    %361 = vmatpush.xpose.msra.mxu0 0.0
    %362 = vmatpush.xpose.msra.mxu0 0.0
    %363 = vmatpush.xpose.msra.mxu0 0.0
    %364 = vmatpush.xpose.msra.mxu0 0.0
    %365 = vmatpush.xpose.msra.mxu0 0.0
    %366 = vmatpush.xpose.msra.mxu0 0.0
    %367 = vmatpush.xpose.msra.mxu0 0.0
    %368 = vmatpush.xpose.msra.mxu0 0.0
    %369 = vmatpush.xpose.msra.mxu0 0.0
    %370 = vmatpush.xpose.msra.mxu0 0.0
    %371 = vmatpush.xpose.msra.mxu0 0.0
    %372 = vmatpush.xpose.msra.mxu0 0.0
    %373 = vmatpush.xpose.msra.mxu0 0.0
    %374 = vmatpush.xpose.msra.mxu0 0.0
    %375 = vmatpush.xpose.msra.mxu0 %v358
    %376 = vmatmul.f32.gmra.mxu0 %v356
    %v377 = vpop.f32.mrf.mxu0
    %v378 = vadd.f32 0.0, %v377
    %379 = vdwg.mxu0
    %381 = vrot.lane.b32.xlu0 %v180, 96
    %v382 = vpop.permute.xlu0 %381
    %v383 = vsel %vm193, %v180, 0
    %v385 = vsel %vm193, %v382, 0
    %387 = vmatpush.xpose.msra.mxu0 0.0
    %388 = vmatpush.xpose.msra.mxu0 0.0
    %389 = vmatpush.xpose.msra.mxu0 0.0
    %390 = vmatpush.xpose.msra.mxu0 0.0
    %391 = vmatpush.xpose.msra.mxu0 0.0
    %392 = vmatpush.xpose.msra.mxu0 0.0
    %393 = vmatpush.xpose.msra.mxu0 0.0
    %394 = vmatpush.xpose.msra.mxu0 0.0
    %395 = vmatpush.xpose.msra.mxu0 0.0
    %396 = vmatpush.xpose.msra.mxu0 0.0
    %397 = vmatpush.xpose.msra.mxu0 0.0
    %398 = vmatpush.xpose.msra.mxu0 0.0
    %399 = vmatpush.xpose.msra.mxu0 0.0
    %400 = vmatpush.xpose.msra.mxu0 0.0
    %401 = vmatpush.xpose.msra.mxu0 0.0
    %402 = vmatpush.xpose.msra.mxu0 %v385
    %403 = vmatmul.f32.gmra.mxu0 %v383
    %v404 = vpop.f32.mrf.mxu0
    %v405 = vadd.f32 0.0, %v404
    %406 = vdwg.mxu0
    %v407 = vmul.f32 %v216, 0.35355338
    %v408 = vmul.f32 %v243, 0.35355338
    %v409 = vmul.f32 %v270, 0.35355338
    %v410 = vmul.f32 %v297, 0.35355338
    %v411 = vmul.f32 %v324, 0.35355338
    %v412 = vmul.f32 %v351, 0.35355338
    %v413 = vmul.f32 %v378, 0.35355338
    %v414 = vmul.f32 %v405, 0.35355338
    %v415 = vmul.f32 %v407, 1.442695
    %v416 = vpow.pop %v415
    %v417 = vmul.f32 %v408, 1.442695
    %v418 = vpow.pop %v417
    %v419 = vmul.f32 %v409, 1.442695
    %v420 = vpow.pop %v419
    %v421 = vmul.f32 %v410, 1.442695
    %v422 = vpow.pop %v421
    %v423 = vmul.f32 %v411, 1.442695
    %v424 = vpow.pop %v423
    %v425 = vmul.f32 %v412, 1.442695
    %v426 = vpow.pop %v425
    %v427 = vmul.f32 %v413, 1.442695
    %v428 = vpow.pop %v427
    %v429 = vmul.f32 %v414, 1.442695
    %v430 = vpow.pop %v429
    %v431 = vperm.slane %v99, 0
    %v432 = vperm.slane %v183, 0
    %v433 = vperm.slane %v184, 0
    %v434 = vperm.slane %v185, 0
    %v435 = vperm.slane %v186, 0
    %v436 = vperm.slane %v187, 0
    %v437 = vperm.slane %v188, 0
    %v438 = vperm.slane %v189, 0
    %v447 = vmul.f32 %v416, %v431
    %v448 = vmul.f32 %v418, %v432
    %v449 = vmul.f32 %v420, %v433
    %v450 = vmul.f32 %v422, %v434
    %v451 = vmul.f32 %v424, %v435
    %v452 = vmul.f32 %v426, %v436
    %v453 = vmul.f32 %v428, %v437
    %v454 = vmul.f32 %v430, %v438
    %v455 = vsel %vm193, %v447, 0.0
    %456 = vadd.xlane.f32.xlu0 %v455
    %v457 = vpop.xlane.xlu0 %456
    %v458 = vsel %vm193, %v448, 0.0
    %459 = vadd.xlane.f32.xlu0 %v458
    %v460 = vpop.xlane.xlu0 %459
    %v461 = vsel %vm193, %v449, 0.0
    %462 = vadd.xlane.f32.xlu0 %v461
    %v463 = vpop.xlane.xlu0 %462
    %v464 = vsel %vm193, %v450, 0.0
    %465 = vadd.xlane.f32.xlu0 %v464
    %v466 = vpop.xlane.xlu0 %465
    %v467 = vsel %vm193, %v451, 0.0
    %468 = vadd.xlane.f32.xlu0 %v467
    %v469 = vpop.xlane.xlu0 %468
    %v470 = vsel %vm193, %v452, 0.0
    %471 = vadd.xlane.f32.xlu0 %v470
    %v472 = vpop.xlane.xlu0 %471
    %v473 = vsel %vm193, %v453, 0.0
    %474 = vadd.xlane.f32.xlu0 %v473
    %v475 = vpop.xlane.xlu0 %474
    %v476 = vsel %vm193, %v454, 0.0
    %477 = vadd.xlane.f32.xlu0 %v476
    %v478 = vpop.xlane.xlu0 %477
    %v479 = vadd.f32 %v457, 1e-08
    %v480 = vadd.f32 %v460, 1e-08
    %v481 = vadd.f32 %v463, 1e-08
    %v482 = vadd.f32 %v466, 1e-08
    %v483 = vadd.f32 %v469, 1e-08
    %v484 = vadd.f32 %v472, 1e-08
    %v485 = vadd.f32 %v475, 1e-08
    %v486 = vadd.f32 %v478, 1e-08
    %v487 = vrcp.pop %v479
    %v488 = vrcp.pop %v480
    %v489 = vrcp.pop %v481
    %v490 = vrcp.pop %v482
    %v491 = vrcp.pop %v483
    %v492 = vrcp.pop %v484
    %v493 = vrcp.pop %v485
    %v494 = vrcp.pop %v486
    %v495 = vmul.f32 %v447, %v487
    %v496 = vmul.f32 %v448, %v488
    %v497 = vmul.f32 %v449, %v489
    %v498 = vmul.f32 %v450, %v490
    %v499 = vmul.f32 %v451, %v491
    %v500 = vmul.f32 %v452, %v492
    %v501 = vmul.f32 %v453, %v493
    %v502 = vmul.f32 %v454, %v494
    %503 = vrot.lane.b32.xlu0 %v159, 64
    %v504 = vpop.permute.xlu0 %503
    %v507 = vsel %vm193, %v495, 0
    %509 = vmatpush.msra.mxu0 0.0
    %510 = vmatpush.msra.mxu0 0.0
    %511 = vmatpush.msra.mxu0 0.0
    %512 = vmatpush.msra.mxu0 0.0
    %513 = vmatpush.msra.mxu0 0.0
    %514 = vmatpush.msra.mxu0 0.0
    %515 = vmatpush.msra.mxu0 0.0
    %516 = vmatpush.msra.mxu0 0.0
    %517 = vmatpush.msra.mxu0 0.0
    %518 = vmatpush.msra.mxu0 0.0
    %519 = vmatpush.msra.mxu0 0.0
    %520 = vmatpush.msra.mxu0 0.0
    %521 = vmatpush.msra.mxu0 0.0
    %522 = vmatpush.msra.mxu0 0.0
    %523 = vmatpush.msra.mxu0 0.0
    %524 = vmatpush.msra.mxu0 %v504
    %525 = vmatmul.f32.gmra.mxu0 %v507
    %v526 = vpop.f32.mrf.mxu0
    %v527 = vadd.f32 0.0, %v526
    %528 = vdwg.mxu0
    %529 = vrot.lane.b32.xlu0 %v162, 64
    %v530 = vpop.permute.xlu0 %529
    %v533 = vsel %vm193, %v496, 0
    %535 = vmatpush.msra.mxu0 0.0
    %536 = vmatpush.msra.mxu0 0.0
    %537 = vmatpush.msra.mxu0 0.0
    %538 = vmatpush.msra.mxu0 0.0
    %539 = vmatpush.msra.mxu0 0.0
    %540 = vmatpush.msra.mxu0 0.0
    %541 = vmatpush.msra.mxu0 0.0
    %542 = vmatpush.msra.mxu0 0.0
    %543 = vmatpush.msra.mxu0 0.0
    %544 = vmatpush.msra.mxu0 0.0
    %545 = vmatpush.msra.mxu0 0.0
    %546 = vmatpush.msra.mxu0 0.0
    %547 = vmatpush.msra.mxu0 0.0
    %548 = vmatpush.msra.mxu0 0.0
    %549 = vmatpush.msra.mxu0 0.0
    %550 = vmatpush.msra.mxu0 %v530
    %551 = vmatmul.f32.gmra.mxu0 %v533
    %v552 = vpop.f32.mrf.mxu0
    %v553 = vadd.f32 0.0, %v552
    %554 = vdwg.mxu0
    %555 = vrot.lane.b32.xlu0 %v165, 64
    %v556 = vpop.permute.xlu0 %555
    %v559 = vsel %vm193, %v497, 0
    %561 = vmatpush.msra.mxu0 0.0
    %562 = vmatpush.msra.mxu0 0.0
    %563 = vmatpush.msra.mxu0 0.0
    %564 = vmatpush.msra.mxu0 0.0
    %565 = vmatpush.msra.mxu0 0.0
    %566 = vmatpush.msra.mxu0 0.0
    %567 = vmatpush.msra.mxu0 0.0
    %568 = vmatpush.msra.mxu0 0.0
    %569 = vmatpush.msra.mxu0 0.0
    %570 = vmatpush.msra.mxu0 0.0
    %571 = vmatpush.msra.mxu0 0.0
    %572 = vmatpush.msra.mxu0 0.0
    %573 = vmatpush.msra.mxu0 0.0
    %574 = vmatpush.msra.mxu0 0.0
    %575 = vmatpush.msra.mxu0 0.0
    %576 = vmatpush.msra.mxu0 %v556
    %577 = vmatmul.f32.gmra.mxu0 %v559
    %v578 = vpop.f32.mrf.mxu0
    %v579 = vadd.f32 0.0, %v578
    %580 = vdwg.mxu0
    %581 = vrot.lane.b32.xlu0 %v168, 64
    %v582 = vpop.permute.xlu0 %581
    %v585 = vsel %vm193, %v498, 0
    %587 = vmatpush.msra.mxu0 0.0
    %588 = vmatpush.msra.mxu0 0.0
    %589 = vmatpush.msra.mxu0 0.0
    %590 = vmatpush.msra.mxu0 0.0
    %591 = vmatpush.msra.mxu0 0.0
    %592 = vmatpush.msra.mxu0 0.0
    %593 = vmatpush.msra.mxu0 0.0
    %594 = vmatpush.msra.mxu0 0.0
    %595 = vmatpush.msra.mxu0 0.0
    %596 = vmatpush.msra.mxu0 0.0
    %597 = vmatpush.msra.mxu0 0.0
    %598 = vmatpush.msra.mxu0 0.0
    %599 = vmatpush.msra.mxu0 0.0
    %600 = vmatpush.msra.mxu0 0.0
    %601 = vmatpush.msra.mxu0 0.0
    %602 = vmatpush.msra.mxu0 %v582
    %603 = vmatmul.f32.gmra.mxu0 %v585
    %v604 = vpop.f32.mrf.mxu0
    %v605 = vadd.f32 0.0, %v604
    %606 = vdwg.mxu0
    %607 = vrot.lane.b32.xlu0 %v171, 64
    %v608 = vpop.permute.xlu0 %607
    %v611 = vsel %vm193, %v499, 0
    %613 = vmatpush.msra.mxu0 0.0
    %614 = vmatpush.msra.mxu0 0.0
    %615 = vmatpush.msra.mxu0 0.0
    %616 = vmatpush.msra.mxu0 0.0
    %617 = vmatpush.msra.mxu0 0.0
    %618 = vmatpush.msra.mxu0 0.0
    %619 = vmatpush.msra.mxu0 0.0
    %620 = vmatpush.msra.mxu0 0.0
    %621 = vmatpush.msra.mxu0 0.0
    %622 = vmatpush.msra.mxu0 0.0
    %623 = vmatpush.msra.mxu0 0.0
    %624 = vmatpush.msra.mxu0 0.0
    %625 = vmatpush.msra.mxu0 0.0
    %626 = vmatpush.msra.mxu0 0.0
    %627 = vmatpush.msra.mxu0 0.0
    %628 = vmatpush.msra.mxu0 %v608
    %629 = vmatmul.f32.gmra.mxu0 %v611
    %v630 = vpop.f32.mrf.mxu0
    %v631 = vadd.f32 0.0, %v630
    %632 = vdwg.mxu0
    %633 = vrot.lane.b32.xlu0 %v174, 64
    %v634 = vpop.permute.xlu0 %633
    %v637 = vsel %vm193, %v500, 0
    %639 = vmatpush.msra.mxu0 0.0
    %640 = vmatpush.msra.mxu0 0.0
    %641 = vmatpush.msra.mxu0 0.0
    %642 = vmatpush.msra.mxu0 0.0
    %643 = vmatpush.msra.mxu0 0.0
    %644 = vmatpush.msra.mxu0 0.0
    %645 = vmatpush.msra.mxu0 0.0
    %646 = vmatpush.msra.mxu0 0.0
    %647 = vmatpush.msra.mxu0 0.0
    %648 = vmatpush.msra.mxu0 0.0
    %649 = vmatpush.msra.mxu0 0.0
    %650 = vmatpush.msra.mxu0 0.0
    %651 = vmatpush.msra.mxu0 0.0
    %652 = vmatpush.msra.mxu0 0.0
    %653 = vmatpush.msra.mxu0 0.0
    %654 = vmatpush.msra.mxu0 %v634
    %655 = vmatmul.f32.gmra.mxu0 %v637
    %v656 = vpop.f32.mrf.mxu0
    %v657 = vadd.f32 0.0, %v656
    %658 = vdwg.mxu0
    %659 = vrot.lane.b32.xlu0 %v177, 64
    %v660 = vpop.permute.xlu0 %659
    %v663 = vsel %vm193, %v501, 0
    %665 = vmatpush.msra.mxu0 0.0
    %666 = vmatpush.msra.mxu0 0.0
    %667 = vmatpush.msra.mxu0 0.0
    %668 = vmatpush.msra.mxu0 0.0
    %669 = vmatpush.msra.mxu0 0.0
    %670 = vmatpush.msra.mxu0 0.0
    %671 = vmatpush.msra.mxu0 0.0
    %672 = vmatpush.msra.mxu0 0.0
    %673 = vmatpush.msra.mxu0 0.0
    %674 = vmatpush.msra.mxu0 0.0
    %675 = vmatpush.msra.mxu0 0.0
    %676 = vmatpush.msra.mxu0 0.0
    %677 = vmatpush.msra.mxu0 0.0
    %678 = vmatpush.msra.mxu0 0.0
    %679 = vmatpush.msra.mxu0 0.0
    %680 = vmatpush.msra.mxu0 %v660
    %681 = vmatmul.f32.gmra.mxu0 %v663
    %v682 = vpop.f32.mrf.mxu0
    %v683 = vadd.f32 0.0, %v682
    %684 = vdwg.mxu0
    %685 = vrot.lane.b32.xlu0 %v180, 64
    %v686 = vpop.permute.xlu0 %685
    %v689 = vsel %vm193, %v502, 0
    %691 = vmatpush.msra.mxu0 0.0
    %692 = vmatpush.msra.mxu0 0.0
    %693 = vmatpush.msra.mxu0 0.0
    %694 = vmatpush.msra.mxu0 0.0
    %695 = vmatpush.msra.mxu0 0.0
    %696 = vmatpush.msra.mxu0 0.0
    %697 = vmatpush.msra.mxu0 0.0
    %698 = vmatpush.msra.mxu0 0.0
    %699 = vmatpush.msra.mxu0 0.0
    %700 = vmatpush.msra.mxu0 0.0
    %701 = vmatpush.msra.mxu0 0.0
    %702 = vmatpush.msra.mxu0 0.0
    %703 = vmatpush.msra.mxu0 0.0
    %704 = vmatpush.msra.mxu0 0.0
    %705 = vmatpush.msra.mxu0 0.0
    %706 = vmatpush.msra.mxu0 %v686
    %707 = vmatmul.f32.gmra.mxu0 %v689
    %v708 = vpop.f32.mrf.mxu0
    %v709 = vadd.f32 0.0, %v708
    %710 = vdwg.mxu0
    %711 = vrot.lane.b32.xlu0 %v159, 120
    %v712 = vpop.permute.xlu0 %711
    %713 = vrot.lane.b32.xlu0 %v159, 88
    %v714 = vpop.permute.xlu0 %713
    %v715 = vsel %vm193, %v712, 0
    %v717 = vsel %vm193, %v714, 0
    %719 = vmatpush.xpose.msra.mxu0 0.0
    %720 = vmatpush.xpose.msra.mxu0 0.0
    %721 = vmatpush.xpose.msra.mxu0 0.0
    %722 = vmatpush.xpose.msra.mxu0 0.0
    %723 = vmatpush.xpose.msra.mxu0 0.0
    %724 = vmatpush.xpose.msra.mxu0 0.0
    %725 = vmatpush.xpose.msra.mxu0 0.0
    %726 = vmatpush.xpose.msra.mxu0 0.0
    %727 = vmatpush.xpose.msra.mxu0 0.0
    %728 = vmatpush.xpose.msra.mxu0 0.0
    %729 = vmatpush.xpose.msra.mxu0 0.0
    %730 = vmatpush.xpose.msra.mxu0 0.0
    %731 = vmatpush.xpose.msra.mxu0 0.0
    %732 = vmatpush.xpose.msra.mxu0 0.0
    %733 = vmatpush.xpose.msra.mxu0 0.0
    %734 = vmatpush.xpose.msra.mxu0 %v717
    %735 = vmatmul.f32.gmra.mxu0 %v715
    %v736 = vpop.f32.mrf.mxu0
    %v737 = vadd.f32 0.0, %v736
    %738 = vdwg.mxu0
    %739 = vrot.lane.b32.xlu0 %v162, 120
    %v740 = vpop.permute.xlu0 %739
    %741 = vrot.lane.b32.xlu0 %v162, 88
    %v742 = vpop.permute.xlu0 %741
    %v743 = vsel %vm193, %v740, 0
    %v745 = vsel %vm193, %v742, 0
    %747 = vmatpush.xpose.msra.mxu0 0.0
    %748 = vmatpush.xpose.msra.mxu0 0.0
    %749 = vmatpush.xpose.msra.mxu0 0.0
    %750 = vmatpush.xpose.msra.mxu0 0.0
    %751 = vmatpush.xpose.msra.mxu0 0.0
    %752 = vmatpush.xpose.msra.mxu0 0.0
    %753 = vmatpush.xpose.msra.mxu0 0.0
    %754 = vmatpush.xpose.msra.mxu0 0.0
    %755 = vmatpush.xpose.msra.mxu0 0.0
    %756 = vmatpush.xpose.msra.mxu0 0.0
    %757 = vmatpush.xpose.msra.mxu0 0.0
    %758 = vmatpush.xpose.msra.mxu0 0.0
    %759 = vmatpush.xpose.msra.mxu0 0.0
    %760 = vmatpush.xpose.msra.mxu0 0.0
    %761 = vmatpush.xpose.msra.mxu0 0.0
    %762 = vmatpush.xpose.msra.mxu0 %v745
    %763 = vmatmul.f32.gmra.mxu0 %v743
    %v764 = vpop.f32.mrf.mxu0
    %v765 = vadd.f32 0.0, %v764
    %766 = vdwg.mxu0
    %767 = vrot.lane.b32.xlu0 %v165, 120
    %v768 = vpop.permute.xlu0 %767
    %769 = vrot.lane.b32.xlu0 %v165, 88
    %v770 = vpop.permute.xlu0 %769
    %v771 = vsel %vm193, %v768, 0
    %v773 = vsel %vm193, %v770, 0
    %775 = vmatpush.xpose.msra.mxu0 0.0
    %776 = vmatpush.xpose.msra.mxu0 0.0
    %777 = vmatpush.xpose.msra.mxu0 0.0
    %778 = vmatpush.xpose.msra.mxu0 0.0
    %779 = vmatpush.xpose.msra.mxu0 0.0
    %780 = vmatpush.xpose.msra.mxu0 0.0
    %781 = vmatpush.xpose.msra.mxu0 0.0
    %782 = vmatpush.xpose.msra.mxu0 0.0
    %783 = vmatpush.xpose.msra.mxu0 0.0
    %784 = vmatpush.xpose.msra.mxu0 0.0
    %785 = vmatpush.xpose.msra.mxu0 0.0
    %786 = vmatpush.xpose.msra.mxu0 0.0
    %787 = vmatpush.xpose.msra.mxu0 0.0
    %788 = vmatpush.xpose.msra.mxu0 0.0
    %789 = vmatpush.xpose.msra.mxu0 0.0
    %790 = vmatpush.xpose.msra.mxu0 %v773
    %791 = vmatmul.f32.gmra.mxu0 %v771
    %v792 = vpop.f32.mrf.mxu0
    %v793 = vadd.f32 0.0, %v792
    %794 = vdwg.mxu0
    %795 = vrot.lane.b32.xlu0 %v168, 120
    %v796 = vpop.permute.xlu0 %795
    %797 = vrot.lane.b32.xlu0 %v168, 88
    %v798 = vpop.permute.xlu0 %797
    %v799 = vsel %vm193, %v796, 0
    %v801 = vsel %vm193, %v798, 0
    %803 = vmatpush.xpose.msra.mxu0 0.0
    %804 = vmatpush.xpose.msra.mxu0 0.0
    %805 = vmatpush.xpose.msra.mxu0 0.0
    %806 = vmatpush.xpose.msra.mxu0 0.0
    %807 = vmatpush.xpose.msra.mxu0 0.0
    %808 = vmatpush.xpose.msra.mxu0 0.0
    %809 = vmatpush.xpose.msra.mxu0 0.0
    %810 = vmatpush.xpose.msra.mxu0 0.0
    %811 = vmatpush.xpose.msra.mxu0 0.0
    %812 = vmatpush.xpose.msra.mxu0 0.0
    %813 = vmatpush.xpose.msra.mxu0 0.0
    %814 = vmatpush.xpose.msra.mxu0 0.0
    %815 = vmatpush.xpose.msra.mxu0 0.0
    %816 = vmatpush.xpose.msra.mxu0 0.0
    %817 = vmatpush.xpose.msra.mxu0 0.0
    %818 = vmatpush.xpose.msra.mxu0 %v801
    %819 = vmatmul.f32.gmra.mxu0 %v799
    %v820 = vpop.f32.mrf.mxu0
    %v821 = vadd.f32 0.0, %v820
    %822 = vdwg.mxu0
    %823 = vrot.lane.b32.xlu0 %v171, 120
    %v824 = vpop.permute.xlu0 %823
    %825 = vrot.lane.b32.xlu0 %v171, 88
    %v826 = vpop.permute.xlu0 %825
    %v827 = vsel %vm193, %v824, 0
    %v829 = vsel %vm193, %v826, 0
    %831 = vmatpush.xpose.msra.mxu0 0.0
    %832 = vmatpush.xpose.msra.mxu0 0.0
    %833 = vmatpush.xpose.msra.mxu0 0.0
    %834 = vmatpush.xpose.msra.mxu0 0.0
    %835 = vmatpush.xpose.msra.mxu0 0.0
    %836 = vmatpush.xpose.msra.mxu0 0.0
    %837 = vmatpush.xpose.msra.mxu0 0.0
    %838 = vmatpush.xpose.msra.mxu0 0.0
    %839 = vmatpush.xpose.msra.mxu0 0.0
    %840 = vmatpush.xpose.msra.mxu0 0.0
    %841 = vmatpush.xpose.msra.mxu0 0.0
    %842 = vmatpush.xpose.msra.mxu0 0.0
    %843 = vmatpush.xpose.msra.mxu0 0.0
    %844 = vmatpush.xpose.msra.mxu0 0.0
    %845 = vmatpush.xpose.msra.mxu0 0.0
    %846 = vmatpush.xpose.msra.mxu0 %v829
    %847 = vmatmul.f32.gmra.mxu0 %v827
    %v848 = vpop.f32.mrf.mxu0
    %v849 = vadd.f32 0.0, %v848
    %850 = vdwg.mxu0
    %851 = vrot.lane.b32.xlu0 %v174, 120
    %v852 = vpop.permute.xlu0 %851
    %853 = vrot.lane.b32.xlu0 %v174, 88
    %v854 = vpop.permute.xlu0 %853
    %v855 = vsel %vm193, %v852, 0
    %v857 = vsel %vm193, %v854, 0
    %859 = vmatpush.xpose.msra.mxu0 0.0
    %860 = vmatpush.xpose.msra.mxu0 0.0
    %861 = vmatpush.xpose.msra.mxu0 0.0
    %862 = vmatpush.xpose.msra.mxu0 0.0
    %863 = vmatpush.xpose.msra.mxu0 0.0
    %864 = vmatpush.xpose.msra.mxu0 0.0
    %865 = vmatpush.xpose.msra.mxu0 0.0
    %866 = vmatpush.xpose.msra.mxu0 0.0
    %867 = vmatpush.xpose.msra.mxu0 0.0
    %868 = vmatpush.xpose.msra.mxu0 0.0
    %869 = vmatpush.xpose.msra.mxu0 0.0
    %870 = vmatpush.xpose.msra.mxu0 0.0
    %871 = vmatpush.xpose.msra.mxu0 0.0
    %872 = vmatpush.xpose.msra.mxu0 0.0
    %873 = vmatpush.xpose.msra.mxu0 0.0
    %874 = vmatpush.xpose.msra.mxu0 %v857
    %875 = vmatmul.f32.gmra.mxu0 %v855
    %v876 = vpop.f32.mrf.mxu0
    %v877 = vadd.f32 0.0, %v876
    %878 = vdwg.mxu0
    %879 = vrot.lane.b32.xlu0 %v177, 120
    %v880 = vpop.permute.xlu0 %879
    %881 = vrot.lane.b32.xlu0 %v177, 88
    %v882 = vpop.permute.xlu0 %881
    %v883 = vsel %vm193, %v880, 0
    %v885 = vsel %vm193, %v882, 0
    %887 = vmatpush.xpose.msra.mxu0 0.0
    %888 = vmatpush.xpose.msra.mxu0 0.0
    %889 = vmatpush.xpose.msra.mxu0 0.0
    %890 = vmatpush.xpose.msra.mxu0 0.0
    %891 = vmatpush.xpose.msra.mxu0 0.0
    %892 = vmatpush.xpose.msra.mxu0 0.0
    %893 = vmatpush.xpose.msra.mxu0 0.0
    %894 = vmatpush.xpose.msra.mxu0 0.0
    %895 = vmatpush.xpose.msra.mxu0 0.0
    %896 = vmatpush.xpose.msra.mxu0 0.0
    %897 = vmatpush.xpose.msra.mxu0 0.0
    %898 = vmatpush.xpose.msra.mxu0 0.0
    %899 = vmatpush.xpose.msra.mxu0 0.0
    %900 = vmatpush.xpose.msra.mxu0 0.0
    %901 = vmatpush.xpose.msra.mxu0 0.0
    %902 = vmatpush.xpose.msra.mxu0 %v885
    %903 = vmatmul.f32.gmra.mxu0 %v883
    %v904 = vpop.f32.mrf.mxu0
    %v905 = vadd.f32 0.0, %v904
    %906 = vdwg.mxu0
    %907 = vrot.lane.b32.xlu0 %v180, 120
    %v908 = vpop.permute.xlu0 %907
    %909 = vrot.lane.b32.xlu0 %v180, 88
    %v910 = vpop.permute.xlu0 %909
    %v911 = vsel %vm193, %v908, 0
    %v913 = vsel %vm193, %v910, 0
    %915 = vmatpush.xpose.msra.mxu0 0.0
    %916 = vmatpush.xpose.msra.mxu0 0.0
    %917 = vmatpush.xpose.msra.mxu0 0.0
    %918 = vmatpush.xpose.msra.mxu0 0.0
    %919 = vmatpush.xpose.msra.mxu0 0.0
    %920 = vmatpush.xpose.msra.mxu0 0.0
    %921 = vmatpush.xpose.msra.mxu0 0.0
    %922 = vmatpush.xpose.msra.mxu0 0.0
    %923 = vmatpush.xpose.msra.mxu0 0.0
    %924 = vmatpush.xpose.msra.mxu0 0.0
    %925 = vmatpush.xpose.msra.mxu0 0.0
    %926 = vmatpush.xpose.msra.mxu0 0.0
    %927 = vmatpush.xpose.msra.mxu0 0.0
    %928 = vmatpush.xpose.msra.mxu0 0.0
    %929 = vmatpush.xpose.msra.mxu0 0.0
    %930 = vmatpush.xpose.msra.mxu0 %v913
    %931 = vmatmul.f32.gmra.mxu0 %v911
    %v932 = vpop.f32.mrf.mxu0
    %v933 = vadd.f32 0.0, %v932
    %934 = vdwg.mxu0
    %v935 = vmul.f32 %v737, 0.35355338
    %v936 = vmul.f32 %v765, 0.35355338
    %v937 = vmul.f32 %v793, 0.35355338
    %v938 = vmul.f32 %v821, 0.35355338
    %v939 = vmul.f32 %v849, 0.35355338
    %v940 = vmul.f32 %v877, 0.35355338
    %v941 = vmul.f32 %v905, 0.35355338
    %v942 = vmul.f32 %v933, 0.35355338
    %v943 = vmul.f32 %v935, 1.442695
    %v944 = vpow.pop %v943
    %v945 = vmul.f32 %v936, 1.442695
    %v946 = vpow.pop %v945
    %v947 = vmul.f32 %v937, 1.442695
    %v948 = vpow.pop %v947
    %v949 = vmul.f32 %v938, 1.442695
    %v950 = vpow.pop %v949
    %v951 = vmul.f32 %v939, 1.442695
    %v952 = vpow.pop %v951
    %v953 = vmul.f32 %v940, 1.442695
    %v954 = vpow.pop %v953
    %v955 = vmul.f32 %v941, 1.442695
    %v956 = vpow.pop %v955
    %v957 = vmul.f32 %v942, 1.442695
    %v958 = vpow.pop %v957
    %v959 = vmul.f32 %v944, %v431
    %v960 = vmul.f32 %v946, %v432
    %v961 = vmul.f32 %v948, %v433
    %v962 = vmul.f32 %v950, %v434
    %v963 = vmul.f32 %v952, %v435
    %v964 = vmul.f32 %v954, %v436
    %v965 = vmul.f32 %v956, %v437
    %v966 = vmul.f32 %v958, %v438
    %v967 = vsel %vm193, %v959, 0.0
    %968 = vadd.xlane.f32.xlu0 %v967
    %v969 = vpop.xlane.xlu0 %968
    %v970 = vsel %vm193, %v960, 0.0
    %971 = vadd.xlane.f32.xlu0 %v970
    %v972 = vpop.xlane.xlu0 %971
    %v973 = vsel %vm193, %v961, 0.0
    %974 = vadd.xlane.f32.xlu0 %v973
    %v975 = vpop.xlane.xlu0 %974
    %v976 = vsel %vm193, %v962, 0.0
    %977 = vadd.xlane.f32.xlu0 %v976
    %v978 = vpop.xlane.xlu0 %977
    %v979 = vsel %vm193, %v963, 0.0
    %980 = vadd.xlane.f32.xlu0 %v979
    %v981 = vpop.xlane.xlu0 %980
    %v982 = vsel %vm193, %v964, 0.0
    %983 = vadd.xlane.f32.xlu0 %v982
    %v984 = vpop.xlane.xlu0 %983
    %v985 = vsel %vm193, %v965, 0.0
    %986 = vadd.xlane.f32.xlu0 %v985
    %v987 = vpop.xlane.xlu0 %986
    %v988 = vsel %vm193, %v966, 0.0
    %989 = vadd.xlane.f32.xlu0 %v988
    %v990 = vpop.xlane.xlu0 %989
    %v991 = vadd.f32 %v969, 1e-08
    %v992 = vadd.f32 %v972, 1e-08
    %v993 = vadd.f32 %v975, 1e-08
    %v994 = vadd.f32 %v978, 1e-08
    %v995 = vadd.f32 %v981, 1e-08
    %v996 = vadd.f32 %v984, 1e-08
    %v997 = vadd.f32 %v987, 1e-08
    %v998 = vadd.f32 %v990, 1e-08
    %v999 = vrcp.pop %v991
    %v1000 = vrcp.pop %v992
    %v1001 = vrcp.pop %v993
    %v1002 = vrcp.pop %v994
    %v1003 = vrcp.pop %v995
    %v1004 = vrcp.pop %v996
    %v1005 = vrcp.pop %v997
    %v1006 = vrcp.pop %v998
    %v1007 = vmul.f32 %v959, %v999
    %v1008 = vmul.f32 %v960, %v1000
    %v1009 = vmul.f32 %v961, %v1001
    %v1010 = vmul.f32 %v962, %v1002
    %v1011 = vmul.f32 %v963, %v1003
    %v1012 = vmul.f32 %v964, %v1004
    %v1013 = vmul.f32 %v965, %v1005
    %v1014 = vmul.f32 %v966, %v1006
    %1015 = vrot.lane.b32.xlu0 %v159, 56
    %v1016 = vpop.permute.xlu0 %1015
    %v1019 = vsel %vm193, %v1007, 0
    %1021 = vmatpush.msra.mxu0 0.0
    %1022 = vmatpush.msra.mxu0 0.0
    %1023 = vmatpush.msra.mxu0 0.0
    %1024 = vmatpush.msra.mxu0 0.0
    %1025 = vmatpush.msra.mxu0 0.0
    %1026 = vmatpush.msra.mxu0 0.0
    %1027 = vmatpush.msra.mxu0 0.0
    %1028 = vmatpush.msra.mxu0 0.0
    %1029 = vmatpush.msra.mxu0 0.0
    %1030 = vmatpush.msra.mxu0 0.0
    %1031 = vmatpush.msra.mxu0 0.0
    %1032 = vmatpush.msra.mxu0 0.0
    %1033 = vmatpush.msra.mxu0 0.0
    %1034 = vmatpush.msra.mxu0 0.0
    %1035 = vmatpush.msra.mxu0 0.0
    %1036 = vmatpush.msra.mxu0 %v1016
    %1037 = vmatmul.f32.gmra.mxu0 %v1019
    %v1038 = vpop.f32.mrf.mxu0
    %v1039 = vadd.f32 0.0, %v1038
    %1040 = vdwg.mxu0
    %1041 = vrot.lane.b32.xlu0 %v162, 56
    %v1042 = vpop.permute.xlu0 %1041
    %v1045 = vsel %vm193, %v1008, 0
    %1047 = vmatpush.msra.mxu0 0.0
    %1048 = vmatpush.msra.mxu0 0.0
    %1049 = vmatpush.msra.mxu0 0.0
    %1050 = vmatpush.msra.mxu0 0.0
    %1051 = vmatpush.msra.mxu0 0.0
    %1052 = vmatpush.msra.mxu0 0.0
    %1053 = vmatpush.msra.mxu0 0.0
    %1054 = vmatpush.msra.mxu0 0.0
    %1055 = vmatpush.msra.mxu0 0.0
    %1056 = vmatpush.msra.mxu0 0.0
    %1057 = vmatpush.msra.mxu0 0.0
    %1058 = vmatpush.msra.mxu0 0.0
    %1059 = vmatpush.msra.mxu0 0.0
    %1060 = vmatpush.msra.mxu0 0.0
    %1061 = vmatpush.msra.mxu0 0.0
    %1062 = vmatpush.msra.mxu0 %v1042
    %1063 = vmatmul.f32.gmra.mxu0 %v1045
    %v1064 = vpop.f32.mrf.mxu0
    %v1065 = vadd.f32 0.0, %v1064
    %1066 = vdwg.mxu0
    %1067 = vrot.lane.b32.xlu0 %v165, 56
    %v1068 = vpop.permute.xlu0 %1067
    %v1071 = vsel %vm193, %v1009, 0
    %1073 = vmatpush.msra.mxu0 0.0
    %1074 = vmatpush.msra.mxu0 0.0
    %1075 = vmatpush.msra.mxu0 0.0
    %1076 = vmatpush.msra.mxu0 0.0
    %1077 = vmatpush.msra.mxu0 0.0
    %1078 = vmatpush.msra.mxu0 0.0
    %1079 = vmatpush.msra.mxu0 0.0
    %1080 = vmatpush.msra.mxu0 0.0
    %1081 = vmatpush.msra.mxu0 0.0
    %1082 = vmatpush.msra.mxu0 0.0
    %1083 = vmatpush.msra.mxu0 0.0
    %1084 = vmatpush.msra.mxu0 0.0
    %1085 = vmatpush.msra.mxu0 0.0
    %1086 = vmatpush.msra.mxu0 0.0
    %1087 = vmatpush.msra.mxu0 0.0
    %1088 = vmatpush.msra.mxu0 %v1068
    %1089 = vmatmul.f32.gmra.mxu0 %v1071
    %v1090 = vpop.f32.mrf.mxu0
    %v1091 = vadd.f32 0.0, %v1090
    %1092 = vdwg.mxu0
    %1093 = vrot.lane.b32.xlu0 %v168, 56
    %v1094 = vpop.permute.xlu0 %1093
    %v1097 = vsel %vm193, %v1010, 0
    %1099 = vmatpush.msra.mxu0 0.0
    %1100 = vmatpush.msra.mxu0 0.0
    %1101 = vmatpush.msra.mxu0 0.0
    %1102 = vmatpush.msra.mxu0 0.0
    %1103 = vmatpush.msra.mxu0 0.0
    %1104 = vmatpush.msra.mxu0 0.0
    %1105 = vmatpush.msra.mxu0 0.0
    %1106 = vmatpush.msra.mxu0 0.0
    %1107 = vmatpush.msra.mxu0 0.0
    %1108 = vmatpush.msra.mxu0 0.0
    %1109 = vmatpush.msra.mxu0 0.0
    %1110 = vmatpush.msra.mxu0 0.0
    %1111 = vmatpush.msra.mxu0 0.0
    %1112 = vmatpush.msra.mxu0 0.0
    %1113 = vmatpush.msra.mxu0 0.0
    %1114 = vmatpush.msra.mxu0 %v1094
    %1115 = vmatmul.f32.gmra.mxu0 %v1097
    %v1116 = vpop.f32.mrf.mxu0
    %v1117 = vadd.f32 0.0, %v1116
    %1118 = vdwg.mxu0
    %1119 = vrot.lane.b32.xlu0 %v171, 56
    %v1120 = vpop.permute.xlu0 %1119
    %v1123 = vsel %vm193, %v1011, 0
    %1125 = vmatpush.msra.mxu0 0.0
    %1126 = vmatpush.msra.mxu0 0.0
    %1127 = vmatpush.msra.mxu0 0.0
    %1128 = vmatpush.msra.mxu0 0.0
    %1129 = vmatpush.msra.mxu0 0.0
    %1130 = vmatpush.msra.mxu0 0.0
    %1131 = vmatpush.msra.mxu0 0.0
    %1132 = vmatpush.msra.mxu0 0.0
    %1133 = vmatpush.msra.mxu0 0.0
    %1134 = vmatpush.msra.mxu0 0.0
    %1135 = vmatpush.msra.mxu0 0.0
    %1136 = vmatpush.msra.mxu0 0.0
    %1137 = vmatpush.msra.mxu0 0.0
    %1138 = vmatpush.msra.mxu0 0.0
    %1139 = vmatpush.msra.mxu0 0.0
    %1140 = vmatpush.msra.mxu0 %v1120
    %1141 = vmatmul.f32.gmra.mxu0 %v1123
    %v1142 = vpop.f32.mrf.mxu0
    %v1143 = vadd.f32 0.0, %v1142
    %1144 = vdwg.mxu0
    %1145 = vrot.lane.b32.xlu0 %v174, 56
    %v1146 = vpop.permute.xlu0 %1145
    %v1149 = vsel %vm193, %v1012, 0
    %1151 = vmatpush.msra.mxu0 0.0
    %1152 = vmatpush.msra.mxu0 0.0
    %1153 = vmatpush.msra.mxu0 0.0
    %1154 = vmatpush.msra.mxu0 0.0
    %1155 = vmatpush.msra.mxu0 0.0
    %1156 = vmatpush.msra.mxu0 0.0
    %1157 = vmatpush.msra.mxu0 0.0
    %1158 = vmatpush.msra.mxu0 0.0
    %1159 = vmatpush.msra.mxu0 0.0
    %1160 = vmatpush.msra.mxu0 0.0
    %1161 = vmatpush.msra.mxu0 0.0
    %1162 = vmatpush.msra.mxu0 0.0
    %1163 = vmatpush.msra.mxu0 0.0
    %1164 = vmatpush.msra.mxu0 0.0
    %1165 = vmatpush.msra.mxu0 0.0
    %1166 = vmatpush.msra.mxu0 %v1146
    %1167 = vmatmul.f32.gmra.mxu0 %v1149
    %v1168 = vpop.f32.mrf.mxu0
    %v1169 = vadd.f32 0.0, %v1168
    %1170 = vdwg.mxu0
    %1171 = vrot.lane.b32.xlu0 %v177, 56
    %v1172 = vpop.permute.xlu0 %1171
    %v1175 = vsel %vm193, %v1013, 0
    %1177 = vmatpush.msra.mxu0 0.0
    %1178 = vmatpush.msra.mxu0 0.0
    %1179 = vmatpush.msra.mxu0 0.0
    %1180 = vmatpush.msra.mxu0 0.0
    %1181 = vmatpush.msra.mxu0 0.0
    %1182 = vmatpush.msra.mxu0 0.0
    %1183 = vmatpush.msra.mxu0 0.0
    %1184 = vmatpush.msra.mxu0 0.0
    %1185 = vmatpush.msra.mxu0 0.0
    %1186 = vmatpush.msra.mxu0 0.0
    %1187 = vmatpush.msra.mxu0 0.0
    %1188 = vmatpush.msra.mxu0 0.0
    %1189 = vmatpush.msra.mxu0 0.0
    %1190 = vmatpush.msra.mxu0 0.0
    %1191 = vmatpush.msra.mxu0 0.0
    %1192 = vmatpush.msra.mxu0 %v1172
    %1193 = vmatmul.f32.gmra.mxu0 %v1175
    %v1194 = vpop.f32.mrf.mxu0
    %v1195 = vadd.f32 0.0, %v1194
    %1196 = vdwg.mxu0
    %1197 = vrot.lane.b32.xlu0 %v180, 56
    %v1198 = vpop.permute.xlu0 %1197
    %v1201 = vsel %vm193, %v1014, 0
    %1203 = vmatpush.msra.mxu0 0.0
    %1204 = vmatpush.msra.mxu0 0.0
    %1205 = vmatpush.msra.mxu0 0.0
    %1206 = vmatpush.msra.mxu0 0.0
    %1207 = vmatpush.msra.mxu0 0.0
    %1208 = vmatpush.msra.mxu0 0.0
    %1209 = vmatpush.msra.mxu0 0.0
    %1210 = vmatpush.msra.mxu0 0.0
    %1211 = vmatpush.msra.mxu0 0.0
    %1212 = vmatpush.msra.mxu0 0.0
    %1213 = vmatpush.msra.mxu0 0.0
    %1214 = vmatpush.msra.mxu0 0.0
    %1215 = vmatpush.msra.mxu0 0.0
    %1216 = vmatpush.msra.mxu0 0.0
    %1217 = vmatpush.msra.mxu0 0.0
    %1218 = vmatpush.msra.mxu0 %v1198
    %1219 = vmatmul.f32.gmra.mxu0 %v1201
    %v1220 = vpop.f32.mrf.mxu0
    %v1221 = vadd.f32 0.0, %v1220
    %1222 = vdwg.mxu0
    %1223 = vrot.lane.b32.xlu0 %v159, 112
    %v1224 = vpop.permute.xlu0 %1223
    %1225 = vrot.lane.b32.xlu0 %v159, 80
    %v1226 = vpop.permute.xlu0 %1225
    %v1227 = vsel %vm193, %v1224, 0
    %v1229 = vsel %vm193, %v1226, 0
    %1231 = vmatpush.xpose.msra.mxu0 0.0
    %1232 = vmatpush.xpose.msra.mxu0 0.0
    %1233 = vmatpush.xpose.msra.mxu0 0.0
    %1234 = vmatpush.xpose.msra.mxu0 0.0
    %1235 = vmatpush.xpose.msra.mxu0 0.0
    %1236 = vmatpush.xpose.msra.mxu0 0.0
    %1237 = vmatpush.xpose.msra.mxu0 0.0
    %1238 = vmatpush.xpose.msra.mxu0 0.0
    %1239 = vmatpush.xpose.msra.mxu0 0.0
    %1240 = vmatpush.xpose.msra.mxu0 0.0
    %1241 = vmatpush.xpose.msra.mxu0 0.0
    %1242 = vmatpush.xpose.msra.mxu0 0.0
    %1243 = vmatpush.xpose.msra.mxu0 0.0
    %1244 = vmatpush.xpose.msra.mxu0 0.0
    %1245 = vmatpush.xpose.msra.mxu0 0.0
    %1246 = vmatpush.xpose.msra.mxu0 %v1229
    %1247 = vmatmul.f32.gmra.mxu0 %v1227
    %v1248 = vpop.f32.mrf.mxu0
    %v1249 = vadd.f32 0.0, %v1248
    %1250 = vdwg.mxu0
    %1251 = vrot.lane.b32.xlu0 %v162, 112
    %v1252 = vpop.permute.xlu0 %1251
    %1253 = vrot.lane.b32.xlu0 %v162, 80
    %v1254 = vpop.permute.xlu0 %1253
    %v1255 = vsel %vm193, %v1252, 0
    %v1257 = vsel %vm193, %v1254, 0
    %1259 = vmatpush.xpose.msra.mxu0 0.0
    %1260 = vmatpush.xpose.msra.mxu0 0.0
    %1261 = vmatpush.xpose.msra.mxu0 0.0
    %1262 = vmatpush.xpose.msra.mxu0 0.0
    %1263 = vmatpush.xpose.msra.mxu0 0.0
    %1264 = vmatpush.xpose.msra.mxu0 0.0
    %1265 = vmatpush.xpose.msra.mxu0 0.0
    %1266 = vmatpush.xpose.msra.mxu0 0.0
    %1267 = vmatpush.xpose.msra.mxu0 0.0
    %1268 = vmatpush.xpose.msra.mxu0 0.0
    %1269 = vmatpush.xpose.msra.mxu0 0.0
    %1270 = vmatpush.xpose.msra.mxu0 0.0
    %1271 = vmatpush.xpose.msra.mxu0 0.0
    %1272 = vmatpush.xpose.msra.mxu0 0.0
    %1273 = vmatpush.xpose.msra.mxu0 0.0
    %1274 = vmatpush.xpose.msra.mxu0 %v1257
    %1275 = vmatmul.f32.gmra.mxu0 %v1255
    %v1276 = vpop.f32.mrf.mxu0
    %v1277 = vadd.f32 0.0, %v1276
    %1278 = vdwg.mxu0
    %1279 = vrot.lane.b32.xlu0 %v165, 112
    %v1280 = vpop.permute.xlu0 %1279
    %1281 = vrot.lane.b32.xlu0 %v165, 80
    %v1282 = vpop.permute.xlu0 %1281
    %v1283 = vsel %vm193, %v1280, 0
    %v1285 = vsel %vm193, %v1282, 0
    %1287 = vmatpush.xpose.msra.mxu0 0.0
    %1288 = vmatpush.xpose.msra.mxu0 0.0
    %1289 = vmatpush.xpose.msra.mxu0 0.0
    %1290 = vmatpush.xpose.msra.mxu0 0.0
    %1291 = vmatpush.xpose.msra.mxu0 0.0
    %1292 = vmatpush.xpose.msra.mxu0 0.0
    %1293 = vmatpush.xpose.msra.mxu0 0.0
    %1294 = vmatpush.xpose.msra.mxu0 0.0
    %1295 = vmatpush.xpose.msra.mxu0 0.0
    %1296 = vmatpush.xpose.msra.mxu0 0.0
    %1297 = vmatpush.xpose.msra.mxu0 0.0
    %1298 = vmatpush.xpose.msra.mxu0 0.0
    %1299 = vmatpush.xpose.msra.mxu0 0.0
    %1300 = vmatpush.xpose.msra.mxu0 0.0
    %1301 = vmatpush.xpose.msra.mxu0 0.0
    %1302 = vmatpush.xpose.msra.mxu0 %v1285
    %1303 = vmatmul.f32.gmra.mxu0 %v1283
    %v1304 = vpop.f32.mrf.mxu0
    %v1305 = vadd.f32 0.0, %v1304
    %1306 = vdwg.mxu0
    %1307 = vrot.lane.b32.xlu0 %v168, 112
    %v1308 = vpop.permute.xlu0 %1307
    %1309 = vrot.lane.b32.xlu0 %v168, 80
    %v1310 = vpop.permute.xlu0 %1309
    %v1311 = vsel %vm193, %v1308, 0
    %v1313 = vsel %vm193, %v1310, 0
    %1315 = vmatpush.xpose.msra.mxu0 0.0
    %1316 = vmatpush.xpose.msra.mxu0 0.0
    %1317 = vmatpush.xpose.msra.mxu0 0.0
    %1318 = vmatpush.xpose.msra.mxu0 0.0
    %1319 = vmatpush.xpose.msra.mxu0 0.0
    %1320 = vmatpush.xpose.msra.mxu0 0.0
    %1321 = vmatpush.xpose.msra.mxu0 0.0
    %1322 = vmatpush.xpose.msra.mxu0 0.0
    %1323 = vmatpush.xpose.msra.mxu0 0.0
    %1324 = vmatpush.xpose.msra.mxu0 0.0
    %1325 = vmatpush.xpose.msra.mxu0 0.0
    %1326 = vmatpush.xpose.msra.mxu0 0.0
    %1327 = vmatpush.xpose.msra.mxu0 0.0
    %1328 = vmatpush.xpose.msra.mxu0 0.0
    %1329 = vmatpush.xpose.msra.mxu0 0.0
    %1330 = vmatpush.xpose.msra.mxu0 %v1313
    %1331 = vmatmul.f32.gmra.mxu0 %v1311
    %v1332 = vpop.f32.mrf.mxu0
    %v1333 = vadd.f32 0.0, %v1332
    %1334 = vdwg.mxu0
    %1335 = vrot.lane.b32.xlu0 %v171, 112
    %v1336 = vpop.permute.xlu0 %1335
    %1337 = vrot.lane.b32.xlu0 %v171, 80
    %v1338 = vpop.permute.xlu0 %1337
    %v1339 = vsel %vm193, %v1336, 0
    %v1341 = vsel %vm193, %v1338, 0
    %1343 = vmatpush.xpose.msra.mxu0 0.0
    %1344 = vmatpush.xpose.msra.mxu0 0.0
    %1345 = vmatpush.xpose.msra.mxu0 0.0
    %1346 = vmatpush.xpose.msra.mxu0 0.0
    %1347 = vmatpush.xpose.msra.mxu0 0.0
    %1348 = vmatpush.xpose.msra.mxu0 0.0
    %1349 = vmatpush.xpose.msra.mxu0 0.0
    %1350 = vmatpush.xpose.msra.mxu0 0.0
    %1351 = vmatpush.xpose.msra.mxu0 0.0
    %1352 = vmatpush.xpose.msra.mxu0 0.0
    %1353 = vmatpush.xpose.msra.mxu0 0.0
    %1354 = vmatpush.xpose.msra.mxu0 0.0
    %1355 = vmatpush.xpose.msra.mxu0 0.0
    %1356 = vmatpush.xpose.msra.mxu0 0.0
    %1357 = vmatpush.xpose.msra.mxu0 0.0
    %1358 = vmatpush.xpose.msra.mxu0 %v1341
    %1359 = vmatmul.f32.gmra.mxu0 %v1339
    %v1360 = vpop.f32.mrf.mxu0
    %v1361 = vadd.f32 0.0, %v1360
    %1362 = vdwg.mxu0
    %1363 = vrot.lane.b32.xlu0 %v174, 112
    %v1364 = vpop.permute.xlu0 %1363
    %1365 = vrot.lane.b32.xlu0 %v174, 80
    %v1366 = vpop.permute.xlu0 %1365
    %v1367 = vsel %vm193, %v1364, 0
    %v1369 = vsel %vm193, %v1366, 0
    %1371 = vmatpush.xpose.msra.mxu0 0.0
    %1372 = vmatpush.xpose.msra.mxu0 0.0
    %1373 = vmatpush.xpose.msra.mxu0 0.0
    %1374 = vmatpush.xpose.msra.mxu0 0.0
    %1375 = vmatpush.xpose.msra.mxu0 0.0
    %1376 = vmatpush.xpose.msra.mxu0 0.0
    %1377 = vmatpush.xpose.msra.mxu0 0.0
    %1378 = vmatpush.xpose.msra.mxu0 0.0
    %1379 = vmatpush.xpose.msra.mxu0 0.0
    %1380 = vmatpush.xpose.msra.mxu0 0.0
    %1381 = vmatpush.xpose.msra.mxu0 0.0
    %1382 = vmatpush.xpose.msra.mxu0 0.0
    %1383 = vmatpush.xpose.msra.mxu0 0.0
    %1384 = vmatpush.xpose.msra.mxu0 0.0
    %1385 = vmatpush.xpose.msra.mxu0 0.0
    %1386 = vmatpush.xpose.msra.mxu0 %v1369
    %1387 = vmatmul.f32.gmra.mxu0 %v1367
    %v1388 = vpop.f32.mrf.mxu0
    %v1389 = vadd.f32 0.0, %v1388
    %1390 = vdwg.mxu0
    %1391 = vrot.lane.b32.xlu0 %v177, 112
    %v1392 = vpop.permute.xlu0 %1391
    %1393 = vrot.lane.b32.xlu0 %v177, 80
    %v1394 = vpop.permute.xlu0 %1393
    %v1395 = vsel %vm193, %v1392, 0
    %v1397 = vsel %vm193, %v1394, 0
    %1399 = vmatpush.xpose.msra.mxu0 0.0
    %1400 = vmatpush.xpose.msra.mxu0 0.0
    %1401 = vmatpush.xpose.msra.mxu0 0.0
    %1402 = vmatpush.xpose.msra.mxu0 0.0
    %1403 = vmatpush.xpose.msra.mxu0 0.0
    %1404 = vmatpush.xpose.msra.mxu0 0.0
    %1405 = vmatpush.xpose.msra.mxu0 0.0
    %1406 = vmatpush.xpose.msra.mxu0 0.0
    %1407 = vmatpush.xpose.msra.mxu0 0.0
    %1408 = vmatpush.xpose.msra.mxu0 0.0
    %1409 = vmatpush.xpose.msra.mxu0 0.0
    %1410 = vmatpush.xpose.msra.mxu0 0.0
    %1411 = vmatpush.xpose.msra.mxu0 0.0
    %1412 = vmatpush.xpose.msra.mxu0 0.0
    %1413 = vmatpush.xpose.msra.mxu0 0.0
    %1414 = vmatpush.xpose.msra.mxu0 %v1397
    %1415 = vmatmul.f32.gmra.mxu0 %v1395
    %v1416 = vpop.f32.mrf.mxu0
    %v1417 = vadd.f32 0.0, %v1416
    %1418 = vdwg.mxu0
    %1419 = vrot.lane.b32.xlu0 %v180, 112
    %v1420 = vpop.permute.xlu0 %1419
    %1421 = vrot.lane.b32.xlu0 %v180, 80
    %v1422 = vpop.permute.xlu0 %1421
    %v1423 = vsel %vm193, %v1420, 0
    %v1425 = vsel %vm193, %v1422, 0
    %1427 = vmatpush.xpose.msra.mxu0 0.0
    %1428 = vmatpush.xpose.msra.mxu0 0.0
    %1429 = vmatpush.xpose.msra.mxu0 0.0
    %1430 = vmatpush.xpose.msra.mxu0 0.0
    %1431 = vmatpush.xpose.msra.mxu0 0.0
    %1432 = vmatpush.xpose.msra.mxu0 0.0
    %1433 = vmatpush.xpose.msra.mxu0 0.0
    %1434 = vmatpush.xpose.msra.mxu0 0.0
    %1435 = vmatpush.xpose.msra.mxu0 0.0
    %1436 = vmatpush.xpose.msra.mxu0 0.0
    %1437 = vmatpush.xpose.msra.mxu0 0.0
    %1438 = vmatpush.xpose.msra.mxu0 0.0
    %1439 = vmatpush.xpose.msra.mxu0 0.0
    %1440 = vmatpush.xpose.msra.mxu0 0.0
    %1441 = vmatpush.xpose.msra.mxu0 0.0
    %1442 = vmatpush.xpose.msra.mxu0 %v1425
    %1443 = vmatmul.f32.gmra.mxu0 %v1423
    %v1444 = vpop.f32.mrf.mxu0
    %v1445 = vadd.f32 0.0, %v1444
    %1446 = vdwg.mxu0
    %v1447 = vmul.f32 %v1249, 0.35355338
    %v1448 = vmul.f32 %v1277, 0.35355338
    %v1449 = vmul.f32 %v1305, 0.35355338
    %v1450 = vmul.f32 %v1333, 0.35355338
    %v1451 = vmul.f32 %v1361, 0.35355338
    %v1452 = vmul.f32 %v1389, 0.35355338
    %v1453 = vmul.f32 %v1417, 0.35355338
    %v1454 = vmul.f32 %v1445, 0.35355338
    %v1455 = vmul.f32 %v1447, 1.442695
    %v1456 = vpow.pop %v1455
    %v1457 = vmul.f32 %v1448, 1.442695
    %v1458 = vpow.pop %v1457
    %v1459 = vmul.f32 %v1449, 1.442695
    %v1460 = vpow.pop %v1459
    %v1461 = vmul.f32 %v1450, 1.442695
    %v1462 = vpow.pop %v1461
    %v1463 = vmul.f32 %v1451, 1.442695
    %v1464 = vpow.pop %v1463
    %v1465 = vmul.f32 %v1452, 1.442695
    %v1466 = vpow.pop %v1465
    %v1467 = vmul.f32 %v1453, 1.442695
    %v1468 = vpow.pop %v1467
    %v1469 = vmul.f32 %v1454, 1.442695
    %v1470 = vpow.pop %v1469
    %v1471 = vmul.f32 %v1456, %v431
    %v1472 = vmul.f32 %v1458, %v432
    %v1473 = vmul.f32 %v1460, %v433
    %v1474 = vmul.f32 %v1462, %v434
    %v1475 = vmul.f32 %v1464, %v435
    %v1476 = vmul.f32 %v1466, %v436
    %v1477 = vmul.f32 %v1468, %v437
    %v1478 = vmul.f32 %v1470, %v438
    %v1479 = vsel %vm193, %v1471, 0.0
    %1480 = vadd.xlane.f32.xlu0 %v1479
    %v1481 = vpop.xlane.xlu0 %1480
    %v1482 = vsel %vm193, %v1472, 0.0
    %1483 = vadd.xlane.f32.xlu0 %v1482
    %v1484 = vpop.xlane.xlu0 %1483
    %v1485 = vsel %vm193, %v1473, 0.0
    %1486 = vadd.xlane.f32.xlu0 %v1485
    %v1487 = vpop.xlane.xlu0 %1486
    %v1488 = vsel %vm193, %v1474, 0.0
    %1489 = vadd.xlane.f32.xlu0 %v1488
    %v1490 = vpop.xlane.xlu0 %1489
    %v1491 = vsel %vm193, %v1475, 0.0
    %1492 = vadd.xlane.f32.xlu0 %v1491
    %v1493 = vpop.xlane.xlu0 %1492
    %v1494 = vsel %vm193, %v1476, 0.0
    %1495 = vadd.xlane.f32.xlu0 %v1494
    %v1496 = vpop.xlane.xlu0 %1495
    %v1497 = vsel %vm193, %v1477, 0.0
    %1498 = vadd.xlane.f32.xlu0 %v1497
    %v1499 = vpop.xlane.xlu0 %1498
    %v1500 = vsel %vm193, %v1478, 0.0
    %1501 = vadd.xlane.f32.xlu0 %v1500
    %v1502 = vpop.xlane.xlu0 %1501
    %v1503 = vadd.f32 %v1481, 1e-08
    %v1504 = vadd.f32 %v1484, 1e-08
    %v1505 = vadd.f32 %v1487, 1e-08
    %v1506 = vadd.f32 %v1490, 1e-08
    %v1507 = vadd.f32 %v1493, 1e-08
    %v1508 = vadd.f32 %v1496, 1e-08
    %v1509 = vadd.f32 %v1499, 1e-08
    %v1510 = vadd.f32 %v1502, 1e-08
    %v1511 = vrcp.pop %v1503
    %v1512 = vrcp.pop %v1504
    %v1513 = vrcp.pop %v1505
    %v1514 = vrcp.pop %v1506
    %v1515 = vrcp.pop %v1507
    %v1516 = vrcp.pop %v1508
    %v1517 = vrcp.pop %v1509
    %v1518 = vrcp.pop %v1510
    %v1519 = vmul.f32 %v1471, %v1511
    %v1520 = vmul.f32 %v1472, %v1512
    %v1521 = vmul.f32 %v1473, %v1513
    %v1522 = vmul.f32 %v1474, %v1514
    %v1523 = vmul.f32 %v1475, %v1515
    %v1524 = vmul.f32 %v1476, %v1516
    %v1525 = vmul.f32 %v1477, %v1517
    %v1526 = vmul.f32 %v1478, %v1518
    %1527 = vrot.lane.b32.xlu0 %v159, 48
    %v1528 = vpop.permute.xlu0 %1527
    %v1531 = vsel %vm193, %v1519, 0
    %1533 = vmatpush.msra.mxu0 0.0
    %1534 = vmatpush.msra.mxu0 0.0
    %1535 = vmatpush.msra.mxu0 0.0
    %1536 = vmatpush.msra.mxu0 0.0
    %1537 = vmatpush.msra.mxu0 0.0
    %1538 = vmatpush.msra.mxu0 0.0
    %1539 = vmatpush.msra.mxu0 0.0
    %1540 = vmatpush.msra.mxu0 0.0
    %1541 = vmatpush.msra.mxu0 0.0
    %1542 = vmatpush.msra.mxu0 0.0
    %1543 = vmatpush.msra.mxu0 0.0
    %1544 = vmatpush.msra.mxu0 0.0
    %1545 = vmatpush.msra.mxu0 0.0
    %1546 = vmatpush.msra.mxu0 0.0
    %1547 = vmatpush.msra.mxu0 0.0
    %1548 = vmatpush.msra.mxu0 %v1528
    %1549 = vmatmul.f32.gmra.mxu0 %v1531
    %v1550 = vpop.f32.mrf.mxu0
    %v1551 = vadd.f32 0.0, %v1550
    %1552 = vdwg.mxu0
    %1553 = vrot.lane.b32.xlu0 %v162, 48
    %v1554 = vpop.permute.xlu0 %1553
    %v1557 = vsel %vm193, %v1520, 0
    %1559 = vmatpush.msra.mxu0 0.0
    %1560 = vmatpush.msra.mxu0 0.0
    %1561 = vmatpush.msra.mxu0 0.0
    %1562 = vmatpush.msra.mxu0 0.0
    %1563 = vmatpush.msra.mxu0 0.0
    %1564 = vmatpush.msra.mxu0 0.0
    %1565 = vmatpush.msra.mxu0 0.0
    %1566 = vmatpush.msra.mxu0 0.0
    %1567 = vmatpush.msra.mxu0 0.0
    %1568 = vmatpush.msra.mxu0 0.0
    %1569 = vmatpush.msra.mxu0 0.0
    %1570 = vmatpush.msra.mxu0 0.0
    %1571 = vmatpush.msra.mxu0 0.0
    %1572 = vmatpush.msra.mxu0 0.0
    %1573 = vmatpush.msra.mxu0 0.0
    %1574 = vmatpush.msra.mxu0 %v1554
    %1575 = vmatmul.f32.gmra.mxu0 %v1557
    %v1576 = vpop.f32.mrf.mxu0
    %v1577 = vadd.f32 0.0, %v1576
    %1578 = vdwg.mxu0
    %1579 = vrot.lane.b32.xlu0 %v165, 48
    %v1580 = vpop.permute.xlu0 %1579
    %v1583 = vsel %vm193, %v1521, 0
    %1585 = vmatpush.msra.mxu0 0.0
    %1586 = vmatpush.msra.mxu0 0.0
    %1587 = vmatpush.msra.mxu0 0.0
    %1588 = vmatpush.msra.mxu0 0.0
    %1589 = vmatpush.msra.mxu0 0.0
    %1590 = vmatpush.msra.mxu0 0.0
    %1591 = vmatpush.msra.mxu0 0.0
    %1592 = vmatpush.msra.mxu0 0.0
    %1593 = vmatpush.msra.mxu0 0.0
    %1594 = vmatpush.msra.mxu0 0.0
    %1595 = vmatpush.msra.mxu0 0.0
    %1596 = vmatpush.msra.mxu0 0.0
    %1597 = vmatpush.msra.mxu0 0.0
    %1598 = vmatpush.msra.mxu0 0.0
    %1599 = vmatpush.msra.mxu0 0.0
    %1600 = vmatpush.msra.mxu0 %v1580
    %1601 = vmatmul.f32.gmra.mxu0 %v1583
    %v1602 = vpop.f32.mrf.mxu0
    %v1603 = vadd.f32 0.0, %v1602
    %1604 = vdwg.mxu0
    %1605 = vrot.lane.b32.xlu0 %v168, 48
    %v1606 = vpop.permute.xlu0 %1605
    %v1609 = vsel %vm193, %v1522, 0
    %1611 = vmatpush.msra.mxu0 0.0
    %1612 = vmatpush.msra.mxu0 0.0
    %1613 = vmatpush.msra.mxu0 0.0
    %1614 = vmatpush.msra.mxu0 0.0
    %1615 = vmatpush.msra.mxu0 0.0
    %1616 = vmatpush.msra.mxu0 0.0
    %1617 = vmatpush.msra.mxu0 0.0
    %1618 = vmatpush.msra.mxu0 0.0
    %1619 = vmatpush.msra.mxu0 0.0
    %1620 = vmatpush.msra.mxu0 0.0
    %1621 = vmatpush.msra.mxu0 0.0
    %1622 = vmatpush.msra.mxu0 0.0
    %1623 = vmatpush.msra.mxu0 0.0
    %1624 = vmatpush.msra.mxu0 0.0
    %1625 = vmatpush.msra.mxu0 0.0
    %1626 = vmatpush.msra.mxu0 %v1606
    %1627 = vmatmul.f32.gmra.mxu0 %v1609
    %v1628 = vpop.f32.mrf.mxu0
    %v1629 = vadd.f32 0.0, %v1628
    %1630 = vdwg.mxu0
    %1631 = vrot.lane.b32.xlu0 %v171, 48
    %v1632 = vpop.permute.xlu0 %1631
    %v1635 = vsel %vm193, %v1523, 0
    %1637 = vmatpush.msra.mxu0 0.0
    %1638 = vmatpush.msra.mxu0 0.0
    %1639 = vmatpush.msra.mxu0 0.0
    %1640 = vmatpush.msra.mxu0 0.0
    %1641 = vmatpush.msra.mxu0 0.0
    %1642 = vmatpush.msra.mxu0 0.0
    %1643 = vmatpush.msra.mxu0 0.0
    %1644 = vmatpush.msra.mxu0 0.0
    %1645 = vmatpush.msra.mxu0 0.0
    %1646 = vmatpush.msra.mxu0 0.0
    %1647 = vmatpush.msra.mxu0 0.0
    %1648 = vmatpush.msra.mxu0 0.0
    %1649 = vmatpush.msra.mxu0 0.0
    %1650 = vmatpush.msra.mxu0 0.0
    %1651 = vmatpush.msra.mxu0 0.0
    %1652 = vmatpush.msra.mxu0 %v1632
    %1653 = vmatmul.f32.gmra.mxu0 %v1635
    %v1654 = vpop.f32.mrf.mxu0
    %v1655 = vadd.f32 0.0, %v1654
    %1656 = vdwg.mxu0
    %1657 = vrot.lane.b32.xlu0 %v174, 48
    %v1658 = vpop.permute.xlu0 %1657
    %v1661 = vsel %vm193, %v1524, 0
    %1663 = vmatpush.msra.mxu0 0.0
    %1664 = vmatpush.msra.mxu0 0.0
    %1665 = vmatpush.msra.mxu0 0.0
    %1666 = vmatpush.msra.mxu0 0.0
    %1667 = vmatpush.msra.mxu0 0.0
    %1668 = vmatpush.msra.mxu0 0.0
    %1669 = vmatpush.msra.mxu0 0.0
    %1670 = vmatpush.msra.mxu0 0.0
    %1671 = vmatpush.msra.mxu0 0.0
    %1672 = vmatpush.msra.mxu0 0.0
    %1673 = vmatpush.msra.mxu0 0.0
    %1674 = vmatpush.msra.mxu0 0.0
    %1675 = vmatpush.msra.mxu0 0.0
    %1676 = vmatpush.msra.mxu0 0.0
    %1677 = vmatpush.msra.mxu0 0.0
    %1678 = vmatpush.msra.mxu0 %v1658
    %1679 = vmatmul.f32.gmra.mxu0 %v1661
    %v1680 = vpop.f32.mrf.mxu0
    %v1681 = vadd.f32 0.0, %v1680
    %1682 = vdwg.mxu0
    %1683 = vrot.lane.b32.xlu0 %v177, 48
    %v1684 = vpop.permute.xlu0 %1683
    %v1687 = vsel %vm193, %v1525, 0
    %1689 = vmatpush.msra.mxu0 0.0
    %1690 = vmatpush.msra.mxu0 0.0
    %1691 = vmatpush.msra.mxu0 0.0
    %1692 = vmatpush.msra.mxu0 0.0
    %1693 = vmatpush.msra.mxu0 0.0
    %1694 = vmatpush.msra.mxu0 0.0
    %1695 = vmatpush.msra.mxu0 0.0
    %1696 = vmatpush.msra.mxu0 0.0
    %1697 = vmatpush.msra.mxu0 0.0
    %1698 = vmatpush.msra.mxu0 0.0
    %1699 = vmatpush.msra.mxu0 0.0
    %1700 = vmatpush.msra.mxu0 0.0
    %1701 = vmatpush.msra.mxu0 0.0
    %1702 = vmatpush.msra.mxu0 0.0
    %1703 = vmatpush.msra.mxu0 0.0
    %1704 = vmatpush.msra.mxu0 %v1684
    %1705 = vmatmul.f32.gmra.mxu0 %v1687
    %v1706 = vpop.f32.mrf.mxu0
    %v1707 = vadd.f32 0.0, %v1706
    %1708 = vdwg.mxu0
    %1709 = vrot.lane.b32.xlu0 %v180, 48
    %v1710 = vpop.permute.xlu0 %1709
    %v1713 = vsel %vm193, %v1526, 0
    %1715 = vmatpush.msra.mxu0 0.0
    %1716 = vmatpush.msra.mxu0 0.0
    %1717 = vmatpush.msra.mxu0 0.0
    %1718 = vmatpush.msra.mxu0 0.0
    %1719 = vmatpush.msra.mxu0 0.0
    %1720 = vmatpush.msra.mxu0 0.0
    %1721 = vmatpush.msra.mxu0 0.0
    %1722 = vmatpush.msra.mxu0 0.0
    %1723 = vmatpush.msra.mxu0 0.0
    %1724 = vmatpush.msra.mxu0 0.0
    %1725 = vmatpush.msra.mxu0 0.0
    %1726 = vmatpush.msra.mxu0 0.0
    %1727 = vmatpush.msra.mxu0 0.0
    %1728 = vmatpush.msra.mxu0 0.0
    %1729 = vmatpush.msra.mxu0 0.0
    %1730 = vmatpush.msra.mxu0 %v1710
    %1731 = vmatmul.f32.gmra.mxu0 %v1713
    %v1732 = vpop.f32.mrf.mxu0
    %v1733 = vadd.f32 0.0, %v1732
    %1734 = vdwg.mxu0
    %1735 = vrot.lane.b32.xlu0 %v159, 104
    %v1736 = vpop.permute.xlu0 %1735
    %1737 = vrot.lane.b32.xlu0 %v159, 72
    %v1738 = vpop.permute.xlu0 %1737
    %v1739 = vsel %vm193, %v1736, 0
    %v1741 = vsel %vm193, %v1738, 0
    %1743 = vmatpush.xpose.msra.mxu0 0.0
    %1744 = vmatpush.xpose.msra.mxu0 0.0
    %1745 = vmatpush.xpose.msra.mxu0 0.0
    %1746 = vmatpush.xpose.msra.mxu0 0.0
    %1747 = vmatpush.xpose.msra.mxu0 0.0
    %1748 = vmatpush.xpose.msra.mxu0 0.0
    %1749 = vmatpush.xpose.msra.mxu0 0.0
    %1750 = vmatpush.xpose.msra.mxu0 0.0
    %1751 = vmatpush.xpose.msra.mxu0 0.0
    %1752 = vmatpush.xpose.msra.mxu0 0.0
    %1753 = vmatpush.xpose.msra.mxu0 0.0
    %1754 = vmatpush.xpose.msra.mxu0 0.0
    %1755 = vmatpush.xpose.msra.mxu0 0.0
    %1756 = vmatpush.xpose.msra.mxu0 0.0
    %1757 = vmatpush.xpose.msra.mxu0 0.0
    %1758 = vmatpush.xpose.msra.mxu0 %v1741
    %1759 = vmatmul.f32.gmra.mxu0 %v1739
    %v1760 = vpop.f32.mrf.mxu0
    %v1761 = vadd.f32 0.0, %v1760
    %1762 = vdwg.mxu0
    %1763 = vrot.lane.b32.xlu0 %v162, 104
    %v1764 = vpop.permute.xlu0 %1763
    %1765 = vrot.lane.b32.xlu0 %v162, 72
    %v1766 = vpop.permute.xlu0 %1765
    %v1767 = vsel %vm193, %v1764, 0
    %v1769 = vsel %vm193, %v1766, 0
    %1771 = vmatpush.xpose.msra.mxu0 0.0
    %1772 = vmatpush.xpose.msra.mxu0 0.0
    %1773 = vmatpush.xpose.msra.mxu0 0.0
    %1774 = vmatpush.xpose.msra.mxu0 0.0
    %1775 = vmatpush.xpose.msra.mxu0 0.0
    %1776 = vmatpush.xpose.msra.mxu0 0.0
    %1777 = vmatpush.xpose.msra.mxu0 0.0
    %1778 = vmatpush.xpose.msra.mxu0 0.0
    %1779 = vmatpush.xpose.msra.mxu0 0.0
    %1780 = vmatpush.xpose.msra.mxu0 0.0
    %1781 = vmatpush.xpose.msra.mxu0 0.0
    %1782 = vmatpush.xpose.msra.mxu0 0.0
    %1783 = vmatpush.xpose.msra.mxu0 0.0
    %1784 = vmatpush.xpose.msra.mxu0 0.0
    %1785 = vmatpush.xpose.msra.mxu0 0.0
    %1786 = vmatpush.xpose.msra.mxu0 %v1769
    %1787 = vmatmul.f32.gmra.mxu0 %v1767
    %v1788 = vpop.f32.mrf.mxu0
    %v1789 = vadd.f32 0.0, %v1788
    %1790 = vdwg.mxu0
    %1791 = vrot.lane.b32.xlu0 %v165, 104
    %v1792 = vpop.permute.xlu0 %1791
    %1793 = vrot.lane.b32.xlu0 %v165, 72
    %v1794 = vpop.permute.xlu0 %1793
    %v1795 = vsel %vm193, %v1792, 0
    %v1797 = vsel %vm193, %v1794, 0
    %1799 = vmatpush.xpose.msra.mxu0 0.0
    %1800 = vmatpush.xpose.msra.mxu0 0.0
    %1801 = vmatpush.xpose.msra.mxu0 0.0
    %1802 = vmatpush.xpose.msra.mxu0 0.0
    %1803 = vmatpush.xpose.msra.mxu0 0.0
    %1804 = vmatpush.xpose.msra.mxu0 0.0
    %1805 = vmatpush.xpose.msra.mxu0 0.0
    %1806 = vmatpush.xpose.msra.mxu0 0.0
    %1807 = vmatpush.xpose.msra.mxu0 0.0
    %1808 = vmatpush.xpose.msra.mxu0 0.0
    %1809 = vmatpush.xpose.msra.mxu0 0.0
    %1810 = vmatpush.xpose.msra.mxu0 0.0
    %1811 = vmatpush.xpose.msra.mxu0 0.0
    %1812 = vmatpush.xpose.msra.mxu0 0.0
    %1813 = vmatpush.xpose.msra.mxu0 0.0
    %1814 = vmatpush.xpose.msra.mxu0 %v1797
    %1815 = vmatmul.f32.gmra.mxu0 %v1795
    %v1816 = vpop.f32.mrf.mxu0
    %v1817 = vadd.f32 0.0, %v1816
    %1818 = vdwg.mxu0
    %1819 = vrot.lane.b32.xlu0 %v168, 104
    %v1820 = vpop.permute.xlu0 %1819
    %1821 = vrot.lane.b32.xlu0 %v168, 72
    %v1822 = vpop.permute.xlu0 %1821
    %v1823 = vsel %vm193, %v1820, 0
    %v1825 = vsel %vm193, %v1822, 0
    %1827 = vmatpush.xpose.msra.mxu0 0.0
    %1828 = vmatpush.xpose.msra.mxu0 0.0
    %1829 = vmatpush.xpose.msra.mxu0 0.0
    %1830 = vmatpush.xpose.msra.mxu0 0.0
    %1831 = vmatpush.xpose.msra.mxu0 0.0
    %1832 = vmatpush.xpose.msra.mxu0 0.0
    %1833 = vmatpush.xpose.msra.mxu0 0.0
    %1834 = vmatpush.xpose.msra.mxu0 0.0
    %1835 = vmatpush.xpose.msra.mxu0 0.0
    %1836 = vmatpush.xpose.msra.mxu0 0.0
    %1837 = vmatpush.xpose.msra.mxu0 0.0
    %1838 = vmatpush.xpose.msra.mxu0 0.0
    %1839 = vmatpush.xpose.msra.mxu0 0.0
    %1840 = vmatpush.xpose.msra.mxu0 0.0
    %1841 = vmatpush.xpose.msra.mxu0 0.0
    %1842 = vmatpush.xpose.msra.mxu0 %v1825
    %1843 = vmatmul.f32.gmra.mxu0 %v1823
    %v1844 = vpop.f32.mrf.mxu0
    %v1845 = vadd.f32 0.0, %v1844
    %1846 = vdwg.mxu0
    %1847 = vrot.lane.b32.xlu0 %v171, 104
    %v1848 = vpop.permute.xlu0 %1847
    %1849 = vrot.lane.b32.xlu0 %v171, 72
    %v1850 = vpop.permute.xlu0 %1849
    %v1851 = vsel %vm193, %v1848, 0
    %v1853 = vsel %vm193, %v1850, 0
    %1855 = vmatpush.xpose.msra.mxu0 0.0
    %1856 = vmatpush.xpose.msra.mxu0 0.0
    %1857 = vmatpush.xpose.msra.mxu0 0.0
    %1858 = vmatpush.xpose.msra.mxu0 0.0
    %1859 = vmatpush.xpose.msra.mxu0 0.0
    %1860 = vmatpush.xpose.msra.mxu0 0.0
    %1861 = vmatpush.xpose.msra.mxu0 0.0
    %1862 = vmatpush.xpose.msra.mxu0 0.0
    %1863 = vmatpush.xpose.msra.mxu0 0.0
    %1864 = vmatpush.xpose.msra.mxu0 0.0
    %1865 = vmatpush.xpose.msra.mxu0 0.0
    %1866 = vmatpush.xpose.msra.mxu0 0.0
    %1867 = vmatpush.xpose.msra.mxu0 0.0
    %1868 = vmatpush.xpose.msra.mxu0 0.0
    %1869 = vmatpush.xpose.msra.mxu0 0.0
    %1870 = vmatpush.xpose.msra.mxu0 %v1853
    %1871 = vmatmul.f32.gmra.mxu0 %v1851
    %v1872 = vpop.f32.mrf.mxu0
    %v1873 = vadd.f32 0.0, %v1872
    %1874 = vdwg.mxu0
    %1875 = vrot.lane.b32.xlu0 %v174, 104
    %v1876 = vpop.permute.xlu0 %1875
    %1877 = vrot.lane.b32.xlu0 %v174, 72
    %v1878 = vpop.permute.xlu0 %1877
    %v1879 = vsel %vm193, %v1876, 0
    %v1881 = vsel %vm193, %v1878, 0
    %1883 = vmatpush.xpose.msra.mxu0 0.0
    %1884 = vmatpush.xpose.msra.mxu0 0.0
    %1885 = vmatpush.xpose.msra.mxu0 0.0
    %1886 = vmatpush.xpose.msra.mxu0 0.0
    %1887 = vmatpush.xpose.msra.mxu0 0.0
    %1888 = vmatpush.xpose.msra.mxu0 0.0
    %1889 = vmatpush.xpose.msra.mxu0 0.0
    %1890 = vmatpush.xpose.msra.mxu0 0.0
    %1891 = vmatpush.xpose.msra.mxu0 0.0
    %1892 = vmatpush.xpose.msra.mxu0 0.0
    %1893 = vmatpush.xpose.msra.mxu0 0.0
    %1894 = vmatpush.xpose.msra.mxu0 0.0
    %1895 = vmatpush.xpose.msra.mxu0 0.0
    %1896 = vmatpush.xpose.msra.mxu0 0.0
    %1897 = vmatpush.xpose.msra.mxu0 0.0
    %1898 = vmatpush.xpose.msra.mxu0 %v1881
    %1899 = vmatmul.f32.gmra.mxu0 %v1879
    %v1900 = vpop.f32.mrf.mxu0
    %v1901 = vadd.f32 0.0, %v1900
    %1902 = vdwg.mxu0
    %1903 = vrot.lane.b32.xlu0 %v177, 104
    %v1904 = vpop.permute.xlu0 %1903
    %1905 = vrot.lane.b32.xlu0 %v177, 72
    %v1906 = vpop.permute.xlu0 %1905
    %v1907 = vsel %vm193, %v1904, 0
    %v1909 = vsel %vm193, %v1906, 0
    %1911 = vmatpush.xpose.msra.mxu0 0.0
    %1912 = vmatpush.xpose.msra.mxu0 0.0
    %1913 = vmatpush.xpose.msra.mxu0 0.0
    %1914 = vmatpush.xpose.msra.mxu0 0.0
    %1915 = vmatpush.xpose.msra.mxu0 0.0
    %1916 = vmatpush.xpose.msra.mxu0 0.0
    %1917 = vmatpush.xpose.msra.mxu0 0.0
    %1918 = vmatpush.xpose.msra.mxu0 0.0
    %1919 = vmatpush.xpose.msra.mxu0 0.0
    %1920 = vmatpush.xpose.msra.mxu0 0.0
    %1921 = vmatpush.xpose.msra.mxu0 0.0
    %1922 = vmatpush.xpose.msra.mxu0 0.0
    %1923 = vmatpush.xpose.msra.mxu0 0.0
    %1924 = vmatpush.xpose.msra.mxu0 0.0
    %1925 = vmatpush.xpose.msra.mxu0 0.0
    %1926 = vmatpush.xpose.msra.mxu0 %v1909
    %1927 = vmatmul.f32.gmra.mxu0 %v1907
    %v1928 = vpop.f32.mrf.mxu0
    %v1929 = vadd.f32 0.0, %v1928
    %1930 = vdwg.mxu0
    %1931 = vrot.lane.b32.xlu0 %v180, 104
    %v1932 = vpop.permute.xlu0 %1931
    %1933 = vrot.lane.b32.xlu0 %v180, 72
    %v1934 = vpop.permute.xlu0 %1933
    %v1935 = vsel %vm193, %v1932, 0
    %v1937 = vsel %vm193, %v1934, 0
    %1939 = vmatpush.xpose.msra.mxu0 0.0
    %1940 = vmatpush.xpose.msra.mxu0 0.0
    %1941 = vmatpush.xpose.msra.mxu0 0.0
    %1942 = vmatpush.xpose.msra.mxu0 0.0
    %1943 = vmatpush.xpose.msra.mxu0 0.0
    %1944 = vmatpush.xpose.msra.mxu0 0.0
    %1945 = vmatpush.xpose.msra.mxu0 0.0
    %1946 = vmatpush.xpose.msra.mxu0 0.0
    %1947 = vmatpush.xpose.msra.mxu0 0.0
    %1948 = vmatpush.xpose.msra.mxu0 0.0
    %1949 = vmatpush.xpose.msra.mxu0 0.0
    %1950 = vmatpush.xpose.msra.mxu0 0.0
    %1951 = vmatpush.xpose.msra.mxu0 0.0
    %1952 = vmatpush.xpose.msra.mxu0 0.0
    %1953 = vmatpush.xpose.msra.mxu0 0.0
    %1954 = vmatpush.xpose.msra.mxu0 %v1937
    %1955 = vmatmul.f32.gmra.mxu0 %v1935
    %v1956 = vpop.f32.mrf.mxu0
    %v1957 = vadd.f32 0.0, %v1956
    %1958 = vdwg.mxu0
    %v1959 = vmul.f32 %v1761, 0.35355338
    %v1960 = vmul.f32 %v1789, 0.35355338
    %v1961 = vmul.f32 %v1817, 0.35355338
    %v1962 = vmul.f32 %v1845, 0.35355338
    %v1963 = vmul.f32 %v1873, 0.35355338
    %v1964 = vmul.f32 %v1901, 0.35355338
    %v1965 = vmul.f32 %v1929, 0.35355338
    %v1966 = vmul.f32 %v1957, 0.35355338
    %v1967 = vmul.f32 %v1959, 1.442695
    %v1968 = vpow.pop %v1967
    %v1969 = vmul.f32 %v1960, 1.442695
    %v1970 = vpow.pop %v1969
    %v1971 = vmul.f32 %v1961, 1.442695
    %v1972 = vpow.pop %v1971
    %v1973 = vmul.f32 %v1962, 1.442695
    %v1974 = vpow.pop %v1973
    %v1975 = vmul.f32 %v1963, 1.442695
    %v1976 = vpow.pop %v1975
    %v1977 = vmul.f32 %v1964, 1.442695
    %v1978 = vpow.pop %v1977
    %v1979 = vmul.f32 %v1965, 1.442695
    %v1980 = vpow.pop %v1979
    %v1981 = vmul.f32 %v1966, 1.442695
    %v1982 = vpow.pop %v1981
    %v1983 = vmul.f32 %v1968, %v431
    %v1984 = vmul.f32 %v1970, %v432
    %v1985 = vmul.f32 %v1972, %v433
    %v1986 = vmul.f32 %v1974, %v434
    %v1987 = vmul.f32 %v1976, %v435
    %v1988 = vmul.f32 %v1978, %v436
    %v1989 = vmul.f32 %v1980, %v437
    %v1990 = vmul.f32 %v1982, %v438
    %v1991 = vsel %vm193, %v1983, 0.0
    %1992 = vadd.xlane.f32.xlu0 %v1991
    %v1993 = vpop.xlane.xlu0 %1992
    %v1994 = vsel %vm193, %v1984, 0.0
    %1995 = vadd.xlane.f32.xlu0 %v1994
    %v1996 = vpop.xlane.xlu0 %1995
    %v1997 = vsel %vm193, %v1985, 0.0
    %1998 = vadd.xlane.f32.xlu0 %v1997
    %v1999 = vpop.xlane.xlu0 %1998
    %v2000 = vsel %vm193, %v1986, 0.0
    %2001 = vadd.xlane.f32.xlu0 %v2000
    %v2002 = vpop.xlane.xlu0 %2001
    %v2003 = vsel %vm193, %v1987, 0.0
    %2004 = vadd.xlane.f32.xlu0 %v2003
    %v2005 = vpop.xlane.xlu0 %2004
    %v2006 = vsel %vm193, %v1988, 0.0
    %2007 = vadd.xlane.f32.xlu0 %v2006
    %v2008 = vpop.xlane.xlu0 %2007
    %v2009 = vsel %vm193, %v1989, 0.0
    %2010 = vadd.xlane.f32.xlu0 %v2009
    %v2011 = vpop.xlane.xlu0 %2010
    %v2012 = vsel %vm193, %v1990, 0.0
    %2013 = vadd.xlane.f32.xlu0 %v2012
    %v2014 = vpop.xlane.xlu0 %2013
    %v2015 = vadd.f32 %v1993, 1e-08
    %v2016 = vadd.f32 %v1996, 1e-08
    %v2017 = vadd.f32 %v1999, 1e-08
    %v2018 = vadd.f32 %v2002, 1e-08
    %v2019 = vadd.f32 %v2005, 1e-08
    %v2020 = vadd.f32 %v2008, 1e-08
    %v2021 = vadd.f32 %v2011, 1e-08
    %v2022 = vadd.f32 %v2014, 1e-08
    %v2023 = vrcp.pop %v2015
    %v2024 = vrcp.pop %v2016
    %v2025 = vrcp.pop %v2017
    %v2026 = vrcp.pop %v2018
    %v2027 = vrcp.pop %v2019
    %v2028 = vrcp.pop %v2020
    %v2029 = vrcp.pop %v2021
    %v2030 = vrcp.pop %v2022
    %v2031 = vmul.f32 %v1983, %v2023
    %v2032 = vmul.f32 %v1984, %v2024
    %v2033 = vmul.f32 %v1985, %v2025
    %v2034 = vmul.f32 %v1986, %v2026
    %v2035 = vmul.f32 %v1987, %v2027
    %v2036 = vmul.f32 %v1988, %v2028
    %v2037 = vmul.f32 %v1989, %v2029
    %v2038 = vmul.f32 %v1990, %v2030
    %2039 = vrot.lane.b32.xlu0 %v159, 40
    %v2040 = vpop.permute.xlu0 %2039
    %v2043 = vsel %vm193, %v2031, 0
    %2045 = vmatpush.msra.mxu0 0.0
    %2046 = vmatpush.msra.mxu0 0.0
    %2047 = vmatpush.msra.mxu0 0.0
    %2048 = vmatpush.msra.mxu0 0.0
    %2049 = vmatpush.msra.mxu0 0.0
    %2050 = vmatpush.msra.mxu0 0.0
    %2051 = vmatpush.msra.mxu0 0.0
    %2052 = vmatpush.msra.mxu0 0.0
    %2053 = vmatpush.msra.mxu0 0.0
    %2054 = vmatpush.msra.mxu0 0.0
    %2055 = vmatpush.msra.mxu0 0.0
    %2056 = vmatpush.msra.mxu0 0.0
    %2057 = vmatpush.msra.mxu0 0.0
    %2058 = vmatpush.msra.mxu0 0.0
    %2059 = vmatpush.msra.mxu0 0.0
    %2060 = vmatpush.msra.mxu0 %v2040
    %2061 = vmatmul.f32.gmra.mxu0 %v2043
    %v2062 = vpop.f32.mrf.mxu0
    %v2063 = vadd.f32 0.0, %v2062
    %2064 = vdwg.mxu0
    %2065 = vrot.lane.b32.xlu0 %v162, 40
    %v2066 = vpop.permute.xlu0 %2065
    %v2069 = vsel %vm193, %v2032, 0
    %2071 = vmatpush.msra.mxu0 0.0
    %2072 = vmatpush.msra.mxu0 0.0
    %2073 = vmatpush.msra.mxu0 0.0
    %2074 = vmatpush.msra.mxu0 0.0
    %2075 = vmatpush.msra.mxu0 0.0
    %2076 = vmatpush.msra.mxu0 0.0
    %2077 = vmatpush.msra.mxu0 0.0
    %2078 = vmatpush.msra.mxu0 0.0
    %2079 = vmatpush.msra.mxu0 0.0
    %2080 = vmatpush.msra.mxu0 0.0
    %2081 = vmatpush.msra.mxu0 0.0
    %2082 = vmatpush.msra.mxu0 0.0
    %2083 = vmatpush.msra.mxu0 0.0
    %2084 = vmatpush.msra.mxu0 0.0
    %2085 = vmatpush.msra.mxu0 0.0
    %2086 = vmatpush.msra.mxu0 %v2066
    %2087 = vmatmul.f32.gmra.mxu0 %v2069
    %v2088 = vpop.f32.mrf.mxu0
    %v2089 = vadd.f32 0.0, %v2088
    %2090 = vdwg.mxu0
    %2091 = vrot.lane.b32.xlu0 %v165, 40
    %v2092 = vpop.permute.xlu0 %2091
    %v2095 = vsel %vm193, %v2033, 0
    %2097 = vmatpush.msra.mxu0 0.0
    %2098 = vmatpush.msra.mxu0 0.0
    %2099 = vmatpush.msra.mxu0 0.0
    %2100 = vmatpush.msra.mxu0 0.0
    %2101 = vmatpush.msra.mxu0 0.0
    %2102 = vmatpush.msra.mxu0 0.0
    %2103 = vmatpush.msra.mxu0 0.0
    %2104 = vmatpush.msra.mxu0 0.0
    %2105 = vmatpush.msra.mxu0 0.0
    %2106 = vmatpush.msra.mxu0 0.0
    %2107 = vmatpush.msra.mxu0 0.0
    %2108 = vmatpush.msra.mxu0 0.0
    %2109 = vmatpush.msra.mxu0 0.0
    %2110 = vmatpush.msra.mxu0 0.0
    %2111 = vmatpush.msra.mxu0 0.0
    %2112 = vmatpush.msra.mxu0 %v2092
    %2113 = vmatmul.f32.gmra.mxu0 %v2095
    %v2114 = vpop.f32.mrf.mxu0
    %v2115 = vadd.f32 0.0, %v2114
    %2116 = vdwg.mxu0
    %2117 = vrot.lane.b32.xlu0 %v168, 40
    %v2118 = vpop.permute.xlu0 %2117
    %v2121 = vsel %vm193, %v2034, 0
    %2123 = vmatpush.msra.mxu0 0.0
    %2124 = vmatpush.msra.mxu0 0.0
    %2125 = vmatpush.msra.mxu0 0.0
    %2126 = vmatpush.msra.mxu0 0.0
    %2127 = vmatpush.msra.mxu0 0.0
    %2128 = vmatpush.msra.mxu0 0.0
    %2129 = vmatpush.msra.mxu0 0.0
    %2130 = vmatpush.msra.mxu0 0.0
    %2131 = vmatpush.msra.mxu0 0.0
    %2132 = vmatpush.msra.mxu0 0.0
    %2133 = vmatpush.msra.mxu0 0.0
    %2134 = vmatpush.msra.mxu0 0.0
    %2135 = vmatpush.msra.mxu0 0.0
    %2136 = vmatpush.msra.mxu0 0.0
    %2137 = vmatpush.msra.mxu0 0.0
    %2138 = vmatpush.msra.mxu0 %v2118
    %2139 = vmatmul.f32.gmra.mxu0 %v2121
    %v2140 = vpop.f32.mrf.mxu0
    %v2141 = vadd.f32 0.0, %v2140
    %2142 = vdwg.mxu0
    %2143 = vrot.lane.b32.xlu0 %v171, 40
    %v2144 = vpop.permute.xlu0 %2143
    %v2147 = vsel %vm193, %v2035, 0
    %2149 = vmatpush.msra.mxu0 0.0
    %2150 = vmatpush.msra.mxu0 0.0
    %2151 = vmatpush.msra.mxu0 0.0
    %2152 = vmatpush.msra.mxu0 0.0
    %2153 = vmatpush.msra.mxu0 0.0
    %2154 = vmatpush.msra.mxu0 0.0
    %2155 = vmatpush.msra.mxu0 0.0
    %2156 = vmatpush.msra.mxu0 0.0
    %2157 = vmatpush.msra.mxu0 0.0
    %2158 = vmatpush.msra.mxu0 0.0
    %2159 = vmatpush.msra.mxu0 0.0
    %2160 = vmatpush.msra.mxu0 0.0
    %2161 = vmatpush.msra.mxu0 0.0
    %2162 = vmatpush.msra.mxu0 0.0
    %2163 = vmatpush.msra.mxu0 0.0
    %2164 = vmatpush.msra.mxu0 %v2144
    %2165 = vmatmul.f32.gmra.mxu0 %v2147
    %v2166 = vpop.f32.mrf.mxu0
    %v2167 = vadd.f32 0.0, %v2166
    %2168 = vdwg.mxu0
    %2169 = vrot.lane.b32.xlu0 %v174, 40
    %v2170 = vpop.permute.xlu0 %2169
    %v2173 = vsel %vm193, %v2036, 0
    %2175 = vmatpush.msra.mxu0 0.0
    %2176 = vmatpush.msra.mxu0 0.0
    %2177 = vmatpush.msra.mxu0 0.0
    %2178 = vmatpush.msra.mxu0 0.0
    %2179 = vmatpush.msra.mxu0 0.0
    %2180 = vmatpush.msra.mxu0 0.0
    %2181 = vmatpush.msra.mxu0 0.0
    %2182 = vmatpush.msra.mxu0 0.0
    %2183 = vmatpush.msra.mxu0 0.0
    %2184 = vmatpush.msra.mxu0 0.0
    %2185 = vmatpush.msra.mxu0 0.0
    %2186 = vmatpush.msra.mxu0 0.0
    %2187 = vmatpush.msra.mxu0 0.0
    %2188 = vmatpush.msra.mxu0 0.0
    %2189 = vmatpush.msra.mxu0 0.0
    %2190 = vmatpush.msra.mxu0 %v2170
    %2191 = vmatmul.f32.gmra.mxu0 %v2173
    %v2192 = vpop.f32.mrf.mxu0
    %v2193 = vadd.f32 0.0, %v2192
    %2194 = vdwg.mxu0
    %2195 = vrot.lane.b32.xlu0 %v177, 40
    %v2196 = vpop.permute.xlu0 %2195
    %v2199 = vsel %vm193, %v2037, 0
    %2201 = vmatpush.msra.mxu0 0.0
    %2202 = vmatpush.msra.mxu0 0.0
    %2203 = vmatpush.msra.mxu0 0.0
    %2204 = vmatpush.msra.mxu0 0.0
    %2205 = vmatpush.msra.mxu0 0.0
    %2206 = vmatpush.msra.mxu0 0.0
    %2207 = vmatpush.msra.mxu0 0.0
    %2208 = vmatpush.msra.mxu0 0.0
    %2209 = vmatpush.msra.mxu0 0.0
    %2210 = vmatpush.msra.mxu0 0.0
    %2211 = vmatpush.msra.mxu0 0.0
    %2212 = vmatpush.msra.mxu0 0.0
    %2213 = vmatpush.msra.mxu0 0.0
    %2214 = vmatpush.msra.mxu0 0.0
    %2215 = vmatpush.msra.mxu0 0.0
    %2216 = vmatpush.msra.mxu0 %v2196
    %2217 = vmatmul.f32.gmra.mxu0 %v2199
    %v2218 = vpop.f32.mrf.mxu0
    %v2219 = vadd.f32 0.0, %v2218
    %2220 = vdwg.mxu0
    %2221 = vrot.lane.b32.xlu0 %v180, 40
    %v2222 = vpop.permute.xlu0 %2221
    %v2225 = vsel %vm193, %v2038, 0
    %2227 = vmatpush.msra.mxu0 0.0
    %2228 = vmatpush.msra.mxu0 0.0
    %2229 = vmatpush.msra.mxu0 0.0
    %2230 = vmatpush.msra.mxu0 0.0
    %2231 = vmatpush.msra.mxu0 0.0
    %2232 = vmatpush.msra.mxu0 0.0
    %2233 = vmatpush.msra.mxu0 0.0
    %2234 = vmatpush.msra.mxu0 0.0
    %2235 = vmatpush.msra.mxu0 0.0
    %2236 = vmatpush.msra.mxu0 0.0
    %2237 = vmatpush.msra.mxu0 0.0
    %2238 = vmatpush.msra.mxu0 0.0
    %2239 = vmatpush.msra.mxu0 0.0
    %2240 = vmatpush.msra.mxu0 0.0
    %2241 = vmatpush.msra.mxu0 0.0
    %2242 = vmatpush.msra.mxu0 %v2222
    %2243 = vmatmul.f32.gmra.mxu0 %v2225
    %v2244 = vpop.f32.mrf.mxu0
    %v2245 = vadd.f32 0.0, %v2244
    %2246 = vdwg.mxu0
    %2255 = vrot.lane.b32.xlu0 %v1039, 8
    %v2256 = vpop.permute.xlu0 %2255
    %2257 = vrot.lane.b32.xlu0 %v1065, 8
    %v2258 = vpop.permute.xlu0 %2257
    %2259 = vrot.lane.b32.xlu0 %v1091, 8
    %v2260 = vpop.permute.xlu0 %2259
    %2261 = vrot.lane.b32.xlu0 %v1117, 8
    %v2262 = vpop.permute.xlu0 %2261
    %2263 = vrot.lane.b32.xlu0 %v1143, 8
    %v2264 = vpop.permute.xlu0 %2263
    %2265 = vrot.lane.b32.xlu0 %v1169, 8
    %v2266 = vpop.permute.xlu0 %2265
    %2267 = vrot.lane.b32.xlu0 %v1195, 8
    %v2268 = vpop.permute.xlu0 %2267
    %2269 = vrot.lane.b32.xlu0 %v1221, 8
    %v2270 = vpop.permute.xlu0 %2269
    %2287 = vrot.lane.b32.xlu0 %v1551, 16
    %v2288 = vpop.permute.xlu0 %2287
    %2289 = vrot.lane.b32.xlu0 %v1577, 16
    %v2290 = vpop.permute.xlu0 %2289
    %2291 = vrot.lane.b32.xlu0 %v1603, 16
    %v2292 = vpop.permute.xlu0 %2291
    %2293 = vrot.lane.b32.xlu0 %v1629, 16
    %v2294 = vpop.permute.xlu0 %2293
    %2295 = vrot.lane.b32.xlu0 %v1655, 16
    %v2296 = vpop.permute.xlu0 %2295
    %2297 = vrot.lane.b32.xlu0 %v1681, 16
    %v2298 = vpop.permute.xlu0 %2297
    %2299 = vrot.lane.b32.xlu0 %v1707, 16
    %v2300 = vpop.permute.xlu0 %2299
    %2301 = vrot.lane.b32.xlu0 %v1733, 16
    %v2302 = vpop.permute.xlu0 %2301
    %2319 = vrot.lane.b32.xlu0 %v2063, 24
    %v2320 = vpop.permute.xlu0 %2319
    %2321 = vrot.lane.b32.xlu0 %v2089, 24
    %v2322 = vpop.permute.xlu0 %2321
    %2323 = vrot.lane.b32.xlu0 %v2115, 24
    %v2324 = vpop.permute.xlu0 %2323
    %2325 = vrot.lane.b32.xlu0 %v2141, 24
    %v2326 = vpop.permute.xlu0 %2325
    %2327 = vrot.lane.b32.xlu0 %v2167, 24
    %v2328 = vpop.permute.xlu0 %2327
    %2329 = vrot.lane.b32.xlu0 %v2193, 24
    %v2330 = vpop.permute.xlu0 %2329
    %2331 = vrot.lane.b32.xlu0 %v2219, 24
    %v2332 = vpop.permute.xlu0 %2331
    %2333 = vrot.lane.b32.xlu0 %v2245, 24
    %v2334 = vpop.permute.xlu0 %2333
    %v2343 = vsel %vm193, %v527, %v2256
    %v2344 = vsel %vm193, %v553, %v2258
    %v2345 = vsel %vm193, %v579, %v2260
    %v2346 = vsel %vm193, %v605, %v2262
    %v2347 = vsel %vm193, %v631, %v2264
    %v2348 = vsel %vm193, %v657, %v2266
    %v2349 = vsel %vm193, %v683, %v2268
    %v2350 = vsel %vm193, %v709, %v2270
    %vm2351 = vcmask 130048
    %v2352 = vsel %vm2351, %v2343, %v2288
    %v2353 = vsel %vm2351, %v2344, %v2290
    %v2354 = vsel %vm2351, %v2345, %v2292
    %v2355 = vsel %vm2351, %v2346, %v2294
    %v2356 = vsel %vm2351, %v2347, %v2296
    %v2357 = vsel %vm2351, %v2348, %v2298
    %v2358 = vsel %vm2351, %v2349, %v2300
    %v2359 = vsel %vm2351, %v2350, %v2302
    %vm2360 = vcmask 195584
    %v2361 = vsel %vm2360, %v2352, %v2320
    %v2362 = vsel %vm2360, %v2353, %v2322
    %v2363 = vsel %vm2360, %v2354, %v2324
    %v2364 = vsel %vm2360, %v2355, %v2326
    %v2365 = vsel %vm2360, %v2356, %v2328
    %v2366 = vsel %vm2360, %v2357, %v2330
    %v2367 = vsel %vm2360, %v2358, %v2332
    %v2368 = vsel %vm2360, %v2359, %v2334
    %v2369 = vld [vmem:[%s5] sm:$0x1]
    %v2370 = vld [vmem:[%s6] sm:$0x1]
    %v2371 = vsel %vm116, %v2361, 0.0
    %2372 = vadd.xlane.f32.xlu0 %v2371
    %v2373 = vpop.xlane.xlu0 %2372
    %v2374 = vsel %vm116, %v2362, 0.0
    %2375 = vadd.xlane.f32.xlu0 %v2374
    %v2376 = vpop.xlane.xlu0 %2375
    %v2377 = vsel %vm116, %v2363, 0.0
    %2378 = vadd.xlane.f32.xlu0 %v2377
    %v2379 = vpop.xlane.xlu0 %2378
    %v2380 = vsel %vm116, %v2364, 0.0
    %2381 = vadd.xlane.f32.xlu0 %v2380
    %v2382 = vpop.xlane.xlu0 %2381
    %v2383 = vsel %vm116, %v2365, 0.0
    %2384 = vadd.xlane.f32.xlu0 %v2383
    %v2385 = vpop.xlane.xlu0 %2384
    %v2386 = vsel %vm116, %v2366, 0.0
    %2387 = vadd.xlane.f32.xlu0 %v2386
    %v2388 = vpop.xlane.xlu0 %2387
    %v2389 = vsel %vm116, %v2367, 0.0
    %2390 = vadd.xlane.f32.xlu0 %v2389
    %v2391 = vpop.xlane.xlu0 %2390
    %v2392 = vsel %vm116, %v2368, 0.0
    %2393 = vadd.xlane.f32.xlu0 %v2392
    %v2394 = vpop.xlane.xlu0 %2393
    %v2395 = vrcp.pop 32.0
    %v2396 = vmul.f32 32.0, %v2395
    %v2397 = vsub.f32 1.0, %v2396
    %v2398 = vmul.f32 %v2395, %v2397
    %v2399 = vadd.f32 %v2395, %v2398
    %vm2400 = vweird.f32 %v2395
    %v2401 = vsel %vm2400, %v2395, %v2399
    %v2402 = vmul.f32 %v2373, %v2401
    %v2403 = vmul.f32 %v2376, %v2401
    %v2404 = vmul.f32 %v2379, %v2401
    %v2405 = vmul.f32 %v2382, %v2401
    %v2406 = vmul.f32 %v2385, %v2401
    %v2407 = vmul.f32 %v2388, %v2401
    %v2408 = vmul.f32 %v2391, %v2401
    %v2409 = vmul.f32 %v2394, %v2401
    %v2410 = vsub.f32 %v2361, %v2402
    %v2411 = vsub.f32 %v2362, %v2403
    %v2412 = vsub.f32 %v2363, %v2404
    %v2413 = vsub.f32 %v2364, %v2405
    %v2414 = vsub.f32 %v2365, %v2406
    %v2415 = vsub.f32 %v2366, %v2407
    %v2416 = vsub.f32 %v2367, %v2408
    %v2417 = vsub.f32 %v2368, %v2409
    %v2418 = vmul.f32 %v2410, %v2410
    %v2419 = vmul.f32 %v2411, %v2411
    %v2420 = vmul.f32 %v2412, %v2412
    %v2421 = vmul.f32 %v2413, %v2413
    %v2422 = vmul.f32 %v2414, %v2414
    %v2423 = vmul.f32 %v2415, %v2415
    %v2424 = vmul.f32 %v2416, %v2416
    %v2425 = vmul.f32 %v2417, %v2417
    %v2426 = vsel %vm116, %v2418, 0.0
    %2427 = vadd.xlane.f32.xlu0 %v2426
    %v2428 = vpop.xlane.xlu0 %2427
    %v2429 = vsel %vm116, %v2419, 0.0
    %2430 = vadd.xlane.f32.xlu0 %v2429
    %v2431 = vpop.xlane.xlu0 %2430
    %v2432 = vsel %vm116, %v2420, 0.0
    %2433 = vadd.xlane.f32.xlu0 %v2432
    %v2434 = vpop.xlane.xlu0 %2433
    %v2435 = vsel %vm116, %v2421, 0.0
    %2436 = vadd.xlane.f32.xlu0 %v2435
    %v2437 = vpop.xlane.xlu0 %2436
    %v2438 = vsel %vm116, %v2422, 0.0
    %2439 = vadd.xlane.f32.xlu0 %v2438
    %v2440 = vpop.xlane.xlu0 %2439
    %v2441 = vsel %vm116, %v2423, 0.0
    %2442 = vadd.xlane.f32.xlu0 %v2441
    %v2443 = vpop.xlane.xlu0 %2442
    %v2444 = vsel %vm116, %v2424, 0.0
    %2445 = vadd.xlane.f32.xlu0 %v2444
    %v2446 = vpop.xlane.xlu0 %2445
    %v2447 = vsel %vm116, %v2425, 0.0
    %2448 = vadd.xlane.f32.xlu0 %v2447
    %v2449 = vpop.xlane.xlu0 %2448
    %v2450 = vmul.f32 %v2428, %v2401
    %v2451 = vmul.f32 %v2431, %v2401
    %v2452 = vmul.f32 %v2434, %v2401
    %v2453 = vmul.f32 %v2437, %v2401
    %v2454 = vmul.f32 %v2440, %v2401
    %v2455 = vmul.f32 %v2443, %v2401
    %v2456 = vmul.f32 %v2446, %v2401
    %v2457 = vmul.f32 %v2449, %v2401
    %v2458 = vadd.f32 %v2450, 1e-05
    %v2459 = vadd.f32 %v2451, 1e-05
    %v2460 = vadd.f32 %v2452, 1e-05
    %v2461 = vadd.f32 %v2453, 1e-05
    %v2462 = vadd.f32 %v2454, 1e-05
    %v2463 = vadd.f32 %v2455, 1e-05
    %v2464 = vadd.f32 %v2456, 1e-05
    %v2465 = vadd.f32 %v2457, 1e-05
    %v2466 = vrsqrt.pop %v2458
    %v2467 = vmul.f32 %v2466, %v2458
    %v2468 = vmul.f32 %v2467, %v2466
    %v2469 = vmul.f32 0.5, %v2468
    %v2470 = vsub.f32 1.5, %v2469
    %v2471 = vmul.f32 %v2466, %v2470
    %vm2472 = vweird.f32 %v2458
    %vm2473 = vweird.f32 %v2466
    %vm2474 = vmor %vm2472, %vm2473
    %v2475 = vsel %vm2474, %v2466, %v2471
    %v2476 = vrsqrt.pop %v2459
    %v2477 = vmul.f32 %v2476, %v2459
    %v2478 = vmul.f32 %v2477, %v2476
    %v2479 = vmul.f32 0.5, %v2478
    %v2480 = vsub.f32 1.5, %v2479
    %v2481 = vmul.f32 %v2476, %v2480
    %vm2482 = vweird.f32 %v2459
    %vm2483 = vweird.f32 %v2476
    %vm2484 = vmor %vm2482, %vm2483
    %v2485 = vsel %vm2484, %v2476, %v2481
    %v2486 = vrsqrt.pop %v2460
    %v2487 = vmul.f32 %v2486, %v2460
    %v2488 = vmul.f32 %v2487, %v2486
    %v2489 = vmul.f32 0.5, %v2488
    %v2490 = vsub.f32 1.5, %v2489
    %v2491 = vmul.f32 %v2486, %v2490
    %vm2492 = vweird.f32 %v2460
    %vm2493 = vweird.f32 %v2486
    %vm2494 = vmor %vm2492, %vm2493
    %v2495 = vsel %vm2494, %v2486, %v2491
    %v2496 = vrsqrt.pop %v2461
    %v2497 = vmul.f32 %v2496, %v2461
    %v2498 = vmul.f32 %v2497, %v2496
    %v2499 = vmul.f32 0.5, %v2498
    %v2500 = vsub.f32 1.5, %v2499
    %v2501 = vmul.f32 %v2496, %v2500
    %vm2502 = vweird.f32 %v2461
    %vm2503 = vweird.f32 %v2496
    %vm2504 = vmor %vm2502, %vm2503
    %v2505 = vsel %vm2504, %v2496, %v2501
    %v2506 = vrsqrt.pop %v2462
    %v2507 = vmul.f32 %v2506, %v2462
    %v2508 = vmul.f32 %v2507, %v2506
    %v2509 = vmul.f32 0.5, %v2508
    %v2510 = vsub.f32 1.5, %v2509
    %v2511 = vmul.f32 %v2506, %v2510
    %vm2512 = vweird.f32 %v2462
    %vm2513 = vweird.f32 %v2506
    %vm2514 = vmor %vm2512, %vm2513
    %v2515 = vsel %vm2514, %v2506, %v2511
    %v2516 = vrsqrt.pop %v2463
    %v2517 = vmul.f32 %v2516, %v2463
    %v2518 = vmul.f32 %v2517, %v2516
    %v2519 = vmul.f32 0.5, %v2518
    %v2520 = vsub.f32 1.5, %v2519
    %v2521 = vmul.f32 %v2516, %v2520
    %vm2522 = vweird.f32 %v2463
    %vm2523 = vweird.f32 %v2516
    %vm2524 = vmor %vm2522, %vm2523
    %v2525 = vsel %vm2524, %v2516, %v2521
    %v2526 = vrsqrt.pop %v2464
    %v2527 = vmul.f32 %v2526, %v2464
    %v2528 = vmul.f32 %v2527, %v2526
    %v2529 = vmul.f32 0.5, %v2528
    %v2530 = vsub.f32 1.5, %v2529
    %v2531 = vmul.f32 %v2526, %v2530
    %vm2532 = vweird.f32 %v2464
    %vm2533 = vweird.f32 %v2526
    %vm2534 = vmor %vm2532, %vm2533
    %v2535 = vsel %vm2534, %v2526, %v2531
    %v2536 = vrsqrt.pop %v2465
    %v2537 = vmul.f32 %v2536, %v2465
    %v2538 = vmul.f32 %v2537, %v2536
    %v2539 = vmul.f32 0.5, %v2538
    %v2540 = vsub.f32 1.5, %v2539
    %v2541 = vmul.f32 %v2536, %v2540
    %vm2542 = vweird.f32 %v2465
    %vm2543 = vweird.f32 %v2536
    %vm2544 = vmor %vm2542, %vm2543
    %v2545 = vsel %vm2544, %v2536, %v2541
    %v2546 = vmul.f32 %v2410, %v2475
    %v2547 = vmul.f32 %v2411, %v2485
    %v2548 = vmul.f32 %v2412, %v2495
    %v2549 = vmul.f32 %v2413, %v2505
    %v2550 = vmul.f32 %v2414, %v2515
    %v2551 = vmul.f32 %v2415, %v2525
    %v2552 = vmul.f32 %v2416, %v2535
    %v2553 = vmul.f32 %v2417, %v2545
    %v2555 = vperm.slane %v2369, 0
    %v2557 = vmul.f32 %v2546, %v2555
    %v2558 = vmul.f32 %v2547, %v2555
    %v2559 = vmul.f32 %v2548, %v2555
    %v2560 = vmul.f32 %v2549, %v2555
    %v2561 = vmul.f32 %v2550, %v2555
    %v2562 = vmul.f32 %v2551, %v2555
    %v2563 = vmul.f32 %v2552, %v2555
    %v2564 = vmul.f32 %v2553, %v2555
    %v2566 = vperm.slane %v2370, 0
    %v2568 = vadd.f32 %v2557, %v2566
    %v2569 = vadd.f32 %v2558, %v2566
    %v2570 = vadd.f32 %v2559, %v2566
    %v2571 = vadd.f32 %v2560, %v2566
    %v2572 = vadd.f32 %v2561, %v2566
    %v2573 = vadd.f32 %v2562, %v2566
    %v2574 = vadd.f32 %v2563, %v2566
    %v2575 = vadd.f32 %v2564, %v2566
    %v2576 = vld [vmem:[#allocation8] sm:$0xff]
    %v2577 = vld [vmem:[#allocation8 + $0x8] sm:$0xff]
    %v2578 = vld [vmem:[#allocation8 + $0x10] sm:$0xff]
    %v2579 = vld [vmem:[#allocation8 + $0x18] sm:$0xff]
    %v2580 = vld [vmem:[%s8] sm:$0x1]
    %v2582 = vperm.slane %v2580, 0
    %v2585 = vsel %vm116, %v2568, 0
    %v2588 = vsel %vm116, %v2569, 0
    %v2591 = vsel %vm116, %v2570, 0
    %v2594 = vsel %vm116, %v2571, 0
    %v2597 = vsel %vm116, %v2572, 0
    %v2600 = vsel %vm116, %v2573, 0
    %v2603 = vsel %vm116, %v2574, 0
    %v2606 = vsel %vm116, %v2575, 0
    %2608 = vmatpush.msra.mxu0 0.0
    %2609 = vmatpush.msra.mxu0 0.0
    %2610 = vmatpush.msra.mxu0 0.0
    %2611 = vmatpush.msra.mxu0 0.0
    %2612 = vmatpush.msra.mxu0 0.0
    %2613 = vmatpush.msra.mxu0 0.0
    %2614 = vmatpush.msra.mxu0 0.0
    %2615 = vmatpush.msra.mxu0 0.0
    %2616 = vmatpush.msra.mxu0 0.0
    %2617 = vmatpush.msra.mxu0 0.0
    %2618 = vmatpush.msra.mxu0 0.0
    %2619 = vmatpush.msra.mxu0 0.0
    %2620 = vmatpush.msra.mxu0 %v2579
    %2621 = vmatpush.msra.mxu0 %v2578
    %2622 = vmatpush.msra.mxu0 %v2577
    %2623 = vmatpush.msra.mxu0 %v2576
    %2624 = vmatmul.f32.gmra.mxu0 %v2585
    %v2625 = vpop.f32.mrf.mxu0
    %v2626 = vadd.f32 %v2582, %v2625
    %2627 = vmatmul.f32.gmra.mxu0 %v2588
    %v2628 = vpop.f32.mrf.mxu0
    %v2629 = vadd.f32 %v2582, %v2628
    %2630 = vmatmul.f32.gmra.mxu0 %v2591
    %v2631 = vpop.f32.mrf.mxu0
    %v2632 = vadd.f32 %v2582, %v2631
    %2633 = vmatmul.f32.gmra.mxu0 %v2594
    %v2634 = vpop.f32.mrf.mxu0
    %v2635 = vadd.f32 %v2582, %v2634
    %2636 = vmatmul.f32.gmra.mxu0 %v2597
    %v2637 = vpop.f32.mrf.mxu0
    %v2638 = vadd.f32 %v2582, %v2637
    %2639 = vmatmul.f32.gmra.mxu0 %v2600
    %v2640 = vpop.f32.mrf.mxu0
    %v2641 = vadd.f32 %v2582, %v2640
    %2642 = vmatmul.f32.gmra.mxu0 %v2603
    %v2643 = vpop.f32.mrf.mxu0
    %v2644 = vadd.f32 %v2582, %v2643
    %2645 = vmatmul.f32.gmra.mxu0 %v2606
    %v2646 = vpop.f32.mrf.mxu0
    %v2647 = vadd.f32 %v2582, %v2646
    %2648 = vdwg.mxu0
    %v2649 = vtanh.pop %v2626
    %v2650 = vtanh.pop %v2629
    %v2651 = vtanh.pop %v2632
    %v2652 = vtanh.pop %v2635
    %v2653 = vtanh.pop %v2638
    %v2654 = vtanh.pop %v2641
    %v2655 = vtanh.pop %v2644
    %v2656 = vtanh.pop %v2647
    %v2657 = vld [vmem:[%s9] sm:$0x1]
    %v2659 = vperm.slane %v2657, 0
    %v2661 = vmul.f32 %v2649, %v2659
    %v2662 = vmul.f32 %v2650, %v2659
    %v2663 = vmul.f32 %v2651, %v2659
    %v2664 = vmul.f32 %v2652, %v2659
    %v2665 = vmul.f32 %v2653, %v2659
    %v2666 = vmul.f32 %v2654, %v2659
    %v2667 = vmul.f32 %v2655, %v2659
    %v2668 = vmul.f32 %v2656, %v2659
    %v2669 = vsel %vm116, %v2661, 0.0
    %2670 = vadd.xlane.f32.xlu0 %v2669
    %v2671 = vpop.xlane.xlu0 %2670
    %v2672 = vsel %vm116, %v2662, 0.0
    %2673 = vadd.xlane.f32.xlu0 %v2672
    %v2674 = vpop.xlane.xlu0 %2673
    %v2675 = vsel %vm116, %v2663, 0.0
    %2676 = vadd.xlane.f32.xlu0 %v2675
    %v2677 = vpop.xlane.xlu0 %2676
    %v2678 = vsel %vm116, %v2664, 0.0
    %2679 = vadd.xlane.f32.xlu0 %v2678
    %v2680 = vpop.xlane.xlu0 %2679
    %v2681 = vsel %vm116, %v2665, 0.0
    %2682 = vadd.xlane.f32.xlu0 %v2681
    %v2683 = vpop.xlane.xlu0 %2682
    %v2684 = vsel %vm116, %v2666, 0.0
    %2685 = vadd.xlane.f32.xlu0 %v2684
    %v2686 = vpop.xlane.xlu0 %2685
    %v2687 = vsel %vm116, %v2667, 0.0
    %2688 = vadd.xlane.f32.xlu0 %v2687
    %v2689 = vpop.xlane.xlu0 %2688
    %v2690 = vsel %vm116, %v2668, 0.0
    %2691 = vadd.xlane.f32.xlu0 %v2690
    %v2692 = vpop.xlane.xlu0 %2691
    %s2693 = sld [smem:[#allocation2]]
    %v2694 = vstv %s2693
    %v2695 = vadd.f32 %v2671, %v2694
    %v2696 = vadd.f32 %v2674, %v2694
    %v2697 = vadd.f32 %v2677, %v2694
    %v2698 = vadd.f32 %v2680, %v2694
    %v2699 = vadd.f32 %v2683, %v2694
    %v2700 = vadd.f32 %v2686, %v2694
    %v2701 = vadd.f32 %v2689, %v2694
    %v2702 = vadd.f32 %v2692, %v2694
    %v2703 = vmul.f32 %v2695, 1.442695
    %v2704 = vpow.pop %v2703
    %v2705 = vmul.f32 %v2696, 1.442695
    %v2706 = vpow.pop %v2705
    %v2707 = vmul.f32 %v2697, 1.442695
    %v2708 = vpow.pop %v2707
    %v2709 = vmul.f32 %v2698, 1.442695
    %v2710 = vpow.pop %v2709
    %v2711 = vmul.f32 %v2699, 1.442695
    %v2712 = vpow.pop %v2711
    %v2713 = vmul.f32 %v2700, 1.442695
    %v2714 = vpow.pop %v2713
    %v2715 = vmul.f32 %v2701, 1.442695
    %v2716 = vpow.pop %v2715
    %v2717 = vmul.f32 %v2702, 1.442695
    %v2718 = vpow.pop %v2717
    %v2719 = vmul.f32 %v2704, %v100
    %v2720 = vmul.f32 %v2706, %v101
    %v2721 = vmul.f32 %v2708, %v102
    %v2722 = vmul.f32 %v2710, %v103
    %v2723 = vmul.f32 %v2712, %v104
    %v2724 = vmul.f32 %v2714, %v105
    %v2725 = vmul.f32 %v2716, %v106
    %v2726 = vmul.f32 %v2718, %v107
    %2728 = vset.pattern.permute.xlu0 0
    %2729 = vperm.xlu0 %2728, %v2719
    %v2730 = vpop.permute.xlu0 %2729
    %2733 = vset.pattern.permute.xlu0 0
    %2734 = vperm.xlu0 %2733, %v2720
    %v2735 = vpop.permute.xlu0 %2734
    %2738 = vset.pattern.permute.xlu0 0
    %2739 = vperm.xlu0 %2738, %v2721
    %v2740 = vpop.permute.xlu0 %2739
    %2743 = vset.pattern.permute.xlu0 0
    %2744 = vperm.xlu0 %2743, %v2722
    %v2745 = vpop.permute.xlu0 %2744
    %2748 = vset.pattern.permute.xlu0 0
    %2749 = vperm.xlu0 %2748, %v2723
    %v2750 = vpop.permute.xlu0 %2749
    %2753 = vset.pattern.permute.xlu0 0
    %2754 = vperm.xlu0 %2753, %v2724
    %v2755 = vpop.permute.xlu0 %2754
    %2758 = vset.pattern.permute.xlu0 0
    %2759 = vperm.xlu0 %2758, %v2725
    %v2760 = vpop.permute.xlu0 %2759
    %2763 = vset.pattern.permute.xlu0 0
    %2764 = vperm.xlu0 %2763, %v2726
    %v2765 = vpop.permute.xlu0 %2764
    %v2767 = vmul.f32 %v2730, %v2568
    %v2768 = vmul.f32 %v2735, %v2569
    %v2769 = vmul.f32 %v2740, %v2570
    %v2770 = vmul.f32 %v2745, %v2571
    %v2771 = vmul.f32 %v2750, %v2572
    %v2772 = vmul.f32 %v2755, %v2573
    %v2773 = vmul.f32 %v2760, %v2574
    %v2774 = vmul.f32 %v2765, %v2575
    %v2775 = vsel %vm116, %v2767, 0.0
    %v2776 = vrot.slane %v2775, 4
    %v2777 = vadd.f32 %v2775, %v2776
    %v2778 = vrot.slane %v2777, 2
    %v2779 = vadd.f32 %v2777, %v2778
    %v2780 = vrot.slane %v2779, 1
    %v2781 = vadd.f32 %v2779, %v2780
    %v2782 = vsel %vm116, %v2768, 0.0
    %v2783 = vrot.slane %v2782, 4
    %v2784 = vadd.f32 %v2782, %v2783
    %v2785 = vrot.slane %v2784, 2
    %v2786 = vadd.f32 %v2784, %v2785
    %v2787 = vrot.slane %v2786, 1
    %v2788 = vadd.f32 %v2786, %v2787
    %v2789 = vsel %vm116, %v2769, 0.0
    %v2790 = vrot.slane %v2789, 4
    %v2791 = vadd.f32 %v2789, %v2790
    %v2792 = vrot.slane %v2791, 2
    %v2793 = vadd.f32 %v2791, %v2792
    %v2794 = vrot.slane %v2793, 1
    %v2795 = vadd.f32 %v2793, %v2794
    %v2796 = vsel %vm116, %v2770, 0.0
    %v2797 = vrot.slane %v2796, 4
    %v2798 = vadd.f32 %v2796, %v2797
    %v2799 = vrot.slane %v2798, 2
    %v2800 = vadd.f32 %v2798, %v2799
    %v2801 = vrot.slane %v2800, 1
    %v2802 = vadd.f32 %v2800, %v2801
    %v2803 = vsel %vm116, %v2771, 0.0
    %v2804 = vrot.slane %v2803, 4
    %v2805 = vadd.f32 %v2803, %v2804
    %v2806 = vrot.slane %v2805, 2
    %v2807 = vadd.f32 %v2805, %v2806
    %v2808 = vrot.slane %v2807, 1
    %v2809 = vadd.f32 %v2807, %v2808
    %v2810 = vsel %vm116, %v2772, 0.0
    %v2811 = vrot.slane %v2810, 4
    %v2812 = vadd.f32 %v2810, %v2811
    %v2813 = vrot.slane %v2812, 2
    %v2814 = vadd.f32 %v2812, %v2813
    %v2815 = vrot.slane %v2814, 1
    %v2816 = vadd.f32 %v2814, %v2815
    %v2817 = vsel %vm116, %v2773, 0.0
    %v2818 = vrot.slane %v2817, 4
    %v2819 = vadd.f32 %v2817, %v2818
    %v2820 = vrot.slane %v2819, 2
    %v2821 = vadd.f32 %v2819, %v2820
    %v2822 = vrot.slane %v2821, 1
    %v2823 = vadd.f32 %v2821, %v2822
    %v2824 = vsel %vm116, %v2774, 0.0
    %v2825 = vrot.slane %v2824, 4
    %v2826 = vadd.f32 %v2824, %v2825
    %v2827 = vrot.slane %v2826, 2
    %v2828 = vadd.f32 %v2826, %v2827
    %v2829 = vrot.slane %v2828, 1
    %v2830 = vadd.f32 %v2828, %v2829
    %vm2831 = vcmask 7168
    %v2832 = vsel %vm2831, %v2719, 0.0
    %v2833 = vrot.slane %v2832, 4
    %v2834 = vadd.f32 %v2832, %v2833
    %v2835 = vrot.slane %v2834, 2
    %v2836 = vadd.f32 %v2834, %v2835
    %v2837 = vrot.slane %v2836, 1
    %v2838 = vadd.f32 %v2836, %v2837
    %v2839 = vsel %vm2831, %v2720, 0.0
    %v2840 = vrot.slane %v2839, 4
    %v2841 = vadd.f32 %v2839, %v2840
    %v2842 = vrot.slane %v2841, 2
    %v2843 = vadd.f32 %v2841, %v2842
    %v2844 = vrot.slane %v2843, 1
    %v2845 = vadd.f32 %v2843, %v2844
    %v2846 = vsel %vm2831, %v2721, 0.0
    %v2847 = vrot.slane %v2846, 4
    %v2848 = vadd.f32 %v2846, %v2847
    %v2849 = vrot.slane %v2848, 2
    %v2850 = vadd.f32 %v2848, %v2849
    %v2851 = vrot.slane %v2850, 1
    %v2852 = vadd.f32 %v2850, %v2851
    %v2853 = vsel %vm2831, %v2722, 0.0
    %v2854 = vrot.slane %v2853, 4
    %v2855 = vadd.f32 %v2853, %v2854
    %v2856 = vrot.slane %v2855, 2
    %v2857 = vadd.f32 %v2855, %v2856
    %v2858 = vrot.slane %v2857, 1
    %v2859 = vadd.f32 %v2857, %v2858
    %v2860 = vsel %vm2831, %v2723, 0.0
    %v2861 = vrot.slane %v2860, 4
    %v2862 = vadd.f32 %v2860, %v2861
    %v2863 = vrot.slane %v2862, 2
    %v2864 = vadd.f32 %v2862, %v2863
    %v2865 = vrot.slane %v2864, 1
    %v2866 = vadd.f32 %v2864, %v2865
    %v2867 = vsel %vm2831, %v2724, 0.0
    %v2868 = vrot.slane %v2867, 4
    %v2869 = vadd.f32 %v2867, %v2868
    %v2870 = vrot.slane %v2869, 2
    %v2871 = vadd.f32 %v2869, %v2870
    %v2872 = vrot.slane %v2871, 1
    %v2873 = vadd.f32 %v2871, %v2872
    %v2874 = vsel %vm2831, %v2725, 0.0
    %v2875 = vrot.slane %v2874, 4
    %v2876 = vadd.f32 %v2874, %v2875
    %v2877 = vrot.slane %v2876, 2
    %v2878 = vadd.f32 %v2876, %v2877
    %v2879 = vrot.slane %v2878, 1
    %v2880 = vadd.f32 %v2878, %v2879
    %v2881 = vsel %vm2831, %v2726, 0.0
    %v2882 = vrot.slane %v2881, 4
    %v2883 = vadd.f32 %v2881, %v2882
    %v2884 = vrot.slane %v2883, 2
    %v2885 = vadd.f32 %v2883, %v2884
    %v2886 = vrot.slane %v2885, 1
    %v2887 = vadd.f32 %v2885, %v2886
    %v2888 = vadd.f32 %v2838, 1e-08
    %v2889 = vadd.f32 %v2845, 1e-08
    %v2890 = vadd.f32 %v2852, 1e-08
    %v2891 = vadd.f32 %v2859, 1e-08
    %v2892 = vadd.f32 %v2866, 1e-08
    %v2893 = vadd.f32 %v2873, 1e-08
    %v2894 = vadd.f32 %v2880, 1e-08
    %v2895 = vadd.f32 %v2887, 1e-08
    %v2896 = vrcp.pop %v2888
    %v2897 = vrcp.pop %v2889
    %v2898 = vrcp.pop %v2890
    %v2899 = vrcp.pop %v2891
    %v2900 = vrcp.pop %v2892
    %v2901 = vrcp.pop %v2893
    %v2902 = vrcp.pop %v2894
    %v2903 = vrcp.pop %v2895
    %2905 = vset.pattern.permute.xlu0 0
    %2906 = vperm.xlu0 %2905, %v2896
    %v2907 = vpop.permute.xlu0 %2906
    %2910 = vset.pattern.permute.xlu0 0
    %2911 = vperm.xlu0 %2910, %v2897
    %v2912 = vpop.permute.xlu0 %2911
    %2915 = vset.pattern.permute.xlu0 0
    %2916 = vperm.xlu0 %2915, %v2898
    %v2917 = vpop.permute.xlu0 %2916
    %2920 = vset.pattern.permute.xlu0 0
    %2921 = vperm.xlu0 %2920, %v2899
    %v2922 = vpop.permute.xlu0 %2921
    %2925 = vset.pattern.permute.xlu0 0
    %2926 = vperm.xlu0 %2925, %v2900
    %v2927 = vpop.permute.xlu0 %2926
    %2930 = vset.pattern.permute.xlu0 0
    %2931 = vperm.xlu0 %2930, %v2901
    %v2932 = vpop.permute.xlu0 %2931
    %2935 = vset.pattern.permute.xlu0 0
    %2936 = vperm.xlu0 %2935, %v2902
    %v2937 = vpop.permute.xlu0 %2936
    %2940 = vset.pattern.permute.xlu0 0
    %2941 = vperm.xlu0 %2940, %v2903
    %v2942 = vpop.permute.xlu0 %2941
    %v2944 = vmul.f32 %v2781, %v2907
    %v2945 = vmul.f32 %v2788, %v2912
    %v2946 = vmul.f32 %v2795, %v2917
    %v2947 = vmul.f32 %v2802, %v2922
    %v2948 = vmul.f32 %v2809, %v2927
    %v2949 = vmul.f32 %v2816, %v2932
    %v2950 = vmul.f32 %v2823, %v2937
    %v2951 = vmul.f32 %v2830, %v2942
    %v2952 = vld [vmem:[%s11] sm:$0x1]
    %v2953 = vld [vmem:[%s12] sm:$0x1]
    %vm2962 = vcmask 1041409
    %v2963 = vsel %vm2962, %v2945, %v2944
    %vm2964 = vcmask 1042434
    %v2965 = vsel %vm2964, %v2946, %v2963
    %vm2966 = vcmask 1043459
    %v2967 = vsel %vm2966, %v2947, %v2965
    %vm2968 = vcmask 1044484
    %v2969 = vsel %vm2968, %v2948, %v2967
    %vm2970 = vcmask 1045509
    %v2971 = vsel %vm2970, %v2949, %v2969
    %vm2972 = vcmask 1046534
    %v2973 = vsel %vm2972, %v2950, %v2971
    %vm2974 = vcmask 1047559
    %v2975 = vsel %vm2974, %v2951, %v2973
    %v2977 = vsel %vm116, %v2975, 0.0
    %2978 = vadd.xlane.f32.xlu0 %v2977
    %v2979 = vpop.xlane.xlu0 %2978
    %v2980 = vmul.f32 %v2979, %v2401
    %v2982 = vrot.slane %v2980, 1
    %v2983 = vrot.slane %v2980, 2
    %v2984 = vrot.slane %v2980, 3
    %v2985 = vrot.slane %v2980, 4
    %v2986 = vrot.slane %v2980, 5
    %v2987 = vrot.slane %v2980, 6
    %v2988 = vrot.slane %v2980, 7
    %v2997 = vsub.f32 %v2944, %v2980
    %v2998 = vsub.f32 %v2945, %v2982
    %v2999 = vsub.f32 %v2946, %v2983
    %v3000 = vsub.f32 %v2947, %v2984
    %v3001 = vsub.f32 %v2948, %v2985
    %v3002 = vsub.f32 %v2949, %v2986
    %v3003 = vsub.f32 %v2950, %v2987
    %v3004 = vsub.f32 %v2951, %v2988
    %v3005 = vmul.f32 %v2997, %v2997
    %v3006 = vmul.f32 %v2998, %v2998
    %v3007 = vmul.f32 %v2999, %v2999
    %v3008 = vmul.f32 %v3000, %v3000
    %v3009 = vmul.f32 %v3001, %v3001
    %v3010 = vmul.f32 %v3002, %v3002
    %v3011 = vmul.f32 %v3003, %v3003
    %v3012 = vmul.f32 %v3004, %v3004
    %v3021 = vrot.slane %v3006, 7
    %v3022 = vsel %vm2962, %v3021, %v3005
    %v3023 = vrot.slane %v3007, 6
    %v3024 = vsel %vm2964, %v3023, %v3022
    %v3025 = vrot.slane %v3008, 5
    %v3026 = vsel %vm2966, %v3025, %v3024
    %v3027 = vrot.slane %v3009, 4
    %v3028 = vsel %vm2968, %v3027, %v3026
    %v3029 = vrot.slane %v3010, 3
    %v3030 = vsel %vm2970, %v3029, %v3028
    %v3031 = vrot.slane %v3011, 2
    %v3032 = vsel %vm2972, %v3031, %v3030
    %v3033 = vrot.slane %v3012, 1
    %v3034 = vsel %vm2974, %v3033, %v3032
    %v3036 = vsel %vm116, %v3034, 0.0
    %3037 = vadd.xlane.f32.xlu0 %v3036
    %v3038 = vpop.xlane.xlu0 %3037
    %v3039 = vmul.f32 %v3038, %v2401
    %v3040 = vadd.f32 %v3039, 1e-05
    %v3041 = vrsqrt.pop %v3040
    %v3042 = vmul.f32 %v3041, %v3040
    %v3043 = vmul.f32 %v3042, %v3041
    %v3044 = vmul.f32 0.5, %v3043
    %v3045 = vsub.f32 1.5, %v3044
    %v3046 = vmul.f32 %v3041, %v3045
    %vm3047 = vweird.f32 %v3040
    %vm3048 = vweird.f32 %v3041
    %vm3049 = vmor %vm3047, %vm3048
    %v3050 = vsel %vm3049, %v3041, %v3046
    %v3052 = vrot.slane %v3050, 1
    %v3053 = vrot.slane %v3050, 2
    %v3054 = vrot.slane %v3050, 3
    %v3055 = vrot.slane %v3050, 4
    %v3056 = vrot.slane %v3050, 5
    %v3057 = vrot.slane %v3050, 6
    %v3058 = vrot.slane %v3050, 7
    %v3067 = vmul.f32 %v2997, %v3050
    %v3068 = vmul.f32 %v2998, %v3052
    %v3069 = vmul.f32 %v2999, %v3053
    %v3070 = vmul.f32 %v3000, %v3054
    %v3071 = vmul.f32 %v3001, %v3055
    %v3072 = vmul.f32 %v3002, %v3056
    %v3073 = vmul.f32 %v3003, %v3057
    %v3074 = vmul.f32 %v3004, %v3058
    %v3076 = vperm.slane %v2952, 0
    %v3078 = vmul.f32 %v3067, %v3076
    %v3079 = vmul.f32 %v3068, %v3076
    %v3080 = vmul.f32 %v3069, %v3076
    %v3081 = vmul.f32 %v3070, %v3076
    %v3082 = vmul.f32 %v3071, %v3076
    %v3083 = vmul.f32 %v3072, %v3076
    %v3084 = vmul.f32 %v3073, %v3076
    %v3085 = vmul.f32 %v3074, %v3076
    %v3087 = vperm.slane %v2953, 0
    %v3089 = vadd.f32 %v3078, %v3087
    %v3090 = vadd.f32 %v3079, %v3087
    %v3091 = vadd.f32 %v3080, %v3087
    %v3092 = vadd.f32 %v3081, %v3087
    %v3093 = vadd.f32 %v3082, %v3087
    %v3094 = vadd.f32 %v3083, %v3087
    %v3095 = vadd.f32 %v3084, %v3087
    %v3096 = vadd.f32 %v3085, %v3087
    %v3105 = vrot.slane %v3090, 7
    %v3106 = vsel %vm2962, %v3105, %v3089
    %v3107 = vrot.slane %v3091, 6
    %v3108 = vsel %vm2964, %v3107, %v3106
    %v3109 = vrot.slane %v3092, 5
    %v3110 = vsel %vm2966, %v3109, %v3108
    %v3111 = vrot.slane %v3093, 4
    %v3112 = vsel %vm2968, %v3111, %v3110
    %v3113 = vrot.slane %v3094, 3
    %v3114 = vsel %vm2970, %v3113, %v3112
    %v3115 = vrot.slane %v3095, 2
    %v3116 = vsel %vm2972, %v3115, %v3114
    %v3117 = vrot.slane %v3096, 1
    %v3118 = vsel %vm2974, %v3117, %v3116
    %3120 = vst.msk [vmem:[#allocation9] sm:$0xff] %vm116, %v3118
    // Predicated region
    $region66: #{tpu_custom_call.1} parent=1 // pred_check
      _
    $region67: #{tpu_custom_call.1} parent=1 // pred_check_branch
      %3122 = sbr.rel (0) target = $region69
    $region68: #{tpu_custom_call.1} parent=1 // pred_region
      %3124 = vsyncadd [#allocation5], 0
      %s3126 = sshll.u32 [#allocation9], 4
      %s3127 = int_to_ptr.vmem [resolvable:$true] %s3126
      %s3128 = sshll.u32 %s13, 4
      %s3129 = int_to_ptr.hbm [resolvable:$true] %s3128
      %3131 = dma.vmem_to_hbm [thread:$0]  %s3127, 128, %s3129, [#allocation5]
    $region69: #{tpu_custom_call.1} parent=1 // pred_fallthru
      _
    // Predicated region
    $region70: #{tpu_custom_call.1} parent=1 // pred_check
      _
    $region71: #{tpu_custom_call.1} parent=1 // pred_check_branch
      %3133 = sbr.rel (0) target = $region73
    $region72: #{tpu_custom_call.1} parent=1 // pred_region
      %3135 = dma.done [#allocation5], 128
    $region73: #{tpu_custom_call.1} parent=1 // pred_fallthru
      _
    %3136 = vsyncpa [#allocation4], 1
    %3137 = vsyncpa [#allocation7], 1
    %3138 = vsyncpa [#allocation5], 1

</llo_original>
